<compile_context>
chip_gen: v7x
topology: tpu7x:2x2x1
jax: 0.10.0
libtpu: 0.0.40
codegen_flags: <defaults>
</compile_context>

<pallas_src>
import functools

import jax
import jax.numpy as jnp
from jax.experimental import pallas as pl
from jax.experimental.pallas import tpu as pltpu

EPS_LN = 1e-5          # nn.LayerNorm default eps
EPS_EA = 1e-9          # external-attention double-normalization eps
_APPROX_RECIP = True   # EUP reciprocal estimate (essentially free); ~1e-3 rel err, feeds a LayerNorm


def _layer_norm(v, g, b):
    mu = jnp.mean(v, axis=-1, keepdims=True)
    var = jnp.mean((v - mu) ** 2, axis=-1, keepdims=True)
    return (v - mu) * jax.lax.rsqrt(var + EPS_LN) * g + b


def _unpack_params(packc_ref):
    p = packc_ref[...].astype(jnp.float32)      # [5, C]: b2_ff, ln1_g, ln1_b, ln2_g, ln2_b
    return p[0:1], p[1:2], p[2:3], p[3:4], p[4:5]


def _ffn_ln2(h2, w1_ref, b1_ref, w2_ref, b2, g2, be2):
    """One big [rows, C] @ [C, F] / [rows, F] @ [F, C] per grid step, then LayerNorm."""
    ff = jnp.dot(h2, w1_ref[...].astype(jnp.float32), preferred_element_type=jnp.float32)
    ff = jnp.maximum(ff + b1_ref[...].astype(jnp.float32), 0.0)
    ff = jnp.dot(ff, w2_ref[...].astype(jnp.float32), preferred_element_type=jnp.float32) + b2
    return _layer_norm(h2 + ff, g2, be2)


# --------------------------------------------------------------------------------------------
# spatial path: block = G spatial slices (each = N node rows) of the [B*L*N, C] view
# --------------------------------------------------------------------------------------------
def _spatial_kernel(x_ref, mk_ref, mv_ref, w1_ref, b1_ref, w2_ref, packc_ref, o_ref,
                    *, nslices, nnodes):
    x = x_ref[...].astype(jnp.float32)                                        # [R, C], R = G*N
    b2, g1, be1, g2, be2 = _unpack_params(packc_ref)

    a = jnp.dot(x, mk_ref[...].astype(jnp.float32),
                preferred_element_type=jnp.float32)                           # [R, S]
    s_dim = a.shape[1]
    a3 = a.reshape(nslices, nnodes, s_dim)                                    # [G, N, S]
    a3 = a3 - jnp.max(a3, axis=1, keepdims=True)                              # per-slice max shift
    e = jnp.exp(a3)
    denom = jnp.sum(e, axis=1, keepdims=True)                                 # >= 1 after the shift
    p = e * pl.reciprocal(denom, approx=_APPROX_RECIP)                        # softmax over N tokens
    p = p.reshape(nslices * nnodes, s_dim)                                    # [R, S]
    p = p * pl.reciprocal(jnp.sum(p, axis=1, keepdims=True) + EPS_EA,
                          approx=_APPROX_RECIP)                               # double normalization
    out = jnp.dot(p, mv_ref[...].astype(jnp.float32),
                  preferred_element_type=jnp.float32)                         # [R, C]

    h = _layer_norm(x + out, g1, be1)                                         # ln1_s(residual + out)
    o_ref[...] = _ffn_ln2(h, w1_ref, b1_ref, w2_ref, b2, g2, be2).astype(o_ref.dtype)


# --------------------------------------------------------------------------------------------
# temporal path: block = Bg full batches in the ORIGINAL [B, L, N, C] layout (no transposes)
# --------------------------------------------------------------------------------------------
def _temporal_kernel(x_ref, mkT_ref, mvT_ref, w1_ref, b1_ref, w2_ref, packc_ref, o_ref, h_scr,
                     *, nbatch, seq_len, nnodes):
    C = x_ref.shape[-1]
    b2, g1, be1, g2, be2 = _unpack_params(packc_ref)

    # hoisted loop-invariants (JAX does not CSE broadcasts)
    mkT = mkT_ref[...].astype(jnp.float32)                                    # [S, L]
    mvT = mvT_ref[...].astype(jnp.float32)                                    # [L, S]
    mkT_b = jnp.broadcast_to(mkT, (nbatch,) + mkT.shape)                      # [Bg, S, L]
    mvT_b = jnp.broadcast_to(mvT, (nbatch,) + mvT.shape)                      # [Bg, L, S]
    g1b = jnp.broadcast_to(g1, (nbatch, seq_len, C))
    be1b = jnp.broadcast_to(be1, (nbatch, seq_len, C))

    # TODO(synk): replace the static node loop by lax.fori_loop for very large num_nodes.
    for n in range(nnodes):
        xn = x_ref[:, :, n, :].astype(jnp.float32)                            # [Bg, L, C]
        # attn^T[b, s, c] = sum_l mk[l, s] * x[b, l, c]   (tokens = model_dim C)
        aT = jnp.einsum('bsl,blc->bsc', mkT_b, xn,
                        preferred_element_type=jnp.float32)                   # [Bg, S, C]
        aT = aT - jnp.max(aT, axis=-1, keepdims=True)
        e = jnp.exp(aT)
        p = e * pl.reciprocal(jnp.sum(e, axis=-1, keepdims=True),
                              approx=_APPROX_RECIP)                           # softmax over C
        p = p * pl.reciprocal(jnp.sum(p, axis=1, keepdims=True) + EPS_EA,
                              approx=_APPROX_RECIP)                           # double normalization (S)
        # out[b, l, c] = sum_s mv[s, l] * p[b, s, c]  -> lands directly in [Bg, L, C]
        outn = jnp.einsum('bls,bsc->blc', mvT_b, p,
                          preferred_element_type=jnp.float32)                 # [Bg, L, C]
        h_scr[:, :, n, :] = _layer_norm(xn + outn, g1b, be1b)                 # ln1_t(residual + out)

    # fused FFN + ln2 over all rows of the block at once
    h2 = h_scr[...].reshape(nbatch * seq_len * nnodes, C)
    o2 = _ffn_ln2(h2, w1_ref, b1_ref, w2_ref, b2, g2, be2)
    o_ref[...] = o2.reshape(nbatch, seq_len, nnodes, C).astype(o_ref.dtype)


# --------------------------------------------------------------------------------------------
# block-size / grid selection (generation-aware)
# --------------------------------------------------------------------------------------------
def _hw_params():
    """Returns (min_steps, vmem_limit_bytes, max_block_bytes)."""
    vmem_phys = 64 << 20                        # conservative default (v7x per-TC VMEM)
    try:
        info = pltpu.get_tpu_info()
        vmem_phys = int(getattr(info, "vmem_capacity_bytes", vmem_phys))
    except Exception:
        pass
    try:
        kind = jax.devices()[0].device_kind.lower()
    except Exception:
        kind = ""
    dual_tc = "v7" in kind                      # v7x: 2 TensorCores/chip -> keep >=2 grid steps
    min_steps = 2 if dual_tc else 1
    vmem_limit = max(32 << 20, min(vmem_phys // 2, 96 << 20))
    # in+out double-buffered blocks + f32 working set + scratch must fit comfortably
    max_block_bytes = max(1 << 20, vmem_limit // 6)
    return min_steps, vmem_limit, max_block_bytes


def _choose_group(total_slices, bytes_per_slice, *, min_steps, max_block_bytes,
                  rows_per_slice=1, rows_must_align=False):
    """Largest #slices per block s.t. the grid keeps >= min_steps steps, layout stays legal,
    and the (rough) per-block VMEM footprint stays under max_block_bytes."""
    legal = []
    for g in range(1, total_slices + 1):
        if total_slices % g:
            continue
        if rows_must_align and g != total_slices and (g * rows_per_slice) % 8:
            continue
        if total_slices >= min_steps and (total_slices // g) < min_steps:
            continue
        legal.append(g)
    if not legal:
        return total_slices
    fitting = [g for g in legal if g * bytes_per_slice <= max_block_bytes]
    return max(fitting) if fitting else min(legal)


# --------------------------------------------------------------------------------------------
# wrapper
# --------------------------------------------------------------------------------------------
def staebkp_encoder_layer(x, params, attn_type):
    """x: [B, L, N, C] float32.  Returns same shape."""
    B, L, N, C = x.shape
    min_steps, vmem_limit, max_block_bytes = _hw_params()
    nrows = B * L * N

    if attn_type == "temporal":
        mkT = params["mk_t"].T                                    # [S, L]
        mvT = params["mv_t"].T                                    # [L, S]
        w1, b1, w2 = params["w1_t"], params["b1_t"], params["w2_t"]
        packc = jnp.concatenate([params["b2_t"], params["ln1_t_g"], params["ln1_t_b"],
                                 params["ln2_t_g"], params["ln2_t_b"]], axis=0)   # [5, C]
        S, F = mkT.shape[0], w1.shape[1]

        bytes_per_batch = 4 * L * N * (8 * C + F)                 # rough per-block VMEM per batch
        Bg = _choose_group(B, bytes_per_batch, min_steps=min_steps,
                           max_block_bytes=max_block_bytes)
        grid = (B // Bg,)
        data_spec = pl.BlockSpec((Bg, L, N, C), lambda i: (i, 0, 0, 0))
        kernel = functools.partial(_temporal_kernel, nbatch=Bg, seq_len=L, nnodes=N)
        weights = (mkT, mvT, w1, b1, w2, packc)
        scratch = [pltpu.VMEM((Bg, L, N, C), jnp.float32)]
        xin, out_shape = x, jax.ShapeDtypeStruct(x.shape, x.dtype)
        attn_flops, trans = 4 * B * N * L * S * C, B * N * S * C
    elif attn_type == "spatial":
        mk, mv = params["mk_s"], params["mv_s"]
        w1, b1, w2 = params["w1_s"], params["b1_s"], params["w2_s"]
        packc = jnp.concatenate([params["b2_s"], params["ln1_s_g"], params["ln1_s_b"],
                                 params["ln2_s_g"], params["ln2_s_b"]], axis=0)   # [5, C]
        S, F = mk.shape[1], w1.shape[1]

        total = B * L
        bytes_per_slice = 4 * N * (8 * C + 3 * S + F)
        G = _choose_group(total, bytes_per_slice, min_steps=min_steps,
                          max_block_bytes=max_block_bytes,
                          rows_per_slice=N, rows_must_align=True)
        grid = (total // G,)
        data_spec = pl.BlockSpec((G * N, C), lambda i: (i, 0))
        kernel = functools.partial(_spatial_kernel, nslices=G, nnodes=N)
        weights = (mk, mv, w1, b1, w2, packc)
        scratch = []
        xin = x.reshape(nrows, C)                                 # free view, no transpose
        out_shape = jax.ShapeDtypeStruct((nrows, C), x.dtype)
        attn_flops, trans = 4 * B * L * N * C * S, B * L * N * S
    else:
        raise ValueError("Unsupported attention type. Choose 'temporal' or 'spatial'.")

    weight_specs = [pl.BlockSpec(w.shape, lambda i: (0, 0)) for w in weights]
    cost = pl.CostEstimate(
        flops=int(attn_flops + 4 * nrows * C * F),
        transcendentals=int(trans + 2 * nrows),
        bytes_accessed=int(2 * nrows * C * x.dtype.itemsize
                           + sum(int(w.size) * w.dtype.itemsize for w in weights)))

    out = pl.pallas_call(
        kernel,
        out_shape=out_shape,
        grid=grid,
        in_specs=[data_spec] + weight_specs,
        out_specs=data_spec,
        scratch_shapes=scratch,
        compiler_params=pltpu.CompilerParams(
            dimension_semantics=("parallel",),
            vmem_limit_bytes=vmem_limit),
        cost_estimate=cost,
    )(xin, *weights)

    return out if attn_type == "temporal" else out.reshape(B, L, N, C)


# --------------------------------------------------------------------------------------------
# pure-JAX reference mirroring the PyTorch forward (inference: dropout = identity)
# --------------------------------------------------------------------------------------------
def reference(x, p, attn_type):
    B, L, N, C = x.shape

    def ln(v, g, b):
        mu = v.mean(-1, keepdims=True)
        var = ((v - mu) ** 2).mean(-1, keepdims=True)
        return (v - mu) / jnp.sqrt(var + EPS_LN) * g + b

    residual = x
    if attn_type == "temporal":
        xt = jnp.transpose(x, (0, 2, 3, 1)).reshape(B * N, C, L)      # [B*N, C, L]
        attn = xt @ p["mk_t"]                                         # [B*N, C, S]
        attn = jax.nn.softmax(attn, axis=1)
        attn = attn / (attn.sum(axis=2, keepdims=True) + EPS_EA)
        out = attn @ p["mv_t"]                                        # [B*N, C, L]
        out = out.reshape(B, N, C, L).transpose(0, 3, 1, 2)           # [B, L, N, C]
        h = ln(residual + out, p["ln1_t_g"], p["ln1_t_b"])
        ff = jnp.maximum(h @ p["w1_t"] + p["b1_t"], 0.0) @ p["w2_t"] + p["b2_t"]
        return ln(h + ff, p["ln2_t_g"], p["ln2_t_b"])
    else:
        attn = x @ p["mk_s"]                                          # [B, L, N, S]
        attn = jax.nn.softmax(attn, axis=2)
        attn = attn / (attn.sum(axis=3, keepdims=True) + EPS_EA)
        out = attn @ p["mv_s"]                                        # [B, L, N, C]
        h = ln(residual + out, p["ln1_s_g"], p["ln1_s_b"])
        ff = jnp.maximum(h @ p["w1_s"] + p["b1_s"], 0.0) @ p["w2_s"] + p["b2_s"]
        return ln(h + ff, p["ln2_s_g"], p["ln2_s_b"])


if __name__ == "__main__":
    # small shapes: B=2, seq_len L=8, num_nodes N=4, model_dim C=32, s_dim S=16, ff F=64
    B, L, N, C = 2, 8, 4, 32
    S, F = 16, 64

    key = jax.random.PRNGKey(0)
    keys = jax.random.split(key, 16)

    def w(k, shape):
        return jax.random.normal(k, shape, jnp.float32) * 0.1

    params = {
        # external-attention memories (bias-free linear layers), stored as [in, out]
        "mk_t": w(keys[0], (L, S)), "mv_t": w(keys[1], (S, L)),
        "mk_s": w(keys[2], (C, S)), "mv_s": w(keys[3], (S, C)),
        # feed-forward (temporal branch)
        "w1_t": w(keys[4], (C, F)), "b1_t": w(keys[5], (1, F)),
        "w2_t": w(keys[6], (F, C)), "b2_t": w(keys[7], (1, C)),
        # feed-forward (spatial branch)
        "w1_s": w(keys[8], (C, F)), "b1_s": w(keys[9], (1, F)),
        "w2_s": w(keys[10], (F, C)), "b2_s": w(keys[11], (1, C)),
        # layer norms (torch default init: gamma=1, beta=0)
        "ln1_t_g": jnp.ones((1, C), jnp.float32), "ln1_t_b": jnp.zeros((1, C), jnp.float32),
        "ln2_t_g": jnp.ones((1, C), jnp.float32), "ln2_t_b": jnp.zeros((1, C), jnp.float32),
        "ln1_s_g": jnp.ones((1, C), jnp.float32), "ln1_s_b": jnp.zeros((1, C), jnp.float32),
        "ln2_s_g": jnp.ones((1, C), jnp.float32), "ln2_s_b": jnp.zeros((1, C), jnp.float32),
    }

    x = jax.random.normal(keys[12], (B, L, N, C), jnp.float32)

    out_t = jax.block_until_ready(staebkp_encoder_layer(x, params, "temporal"))
    out_s = jax.block_until_ready(staebkp_encoder_layer(x, params, "spatial"))

    ref_t = reference(x, params, "temporal")
    ref_s = reference(x, params, "spatial")

    assert out_t.shape == x.shape and out_s.shape == x.shape
    # tolerance accounts for the approximate (EUP) reciprocals used for the softmax /
    # double-normalization denominators (~1e-3 relative error, benign downstream of LayerNorm)
    assert jnp.allclose(out_t, ref_t, atol=1e-2, rtol=1e-2)
    assert jnp.allclose(out_s, ref_s, atol=1e-2, rtol=1e-2)

    print("KERNEL_OK")
</pallas_src>

<mosaic_0001>
module attributes {stable_mosaic.version = 11 : i64} {
  func.func @_temporal_kernel(%arg0: i32, %arg1: memref<2x8x4x32xf32, #tpu.memory_space<vmem>>, %arg2: memref<16x8xf32, #tpu.memory_space<vmem>>, %arg3: memref<8x16xf32, #tpu.memory_space<vmem>>, %arg4: memref<32x64xf32, #tpu.memory_space<vmem>>, %arg5: memref<1x64xf32, #tpu.memory_space<vmem>>, %arg6: memref<64x32xf32, #tpu.memory_space<vmem>>, %arg7: memref<5x32xf32, #tpu.memory_space<vmem>>, %arg8: memref<2x8x4x32xf32, #tpu.memory_space<vmem>>, %arg9: memref<2x8x4x32xf32, #tpu.memory_space<vmem>>) attributes {dimension_semantics = [#tpu.dimension_semantics<parallel>], iteration_bounds = array<i64: 1>, scalar_prefetch = 0 : i64, scratch_operands = 1 : i64, tpu.core_type = #tpu.core_type<tc>, window_params = [{transform_indices = @transform_0, window_bounds = array<i64: 2, 8, 4, 32>}, {pipeline_mode = #tpu.pipeline_mode<synchronous>, transform_indices = @transform_1, window_bounds = array<i64: 16, 8>}, {pipeline_mode = #tpu.pipeline_mode<synchronous>, transform_indices = @transform_2, window_bounds = array<i64: 8, 16>}, {pipeline_mode = #tpu.pipeline_mode<synchronous>, transform_indices = @transform_3, window_bounds = array<i64: 32, 64>}, {pipeline_mode = #tpu.pipeline_mode<synchronous>, transform_indices = @transform_4, window_bounds = array<i64: 1, 64>}, {pipeline_mode = #tpu.pipeline_mode<synchronous>, transform_indices = @transform_5, window_bounds = array<i64: 64, 32>}, {pipeline_mode = #tpu.pipeline_mode<synchronous>, transform_indices = @transform_6, window_bounds = array<i64: 5, 32>}, {transform_indices = @transform_7, window_bounds = array<i64: 2, 8, 4, 32>}]} {
    %c0 = arith.constant 0 : index
    %c0_0 = arith.constant 0 : index
    %0 = vector.load %arg7[%c0, %c0_0] : memref<5x32xf32, #tpu.memory_space<vmem>>, vector<5x32xf32>
    %1 = vector.extract_strided_slice %0 {offsets = [0, 0], sizes = [1, 32], strides = [1, 1]} : vector<5x32xf32> to vector<1x32xf32>
    %2 = vector.extract_strided_slice %0 {offsets = [1, 0], sizes = [1, 32], strides = [1, 1]} : vector<5x32xf32> to vector<1x32xf32>
    %3 = vector.extract_strided_slice %0 {offsets = [2, 0], sizes = [1, 32], strides = [1, 1]} : vector<5x32xf32> to vector<1x32xf32>
    %4 = vector.extract_strided_slice %0 {offsets = [3, 0], sizes = [1, 32], strides = [1, 1]} : vector<5x32xf32> to vector<1x32xf32>
    %5 = vector.extract_strided_slice %0 {offsets = [4, 0], sizes = [1, 32], strides = [1, 1]} : vector<5x32xf32> to vector<1x32xf32>
    %c0_1 = arith.constant 0 : index
    %c0_2 = arith.constant 0 : index
    %6 = vector.load %arg2[%c0_1, %c0_2] : memref<16x8xf32, #tpu.memory_space<vmem>>, vector<16x8xf32>
    %c0_3 = arith.constant 0 : index
    %c0_4 = arith.constant 0 : index
    %7 = vector.load %arg3[%c0_3, %c0_4] : memref<8x16xf32, #tpu.memory_space<vmem>>, vector<8x16xf32>
    %8 = vector.shape_cast %6 : vector<16x8xf32> to vector<1x16x8xf32>
    %9 = vector.broadcast %8 : vector<1x16x8xf32> to vector<2x16x8xf32>
    %10 = vector.shape_cast %7 : vector<8x16xf32> to vector<1x8x16xf32>
    %11 = vector.broadcast %10 : vector<1x8x16xf32> to vector<2x8x16xf32>
    %12 = vector.shape_cast %2 : vector<1x32xf32> to vector<1x1x32xf32>
    %13 = vector.broadcast %12 : vector<1x1x32xf32> to vector<2x8x32xf32>
    %14 = vector.shape_cast %3 : vector<1x32xf32> to vector<1x1x32xf32>
    %15 = vector.broadcast %14 : vector<1x1x32xf32> to vector<2x8x32xf32>
    %c0_5 = arith.constant 0 : index
    %c0_6 = arith.constant 0 : index
    %c0_7 = arith.constant 0 : index
    %c0_8 = arith.constant 0 : index
    %16 = vector.load %arg1[%c0_5, %c0_6, %c0_7, %c0_8] : memref<2x8x4x32xf32, #tpu.memory_space<vmem>>, vector<2x8x1x32xf32>
    %17 = vector.shape_cast %16 : vector<2x8x1x32xf32> to vector<2x8x32xf32>
    "tpu.trace_start"() <{level = 10 : i32, message = "bsl,blc->bsc"}> : () -> ()
    %cst = arith.constant dense<0.000000e+00> : vector<2x16x32xf32>
    %18 = tpu.matmul %9, %17, %cst {dimension_numbers = #tpu.dot_dimension_numbers<[2], [1], [1], [2], [0, 0, 0, 1, 1, 2], [0], [0]>} : vector<2x16x8xf32>, vector<2x8x32xf32>, vector<2x16x32xf32> -> vector<2x16x32xf32>
    "tpu.trace_stop"() : () -> ()
    %cst_9 = arith.constant dense<0xFF800000> : vector<2x16xf32>
    %19 = vector.multi_reduction <maximumf>, %18, %cst_9 [2] : vector<2x16x32xf32> to vector<2x16xf32>
    %20 = vector.shape_cast %19 : vector<2x16xf32> to vector<2x16x1xf32>
    %21 = vector.broadcast %20 : vector<2x16x1xf32> to vector<2x16x32xf32>
    %22 = arith.subf %18, %21 : vector<2x16x32xf32>
    %23 = math.exp %22 : vector<2x16x32xf32>
    %cst_10 = arith.constant dense<0.000000e+00> : vector<2x16xf32>
    %24 = vector.multi_reduction <add>, %23, %cst_10 [2] : vector<2x16x32xf32> to vector<2x16xf32>
    %25 = vector.shape_cast %24 : vector<2x16xf32> to vector<2x16x1xf32>
    %26 = tpu.reciprocal %25 {approx = true} : vector<2x16x1xf32> -> vector<2x16x1xf32>
    %27 = vector.broadcast %26 : vector<2x16x1xf32> to vector<2x16x32xf32>
    %28 = arith.mulf %23, %27 : vector<2x16x32xf32>
    %cst_11 = arith.constant dense<0.000000e+00> : vector<2x32xf32>
    %29 = vector.multi_reduction <add>, %28, %cst_11 [1] : vector<2x16x32xf32> to vector<2x32xf32>
    %30 = vector.shape_cast %29 : vector<2x32xf32> to vector<2x1x32xf32>
    %cst_12 = arith.constant 9.99999971E-10 : f32
    %31 = vector.broadcast %cst_12 : f32 to vector<2x1x32xf32>
    %32 = arith.addf %30, %31 : vector<2x1x32xf32>
    %33 = tpu.reciprocal %32 {approx = true} : vector<2x1x32xf32> -> vector<2x1x32xf32>
    %34 = vector.broadcast %33 : vector<2x1x32xf32> to vector<2x16x32xf32>
    %35 = arith.mulf %28, %34 : vector<2x16x32xf32>
    "tpu.trace_start"() <{level = 10 : i32, message = "bls,bsc->blc"}> : () -> ()
    %cst_13 = arith.constant dense<0.000000e+00> : vector<2x8x32xf32>
    %36 = tpu.matmul %11, %35, %cst_13 {dimension_numbers = #tpu.dot_dimension_numbers<[2], [1], [1], [2], [0, 0, 0, 1, 1, 2], [0], [0]>} : vector<2x8x16xf32>, vector<2x16x32xf32>, vector<2x8x32xf32> -> vector<2x8x32xf32>
    "tpu.trace_stop"() : () -> ()
    %37 = arith.addf %17, %36 : vector<2x8x32xf32>
    %cst_14 = arith.constant dense<0.000000e+00> : vector<2x8xf32>
    %38 = vector.multi_reduction <add>, %37, %cst_14 [2] : vector<2x8x32xf32> to vector<2x8xf32>
    %39 = vector.shape_cast %38 : vector<2x8xf32> to vector<2x8x1xf32>
    %cst_15 = arith.constant 3.200000e+01 : f32
    %40 = vector.broadcast %cst_15 : f32 to vector<2x8x1xf32>
    %41 = arith.divf %39, %40 : vector<2x8x1xf32>
    %42 = vector.broadcast %41 : vector<2x8x1xf32> to vector<2x8x32xf32>
    %43 = arith.subf %37, %42 : vector<2x8x32xf32>
    %44 = arith.mulf %43, %43 : vector<2x8x32xf32>
    %cst_16 = arith.constant dense<0.000000e+00> : vector<2x8xf32>
    %45 = vector.multi_reduction <add>, %44, %cst_16 [2] : vector<2x8x32xf32> to vector<2x8xf32>
    %46 = vector.shape_cast %45 : vector<2x8xf32> to vector<2x8x1xf32>
    %cst_17 = arith.constant 3.200000e+01 : f32
    %47 = vector.broadcast %cst_17 : f32 to vector<2x8x1xf32>
    %48 = arith.divf %46, %47 : vector<2x8x1xf32>
    %49 = vector.broadcast %41 : vector<2x8x1xf32> to vector<2x8x32xf32>
    %50 = arith.subf %37, %49 : vector<2x8x32xf32>
    %cst_18 = arith.constant 9.99999974E-6 : f32
    %51 = vector.broadcast %cst_18 : f32 to vector<2x8x1xf32>
    %52 = arith.addf %48, %51 : vector<2x8x1xf32>
    %53 = math.rsqrt %52 : vector<2x8x1xf32>
    %54 = vector.broadcast %53 : vector<2x8x1xf32> to vector<2x8x32xf32>
    %55 = arith.mulf %50, %54 : vector<2x8x32xf32>
    %56 = arith.mulf %55, %13 : vector<2x8x32xf32>
    %57 = arith.addf %56, %15 : vector<2x8x32xf32>
    %c0_19 = arith.constant 0 : index
    %c0_20 = arith.constant 0 : index
    %c0_21 = arith.constant 0 : index
    %c0_22 = arith.constant 0 : index
    %58 = vector.load %arg9[%c0_19, %c0_20, %c0_21, %c0_22] : memref<2x8x4x32xf32, #tpu.memory_space<vmem>>, vector<2x8x1x32xf32>
    %59 = vector.shape_cast %58 : vector<2x8x1x32xf32> to vector<2x8x32xf32>
    %60 = vector.shape_cast %57 : vector<2x8x32xf32> to vector<2x8x1x32xf32>
    tpu.vector_store %arg9[%c0_19, %c0_20, %c0_21, %c0_22], %60 {strides = array<i32>} : memref<2x8x4x32xf32, #tpu.memory_space<vmem>>, vector<2x8x1x32xf32>,
    %c0_23 = arith.constant 0 : index
    %c0_24 = arith.constant 0 : index
    %c1 = arith.constant 1 : index
    %c0_25 = arith.constant 0 : index
    %61 = vector.load %arg1[%c0_23, %c0_24, %c1, %c0_25] : memref<2x8x4x32xf32, #tpu.memory_space<vmem>>, vector<2x8x1x32xf32>
    %62 = vector.shape_cast %61 : vector<2x8x1x32xf32> to vector<2x8x32xf32>
    "tpu.trace_start"() <{level = 10 : i32, message = "bsl,blc->bsc"}> : () -> ()
    %cst_26 = arith.constant dense<0.000000e+00> : vector<2x16x32xf32>
    %63 = tpu.matmul %9, %62, %cst_26 {dimension_numbers = #tpu.dot_dimension_numbers<[2], [1], [1], [2], [0, 0, 0, 1, 1, 2], [0], [0]>} : vector<2x16x8xf32>, vector<2x8x32xf32>, vector<2x16x32xf32> -> vector<2x16x32xf32>
    "tpu.trace_stop"() : () -> ()
    %cst_27 = arith.constant dense<0xFF800000> : vector<2x16xf32>
    %64 = vector.multi_reduction <maximumf>, %63, %cst_27 [2] : vector<2x16x32xf32> to vector<2x16xf32>
    %65 = vector.shape_cast %64 : vector<2x16xf32> to vector<2x16x1xf32>
    %66 = vector.broadcast %65 : vector<2x16x1xf32> to vector<2x16x32xf32>
    %67 = arith.subf %63, %66 : vector<2x16x32xf32>
    %68 = math.exp %67 : vector<2x16x32xf32>
    %cst_28 = arith.constant dense<0.000000e+00> : vector<2x16xf32>
    %69 = vector.multi_reduction <add>, %68, %cst_28 [2] : vector<2x16x32xf32> to vector<2x16xf32>
    %70 = vector.shape_cast %69 : vector<2x16xf32> to vector<2x16x1xf32>
    %71 = tpu.reciprocal %70 {approx = true} : vector<2x16x1xf32> -> vector<2x16x1xf32>
    %72 = vector.broadcast %71 : vector<2x16x1xf32> to vector<2x16x32xf32>
    %73 = arith.mulf %68, %72 : vector<2x16x32xf32>
    %cst_29 = arith.constant dense<0.000000e+00> : vector<2x32xf32>
    %74 = vector.multi_reduction <add>, %73, %cst_29 [1] : vector<2x16x32xf32> to vector<2x32xf32>
    %75 = vector.shape_cast %74 : vector<2x32xf32> to vector<2x1x32xf32>
    %cst_30 = arith.constant 9.99999971E-10 : f32
    %76 = vector.broadcast %cst_30 : f32 to vector<2x1x32xf32>
    %77 = arith.addf %75, %76 : vector<2x1x32xf32>
    %78 = tpu.reciprocal %77 {approx = true} : vector<2x1x32xf32> -> vector<2x1x32xf32>
    %79 = vector.broadcast %78 : vector<2x1x32xf32> to vector<2x16x32xf32>
    %80 = arith.mulf %73, %79 : vector<2x16x32xf32>
    "tpu.trace_start"() <{level = 10 : i32, message = "bls,bsc->blc"}> : () -> ()
    %cst_31 = arith.constant dense<0.000000e+00> : vector<2x8x32xf32>
    %81 = tpu.matmul %11, %80, %cst_31 {dimension_numbers = #tpu.dot_dimension_numbers<[2], [1], [1], [2], [0, 0, 0, 1, 1, 2], [0], [0]>} : vector<2x8x16xf32>, vector<2x16x32xf32>, vector<2x8x32xf32> -> vector<2x8x32xf32>
    "tpu.trace_stop"() : () -> ()
    %82 = arith.addf %62, %81 : vector<2x8x32xf32>
    %cst_32 = arith.constant dense<0.000000e+00> : vector<2x8xf32>
    %83 = vector.multi_reduction <add>, %82, %cst_32 [2] : vector<2x8x32xf32> to vector<2x8xf32>
    %84 = vector.shape_cast %83 : vector<2x8xf32> to vector<2x8x1xf32>
    %cst_33 = arith.constant 3.200000e+01 : f32
    %85 = vector.broadcast %cst_33 : f32 to vector<2x8x1xf32>
    %86 = arith.divf %84, %85 : vector<2x8x1xf32>
    %87 = vector.broadcast %86 : vector<2x8x1xf32> to vector<2x8x32xf32>
    %88 = arith.subf %82, %87 : vector<2x8x32xf32>
    %89 = arith.mulf %88, %88 : vector<2x8x32xf32>
    %cst_34 = arith.constant dense<0.000000e+00> : vector<2x8xf32>
    %90 = vector.multi_reduction <add>, %89, %cst_34 [2] : vector<2x8x32xf32> to vector<2x8xf32>
    %91 = vector.shape_cast %90 : vector<2x8xf32> to vector<2x8x1xf32>
    %cst_35 = arith.constant 3.200000e+01 : f32
    %92 = vector.broadcast %cst_35 : f32 to vector<2x8x1xf32>
    %93 = arith.divf %91, %92 : vector<2x8x1xf32>
    %94 = vector.broadcast %86 : vector<2x8x1xf32> to vector<2x8x32xf32>
    %95 = arith.subf %82, %94 : vector<2x8x32xf32>
    %cst_36 = arith.constant 9.99999974E-6 : f32
    %96 = vector.broadcast %cst_36 : f32 to vector<2x8x1xf32>
    %97 = arith.addf %93, %96 : vector<2x8x1xf32>
    %98 = math.rsqrt %97 : vector<2x8x1xf32>
    %99 = vector.broadcast %98 : vector<2x8x1xf32> to vector<2x8x32xf32>
    %100 = arith.mulf %95, %99 : vector<2x8x32xf32>
    %101 = arith.mulf %100, %13 : vector<2x8x32xf32>
    %102 = arith.addf %101, %15 : vector<2x8x32xf32>
    %c0_37 = arith.constant 0 : index
    %c0_38 = arith.constant 0 : index
    %c1_39 = arith.constant 1 : index
    %c0_40 = arith.constant 0 : index
    %103 = vector.load %arg9[%c0_37, %c0_38, %c1_39, %c0_40] : memref<2x8x4x32xf32, #tpu.memory_space<vmem>>, vector<2x8x1x32xf32>
    %104 = vector.shape_cast %103 : vector<2x8x1x32xf32> to vector<2x8x32xf32>
    %105 = vector.shape_cast %102 : vector<2x8x32xf32> to vector<2x8x1x32xf32>
    tpu.vector_store %arg9[%c0_37, %c0_38, %c1_39, %c0_40], %105 {strides = array<i32>} : memref<2x8x4x32xf32, #tpu.memory_space<vmem>>, vector<2x8x1x32xf32>,
    %c0_41 = arith.constant 0 : index
    %c0_42 = arith.constant 0 : index
    %c2 = arith.constant 2 : index
    %c0_43 = arith.constant 0 : index
    %106 = vector.load %arg1[%c0_41, %c0_42, %c2, %c0_43] : memref<2x8x4x32xf32, #tpu.memory_space<vmem>>, vector<2x8x1x32xf32>
    %107 = vector.shape_cast %106 : vector<2x8x1x32xf32> to vector<2x8x32xf32>
    "tpu.trace_start"() <{level = 10 : i32, message = "bsl,blc->bsc"}> : () -> ()
    %cst_44 = arith.constant dense<0.000000e+00> : vector<2x16x32xf32>
    %108 = tpu.matmul %9, %107, %cst_44 {dimension_numbers = #tpu.dot_dimension_numbers<[2], [1], [1], [2], [0, 0, 0, 1, 1, 2], [0], [0]>} : vector<2x16x8xf32>, vector<2x8x32xf32>, vector<2x16x32xf32> -> vector<2x16x32xf32>
    "tpu.trace_stop"() : () -> ()
    %cst_45 = arith.constant dense<0xFF800000> : vector<2x16xf32>
    %109 = vector.multi_reduction <maximumf>, %108, %cst_45 [2] : vector<2x16x32xf32> to vector<2x16xf32>
    %110 = vector.shape_cast %109 : vector<2x16xf32> to vector<2x16x1xf32>
    %111 = vector.broadcast %110 : vector<2x16x1xf32> to vector<2x16x32xf32>
    %112 = arith.subf %108, %111 : vector<2x16x32xf32>
    %113 = math.exp %112 : vector<2x16x32xf32>
    %cst_46 = arith.constant dense<0.000000e+00> : vector<2x16xf32>
    %114 = vector.multi_reduction <add>, %113, %cst_46 [2] : vector<2x16x32xf32> to vector<2x16xf32>
    %115 = vector.shape_cast %114 : vector<2x16xf32> to vector<2x16x1xf32>
    %116 = tpu.reciprocal %115 {approx = true} : vector<2x16x1xf32> -> vector<2x16x1xf32>
    %117 = vector.broadcast %116 : vector<2x16x1xf32> to vector<2x16x32xf32>
    %118 = arith.mulf %113, %117 : vector<2x16x32xf32>
    %cst_47 = arith.constant dense<0.000000e+00> : vector<2x32xf32>
    %119 = vector.multi_reduction <add>, %118, %cst_47 [1] : vector<2x16x32xf32> to vector<2x32xf32>
    %120 = vector.shape_cast %119 : vector<2x32xf32> to vector<2x1x32xf32>
    %cst_48 = arith.constant 9.99999971E-10 : f32
    %121 = vector.broadcast %cst_48 : f32 to vector<2x1x32xf32>
    %122 = arith.addf %120, %121 : vector<2x1x32xf32>
    %123 = tpu.reciprocal %122 {approx = true} : vector<2x1x32xf32> -> vector<2x1x32xf32>
    %124 = vector.broadcast %123 : vector<2x1x32xf32> to vector<2x16x32xf32>
    %125 = arith.mulf %118, %124 : vector<2x16x32xf32>
    "tpu.trace_start"() <{level = 10 : i32, message = "bls,bsc->blc"}> : () -> ()
    %cst_49 = arith.constant dense<0.000000e+00> : vector<2x8x32xf32>
    %126 = tpu.matmul %11, %125, %cst_49 {dimension_numbers = #tpu.dot_dimension_numbers<[2], [1], [1], [2], [0, 0, 0, 1, 1, 2], [0], [0]>} : vector<2x8x16xf32>, vector<2x16x32xf32>, vector<2x8x32xf32> -> vector<2x8x32xf32>
    "tpu.trace_stop"() : () -> ()
    %127 = arith.addf %107, %126 : vector<2x8x32xf32>
    %cst_50 = arith.constant dense<0.000000e+00> : vector<2x8xf32>
    %128 = vector.multi_reduction <add>, %127, %cst_50 [2] : vector<2x8x32xf32> to vector<2x8xf32>
    %129 = vector.shape_cast %128 : vector<2x8xf32> to vector<2x8x1xf32>
    %cst_51 = arith.constant 3.200000e+01 : f32
    %130 = vector.broadcast %cst_51 : f32 to vector<2x8x1xf32>
    %131 = arith.divf %129, %130 : vector<2x8x1xf32>
    %132 = vector.broadcast %131 : vector<2x8x1xf32> to vector<2x8x32xf32>
    %133 = arith.subf %127, %132 : vector<2x8x32xf32>
    %134 = arith.mulf %133, %133 : vector<2x8x32xf32>
    %cst_52 = arith.constant dense<0.000000e+00> : vector<2x8xf32>
    %135 = vector.multi_reduction <add>, %134, %cst_52 [2] : vector<2x8x32xf32> to vector<2x8xf32>
    %136 = vector.shape_cast %135 : vector<2x8xf32> to vector<2x8x1xf32>
    %cst_53 = arith.constant 3.200000e+01 : f32
    %137 = vector.broadcast %cst_53 : f32 to vector<2x8x1xf32>
    %138 = arith.divf %136, %137 : vector<2x8x1xf32>
    %139 = vector.broadcast %131 : vector<2x8x1xf32> to vector<2x8x32xf32>
    %140 = arith.subf %127, %139 : vector<2x8x32xf32>
    %cst_54 = arith.constant 9.99999974E-6 : f32
    %141 = vector.broadcast %cst_54 : f32 to vector<2x8x1xf32>
    %142 = arith.addf %138, %141 : vector<2x8x1xf32>
    %143 = math.rsqrt %142 : vector<2x8x1xf32>
    %144 = vector.broadcast %143 : vector<2x8x1xf32> to vector<2x8x32xf32>
    %145 = arith.mulf %140, %144 : vector<2x8x32xf32>
    %146 = arith.mulf %145, %13 : vector<2x8x32xf32>
    %147 = arith.addf %146, %15 : vector<2x8x32xf32>
    %c0_55 = arith.constant 0 : index
    %c0_56 = arith.constant 0 : index
    %c2_57 = arith.constant 2 : index
    %c0_58 = arith.constant 0 : index
    %148 = vector.load %arg9[%c0_55, %c0_56, %c2_57, %c0_58] : memref<2x8x4x32xf32, #tpu.memory_space<vmem>>, vector<2x8x1x32xf32>
    %149 = vector.shape_cast %148 : vector<2x8x1x32xf32> to vector<2x8x32xf32>
    %150 = vector.shape_cast %147 : vector<2x8x32xf32> to vector<2x8x1x32xf32>
    tpu.vector_store %arg9[%c0_55, %c0_56, %c2_57, %c0_58], %150 {strides = array<i32>} : memref<2x8x4x32xf32, #tpu.memory_space<vmem>>, vector<2x8x1x32xf32>,
    %c0_59 = arith.constant 0 : index
    %c0_60 = arith.constant 0 : index
    %c3 = arith.constant 3 : index
    %c0_61 = arith.constant 0 : index
    %151 = vector.load %arg1[%c0_59, %c0_60, %c3, %c0_61] : memref<2x8x4x32xf32, #tpu.memory_space<vmem>>, vector<2x8x1x32xf32>
    %152 = vector.shape_cast %151 : vector<2x8x1x32xf32> to vector<2x8x32xf32>
    "tpu.trace_start"() <{level = 10 : i32, message = "bsl,blc->bsc"}> : () -> ()
    %cst_62 = arith.constant dense<0.000000e+00> : vector<2x16x32xf32>
    %153 = tpu.matmul %9, %152, %cst_62 {dimension_numbers = #tpu.dot_dimension_numbers<[2], [1], [1], [2], [0, 0, 0, 1, 1, 2], [0], [0]>} : vector<2x16x8xf32>, vector<2x8x32xf32>, vector<2x16x32xf32> -> vector<2x16x32xf32>
    "tpu.trace_stop"() : () -> ()
    %cst_63 = arith.constant dense<0xFF800000> : vector<2x16xf32>
    %154 = vector.multi_reduction <maximumf>, %153, %cst_63 [2] : vector<2x16x32xf32> to vector<2x16xf32>
    %155 = vector.shape_cast %154 : vector<2x16xf32> to vector<2x16x1xf32>
    %156 = vector.broadcast %155 : vector<2x16x1xf32> to vector<2x16x32xf32>
    %157 = arith.subf %153, %156 : vector<2x16x32xf32>
    %158 = math.exp %157 : vector<2x16x32xf32>
    %cst_64 = arith.constant dense<0.000000e+00> : vector<2x16xf32>
    %159 = vector.multi_reduction <add>, %158, %cst_64 [2] : vector<2x16x32xf32> to vector<2x16xf32>
    %160 = vector.shape_cast %159 : vector<2x16xf32> to vector<2x16x1xf32>
    %161 = tpu.reciprocal %160 {approx = true} : vector<2x16x1xf32> -> vector<2x16x1xf32>
    %162 = vector.broadcast %161 : vector<2x16x1xf32> to vector<2x16x32xf32>
    %163 = arith.mulf %158, %162 : vector<2x16x32xf32>
    %cst_65 = arith.constant dense<0.000000e+00> : vector<2x32xf32>
    %164 = vector.multi_reduction <add>, %163, %cst_65 [1] : vector<2x16x32xf32> to vector<2x32xf32>
    %165 = vector.shape_cast %164 : vector<2x32xf32> to vector<2x1x32xf32>
    %cst_66 = arith.constant 9.99999971E-10 : f32
    %166 = vector.broadcast %cst_66 : f32 to vector<2x1x32xf32>
    %167 = arith.addf %165, %166 : vector<2x1x32xf32>
    %168 = tpu.reciprocal %167 {approx = true} : vector<2x1x32xf32> -> vector<2x1x32xf32>
    %169 = vector.broadcast %168 : vector<2x1x32xf32> to vector<2x16x32xf32>
    %170 = arith.mulf %163, %169 : vector<2x16x32xf32>
    "tpu.trace_start"() <{level = 10 : i32, message = "bls,bsc->blc"}> : () -> ()
    %cst_67 = arith.constant dense<0.000000e+00> : vector<2x8x32xf32>
    %171 = tpu.matmul %11, %170, %cst_67 {dimension_numbers = #tpu.dot_dimension_numbers<[2], [1], [1], [2], [0, 0, 0, 1, 1, 2], [0], [0]>} : vector<2x8x16xf32>, vector<2x16x32xf32>, vector<2x8x32xf32> -> vector<2x8x32xf32>
    "tpu.trace_stop"() : () -> ()
    %172 = arith.addf %152, %171 : vector<2x8x32xf32>
    %cst_68 = arith.constant dense<0.000000e+00> : vector<2x8xf32>
    %173 = vector.multi_reduction <add>, %172, %cst_68 [2] : vector<2x8x32xf32> to vector<2x8xf32>
    %174 = vector.shape_cast %173 : vector<2x8xf32> to vector<2x8x1xf32>
    %cst_69 = arith.constant 3.200000e+01 : f32
    %175 = vector.broadcast %cst_69 : f32 to vector<2x8x1xf32>
    %176 = arith.divf %174, %175 : vector<2x8x1xf32>
    %177 = vector.broadcast %176 : vector<2x8x1xf32> to vector<2x8x32xf32>
    %178 = arith.subf %172, %177 : vector<2x8x32xf32>
    %179 = arith.mulf %178, %178 : vector<2x8x32xf32>
    %cst_70 = arith.constant dense<0.000000e+00> : vector<2x8xf32>
    %180 = vector.multi_reduction <add>, %179, %cst_70 [2] : vector<2x8x32xf32> to vector<2x8xf32>
    %181 = vector.shape_cast %180 : vector<2x8xf32> to vector<2x8x1xf32>
    %cst_71 = arith.constant 3.200000e+01 : f32
    %182 = vector.broadcast %cst_71 : f32 to vector<2x8x1xf32>
    %183 = arith.divf %181, %182 : vector<2x8x1xf32>
    %184 = vector.broadcast %176 : vector<2x8x1xf32> to vector<2x8x32xf32>
    %185 = arith.subf %172, %184 : vector<2x8x32xf32>
    %cst_72 = arith.constant 9.99999974E-6 : f32
    %186 = vector.broadcast %cst_72 : f32 to vector<2x8x1xf32>
    %187 = arith.addf %183, %186 : vector<2x8x1xf32>
    %188 = math.rsqrt %187 : vector<2x8x1xf32>
    %189 = vector.broadcast %188 : vector<2x8x1xf32> to vector<2x8x32xf32>
    %190 = arith.mulf %185, %189 : vector<2x8x32xf32>
    %191 = arith.mulf %190, %13 : vector<2x8x32xf32>
    %192 = arith.addf %191, %15 : vector<2x8x32xf32>
    %c0_73 = arith.constant 0 : index
    %c0_74 = arith.constant 0 : index
    %c3_75 = arith.constant 3 : index
    %c0_76 = arith.constant 0 : index
    %193 = vector.load %arg9[%c0_73, %c0_74, %c3_75, %c0_76] : memref<2x8x4x32xf32, #tpu.memory_space<vmem>>, vector<2x8x1x32xf32>
    %194 = vector.shape_cast %193 : vector<2x8x1x32xf32> to vector<2x8x32xf32>
    %195 = vector.shape_cast %192 : vector<2x8x32xf32> to vector<2x8x1x32xf32>
    tpu.vector_store %arg9[%c0_73, %c0_74, %c3_75, %c0_76], %195 {strides = array<i32>} : memref<2x8x4x32xf32, #tpu.memory_space<vmem>>, vector<2x8x1x32xf32>,
    %c0_77 = arith.constant 0 : index
    %c0_78 = arith.constant 0 : index
    %c0_79 = arith.constant 0 : index
    %c0_80 = arith.constant 0 : index
    %196 = vector.load %arg9[%c0_77, %c0_78, %c0_79, %c0_80] : memref<2x8x4x32xf32, #tpu.memory_space<vmem>>, vector<2x8x4x32xf32>
    %197 = vector.shape_cast %196 : vector<2x8x4x32xf32> to vector<64x32xf32>
    %c0_81 = arith.constant 0 : index
    %c0_82 = arith.constant 0 : index
    %198 = vector.load %arg4[%c0_81, %c0_82] : memref<32x64xf32, #tpu.memory_space<vmem>>, vector<32x64xf32>
    %cst_83 = arith.constant dense<0.000000e+00> : vector<64x64xf32>
    %199 = tpu.matmul %197, %198, %cst_83 {dimension_numbers = #tpu.dot_dimension_numbers<[1], [0], [0], [1], [0, 0, 1, 1], [], []>} : vector<64x32xf32>, vector<32x64xf32>, vector<64x64xf32> -> vector<64x64xf32>
    %c0_84 = arith.constant 0 : index
    %c0_85 = arith.constant 0 : index
    %200 = vector.load %arg5[%c0_84, %c0_85] : memref<1x64xf32, #tpu.memory_space<vmem>>, vector<1x64xf32>
    %201 = vector.broadcast %200 : vector<1x64xf32> to vector<64x64xf32>
    %202 = arith.addf %199, %201 : vector<64x64xf32>
    %cst_86 = arith.constant 0.000000e+00 : f32
    %203 = vector.broadcast %cst_86 : f32 to vector<64x64xf32>
    %204 = arith.maximumf %202, %203 : vector<64x64xf32>
    %c0_87 = arith.constant 0 : index
    %c0_88 = arith.constant 0 : index
    %205 = vector.load %arg6[%c0_87, %c0_88] : memref<64x32xf32, #tpu.memory_space<vmem>>, vector<64x32xf32>
    %cst_89 = arith.constant dense<0.000000e+00> : vector<64x32xf32>
    %206 = tpu.matmul %204, %205, %cst_89 {dimension_numbers = #tpu.dot_dimension_numbers<[1], [0], [0], [1], [0, 0, 1, 1], [], []>} : vector<64x64xf32>, vector<64x32xf32>, vector<64x32xf32> -> vector<64x32xf32>
    %207 = vector.broadcast %1 : vector<1x32xf32> to vector<64x32xf32>
    %208 = arith.addf %206, %207 : vector<64x32xf32>
    %209 = arith.addf %197, %208 : vector<64x32xf32>
    %cst_90 = arith.constant dense<0.000000e+00> : vector<64xf32>
    %210 = vector.multi_reduction <add>, %209, %cst_90 [1] : vector<64x32xf32> to vector<64xf32>
    %211 = vector.shape_cast %210 : vector<64xf32> to vector<64x1xf32>
    %cst_91 = arith.constant 3.200000e+01 : f32
    %212 = vector.broadcast %cst_91 : f32 to vector<64x1xf32>
    %213 = arith.divf %211, %212 : vector<64x1xf32>
    %214 = vector.broadcast %213 : vector<64x1xf32> to vector<64x32xf32>
    %215 = arith.subf %209, %214 : vector<64x32xf32>
    %216 = arith.mulf %215, %215 : vector<64x32xf32>
    %cst_92 = arith.constant dense<0.000000e+00> : vector<64xf32>
    %217 = vector.multi_reduction <add>, %216, %cst_92 [1] : vector<64x32xf32> to vector<64xf32>
    %218 = vector.shape_cast %217 : vector<64xf32> to vector<64x1xf32>
    %cst_93 = arith.constant 3.200000e+01 : f32
    %219 = vector.broadcast %cst_93 : f32 to vector<64x1xf32>
    %220 = arith.divf %218, %219 : vector<64x1xf32>
    %221 = vector.broadcast %213 : vector<64x1xf32> to vector<64x32xf32>
    %222 = arith.subf %209, %221 : vector<64x32xf32>
    %cst_94 = arith.constant 9.99999974E-6 : f32
    %223 = vector.broadcast %cst_94 : f32 to vector<64x1xf32>
    %224 = arith.addf %220, %223 : vector<64x1xf32>
    %225 = math.rsqrt %224 : vector<64x1xf32>
    %226 = vector.broadcast %225 : vector<64x1xf32> to vector<64x32xf32>
    %227 = arith.mulf %222, %226 : vector<64x32xf32>
    %228 = vector.broadcast %4 : vector<1x32xf32> to vector<64x32xf32>
    %229 = arith.mulf %227, %228 : vector<64x32xf32>
    %230 = vector.broadcast %5 : vector<1x32xf32> to vector<64x32xf32>
    %231 = arith.addf %229, %230 : vector<64x32xf32>
    %232 = vector.shape_cast %231 : vector<64x32xf32> to vector<2x8x4x32xf32>
    %c0_95 = arith.constant 0 : index
    %c0_96 = arith.constant 0 : index
    %c0_97 = arith.constant 0 : index
    %c0_98 = arith.constant 0 : index
    %233 = vector.load %arg8[%c0_95, %c0_96, %c0_97, %c0_98] : memref<2x8x4x32xf32, #tpu.memory_space<vmem>>, vector<2x8x4x32xf32>
    tpu.vector_store %arg8[%c0_95, %c0_96, %c0_97, %c0_98], %232 {strides = array<i32>} : memref<2x8x4x32xf32, #tpu.memory_space<vmem>>, vector<2x8x4x32xf32>,
    return
  }
  func.func @transform_0(%arg0: i32) -> (i32, i32, i32, i32) {
    %c0_i32 = arith.constant 0 : i32
    %c0_i32_0 = arith.constant 0 : i32
    %c0_i32_1 = arith.constant 0 : i32
    %c0_i32_2 = arith.constant 0 : i32
    return %arg0, %c0_i32, %c0_i32_0, %c0_i32_1 : i32, i32, i32, i32
  }
  func.func @transform_1(%arg0: i32) -> (i32, i32) {
    %c0_i32 = arith.constant 0 : i32
    %c0_i32_0 = arith.constant 0 : i32
    %c0_i32_1 = arith.constant 0 : i32
    return %c0_i32, %c0_i32_0 : i32, i32
  }
  func.func @transform_2(%arg0: i32) -> (i32, i32) {
    %c0_i32 = arith.constant 0 : i32
    %c0_i32_0 = arith.constant 0 : i32
    %c0_i32_1 = arith.constant 0 : i32
    return %c0_i32, %c0_i32_0 : i32, i32
  }
  func.func @transform_3(%arg0: i32) -> (i32, i32) {
    %c0_i32 = arith.constant 0 : i32
    %c0_i32_0 = arith.constant 0 : i32
    %c0_i32_1 = arith.constant 0 : i32
    return %c0_i32, %c0_i32_0 : i32, i32
  }
  func.func @transform_4(%arg0: i32) -> (i32, i32) {
    %c0_i32 = arith.constant 0 : i32
    %c0_i32_0 = arith.constant 0 : i32
    %c0_i32_1 = arith.constant 0 : i32
    return %c0_i32, %c0_i32_0 : i32, i32
  }
  func.func @transform_5(%arg0: i32) -> (i32, i32) {
    %c0_i32 = arith.constant 0 : i32
    %c0_i32_0 = arith.constant 0 : i32
    %c0_i32_1 = arith.constant 0 : i32
    return %c0_i32, %c0_i32_0 : i32, i32
  }
  func.func @transform_6(%arg0: i32) -> (i32, i32) {
    %c0_i32 = arith.constant 0 : i32
    %c0_i32_0 = arith.constant 0 : i32
    %c0_i32_1 = arith.constant 0 : i32
    return %c0_i32, %c0_i32_0 : i32, i32
  }
  func.func @transform_7(%arg0: i32) -> (i32, i32, i32, i32) {
    %c0_i32 = arith.constant 0 : i32
    %c0_i32_0 = arith.constant 0 : i32
    %c0_i32_1 = arith.constant 0 : i32
    %c0_i32_2 = arith.constant 0 : i32
    return %arg0, %c0_i32, %c0_i32_0, %c0_i32_1 : i32, i32, i32, i32
  }
}

</mosaic_0001>

<llo_original>
// kernel: tpu_custom_call.1
$region0: #{tpu_custom_call.1}
  #allocation0 [shape = 'u32[]', space=smem, size = 0x4, offset = 0x4, fixed_abs, tag = 'smem constant byte address 0x4 - core index']
  #allocation1 [shape = 'u32[144,128]{1,0:T(1,128)}', space=vmem, size = 0x12000, scoped, tag = 'internal scratch']
  #allocation2 [shape = 'f32[2,8,4,32]{3,2,1,0:T(4,128)}', space=vmem, size = 0x8000, scoped, tag = 'scratch operand']
  %s0 = inlined_call_operand.vmem [shape: f32[2,8,4,32], index: 0, kind: input, shape index: {}]
  %s1 = inlined_call_operand.vmem [shape: f32[16,8], index: 1, kind: input, shape index: {}]
  %s2 = inlined_call_operand.vmem [shape: f32[8,16], index: 2, kind: input, shape index: {}]
  %s3 = inlined_call_operand.vmem [shape: f32[32,64], index: 3, kind: input, shape index: {}]
  %s4 = inlined_call_operand.vmem [shape: f32[1,64], index: 4, kind: input, shape index: {}]
  %s5 = inlined_call_operand.vmem [shape: f32[64,32], index: 5, kind: input, shape index: {}]
  %s6 = inlined_call_operand.hbm [shape: f32[5,32], index: 6, kind: input, shape index: {}]
  %s7 = inlined_call_operand.hbm [shape: f32[2,8,4,32], index: 7, kind: output, shape index: {}]
  %s8 = sld [smem:[#allocation0]]
  $region42: #{tpu_custom_call.1} parent=0
    _
  %s10 = ssub.s32 1, %s8
  %s11 = scalar_select 0, %s10, %s8
  $region1: #{tpu_custom_call.1} parent=0
    #allocation3 [shape = 'u8[4096]{0}', space=vmem, size = 0x1000, scoped, tag = 'input window, operand 6, single buffered']
    #allocation4 [shape = 's32[1]{0}', space=sflag, size = 0x4, scoped, tag = 'scoped memory for tpu_custom_call.1']
    #allocation5 [shape = 's32[1]{0}', space=sflag, size = 0x4, scoped, tag = 'scoped memory for tpu_custom_call.1']
    #allocation6 [shape = 'u8[32768]{0}', space=vmem, size = 0x8000, scoped, tag = 'output window, operand 0, single buffered']
    %12 = vsyncpa [#allocation4], 0
    %13 = vsyncpa [#allocation5], 0
    // Predicated region
    $region2: #{tpu_custom_call.1} parent=1 // pred_check
      _
    $region3: #{tpu_custom_call.1} parent=1 // pred_check_branch
      %15 = sbr.rel (0) target = $region5
    $region4: #{tpu_custom_call.1} parent=1 // pred_region
      _
    $region5: #{tpu_custom_call.1} parent=1 // pred_fallthru
      _
    // Predicated region
    $region6: #{tpu_custom_call.1} parent=1 // pred_check
      _
    $region7: #{tpu_custom_call.1} parent=1 // pred_check_branch
      %17 = sbr.rel (0) target = $region9
    $region8: #{tpu_custom_call.1} parent=1 // pred_region
      _
    $region9: #{tpu_custom_call.1} parent=1 // pred_fallthru
      _
    // Predicated region
    $region10: #{tpu_custom_call.1} parent=1 // pred_check
      _
    $region11: #{tpu_custom_call.1} parent=1 // pred_check_branch
      %19 = sbr.rel (0) target = $region13
    $region12: #{tpu_custom_call.1} parent=1 // pred_region
      _
    $region13: #{tpu_custom_call.1} parent=1 // pred_fallthru
      _
    // Predicated region
    $region14: #{tpu_custom_call.1} parent=1 // pred_check
      _
    $region15: #{tpu_custom_call.1} parent=1 // pred_check_branch
      %21 = sbr.rel (0) target = $region17
    $region16: #{tpu_custom_call.1} parent=1 // pred_region
      _
    $region17: #{tpu_custom_call.1} parent=1 // pred_fallthru
      _
    // Predicated region
    $region18: #{tpu_custom_call.1} parent=1 // pred_check
      _
    $region19: #{tpu_custom_call.1} parent=1 // pred_check_branch
      %23 = sbr.rel (0) target = $region21
    $region20: #{tpu_custom_call.1} parent=1 // pred_region
      _
    $region21: #{tpu_custom_call.1} parent=1 // pred_fallthru
      _
    // Predicated region
    $region22: #{tpu_custom_call.1} parent=1 // pred_check
      _
    $region23: #{tpu_custom_call.1} parent=1 // pred_check_branch
      %25 = sbr.rel (0) target = $region25
    $region24: #{tpu_custom_call.1} parent=1 // pred_region
      _
    $region25: #{tpu_custom_call.1} parent=1 // pred_fallthru
      _
    // Predicated region
    $region26: #{tpu_custom_call.1} parent=1 // pred_check
      _
    $region27: #{tpu_custom_call.1} parent=1 // pred_check_branch
      %27 = sbr.rel (0) target = $region29
    $region28: #{tpu_custom_call.1} parent=1 // pred_region
      %s29 = ssub.s32 128, 128
      %30 = vsyncadd [#allocation4], %s29
      %s32 = sshll.u32 [#allocation3], 4
      %s33 = int_to_ptr.vmem [resolvable:$true] %s32
      %35 = dma.hbm_to_vmem [thread:$0]  %s6, 128, %s33, [#allocation4]
    $region29: #{tpu_custom_call.1} parent=1 // pred_fallthru
      _
    // Predicated region
    $region30: #{tpu_custom_call.1} parent=1 // pred_check
      _
    $region31: #{tpu_custom_call.1} parent=1 // pred_check_branch
      %37 = sbr.rel (0) target = $region33
    $region32: #{tpu_custom_call.1} parent=1 // pred_region
      %38 = dma.done [#allocation4], 128
    $region33: #{tpu_custom_call.1} parent=1 // pred_fallthru
      _
    %v39 = vld [vmem:[#allocation3] sm:$0x1f]
    %v40 = vld [vmem:[%s1] sm:$0xff]
    %v41 = vld [vmem:[%s1 + $0x8] sm:$0xff]
    %v42 = vld [vmem:[%s2] sm:$0xff]
    %v43 = vlaneseq
    %v44 = vshrl.u32 %v43, 7
    %v45 = vsub.s32 1, %v44
    %v46 = vrot.slane %v39, %v45
    %v47 = vlaneseq
    %v48 = vshrl.u32 %v47, 7
    %v49 = vsub.s32 2, %v48
    %v50 = vrot.slane %v39, %v49
    %v51 = vld [vmem:[%s0] sm:$0x1]
    %v52 = vld [vmem:[%s0 + $0x4] sm:$0x1]
    %v53 = vld [vmem:[%s0 + $0x8] sm:$0x1]
    %v54 = vld [vmem:[%s0 + $0xc] sm:$0x1]
    %v55 = vld [vmem:[%s0 + $0x10] sm:$0x1]
    %v56 = vld [vmem:[%s0 + $0x14] sm:$0x1]
    %v57 = vld [vmem:[%s0 + $0x18] sm:$0x1]
    %v58 = vld [vmem:[%s0 + $0x1c] sm:$0x1]
    %v59 = vld [vmem:[%s0 + $0x20] sm:$0x1]
    %v60 = vld [vmem:[%s0 + $0x24] sm:$0x1]
    %v61 = vld [vmem:[%s0 + $0x28] sm:$0x1]
    %v62 = vld [vmem:[%s0 + $0x2c] sm:$0x1]
    %v63 = vld [vmem:[%s0 + $0x30] sm:$0x1]
    %v64 = vld [vmem:[%s0 + $0x34] sm:$0x1]
    %v65 = vld [vmem:[%s0 + $0x38] sm:$0x1]
    %v66 = vld [vmem:[%s0 + $0x3c] sm:$0x1]
    %v75 = vrot.slane %v52, 7
    %vm76 = vcmask 1041409
    %v77 = vsel %vm76, %v75, %v51
    %v78 = vrot.slane %v53, 6
    %vm79 = vcmask 1042434
    %v80 = vsel %vm79, %v78, %v77
    %v81 = vrot.slane %v54, 5
    %vm82 = vcmask 1043459
    %v83 = vsel %vm82, %v81, %v80
    %v84 = vrot.slane %v55, 4
    %vm85 = vcmask 1044484
    %v86 = vsel %vm85, %v84, %v83
    %v87 = vrot.slane %v56, 3
    %vm88 = vcmask 1045509
    %v89 = vsel %vm88, %v87, %v86
    %v90 = vrot.slane %v57, 2
    %vm91 = vcmask 1046534
    %v92 = vsel %vm91, %v90, %v89
    %v93 = vrot.slane %v58, 1
    %vm94 = vcmask 1047559
    %v95 = vsel %vm94, %v93, %v92
    %vm97 = vcmask 64512
    %v99 = vsel %vm97, %v40, 0
    %v102 = vsel %vm97, %v41, 0
    %104 = vmatprep.subr.mxu0 0.0
    %105 = vmatpush1.msra.mxu0 %v95
    %106 = vmatprep.subr.mxu0 0.0
    %107 = vmatpush1.msra.mxu0 0.0
    %108 = vmatprep.subr.mxu0 0.0
    %109 = vmatpush1.msra.mxu0 0.0
    %110 = vmatprep.subr.mxu0 0.0
    %111 = vmatpush1.msra.mxu0 0.0
    %112 = vmatprep.subr.mxu0 0.0
    %113 = vmatpush1.msra.mxu0 0.0
    %114 = vmatprep.subr.mxu0 0.0
    %115 = vmatpush1.msra.mxu0 0.0
    %116 = vmatprep.subr.mxu0 0.0
    %117 = vmatpush1.msra.mxu0 0.0
    %118 = vmatprep.subr.mxu0 0.0
    %119 = vmatpush1.msra.mxu0 0.0
    %120 = vmatprep.subr.mxu0 0.0
    %121 = vmatpush1.msra.mxu0 0.0
    %122 = vmatprep.subr.mxu0 0.0
    %123 = vmatpush1.msra.mxu0 0.0
    %124 = vmatprep.subr.mxu0 0.0
    %125 = vmatpush1.msra.mxu0 0.0
    %126 = vmatprep.subr.mxu0 0.0
    %127 = vmatpush1.msra.mxu0 0.0
    %128 = vmatprep.subr.mxu0 0.0
    %129 = vmatpush1.msra.mxu0 0.0
    %130 = vmatprep.subr.mxu0 0.0
    %131 = vmatpush1.msra.mxu0 0.0
    %132 = vmatprep.subr.mxu0 0.0
    %133 = vmatpush1.msra.mxu0 0.0
    %134 = vmatprep.subr.mxu0 0.0
    %135 = vmatpush1.msra.mxu0 0.0
    %136 = vmatprep.subr.mxu0 0.0
    %137 = vmatpush1.msra.mxu0 0.0
    %138 = vmatprep.subr.mxu0 0.0
    %139 = vmatpush1.msra.mxu0 0.0
    %140 = vmatprep.subr.mxu0 0.0
    %141 = vmatpush1.msra.mxu0 0.0
    %142 = vmatprep.subr.mxu0 0.0
    %143 = vmatpush1.msra.mxu0 0.0
    %144 = vmatprep.subr.mxu0 0.0
    %145 = vmatpush1.msra.mxu0 0.0
    %146 = vmatprep.subr.mxu0 0.0
    %147 = vmatpush1.msra.mxu0 0.0
    %148 = vmatprep.subr.mxu0 0.0
    %149 = vmatpush1.msra.mxu0 0.0
    %150 = vmatprep.subr.mxu0 0.0
    %151 = vmatpush1.msra.mxu0 0.0
    %152 = vmatprep.subr.mxu0 0.0
    %153 = vmatpush1.msra.mxu0 0.0
    %154 = vmatprep.subr.mxu0 0.0
    %155 = vmatpush1.msra.mxu0 0.0
    %156 = vmatprep.subr.mxu0 0.0
    %157 = vmatpush1.msra.mxu0 0.0
    %158 = vmatprep.subr.mxu0 0.0
    %159 = vmatpush1.msra.mxu0 0.0
    %160 = vmatprep.subr.mxu0 0.0
    %161 = vmatpush1.msra.mxu0 0.0
    %162 = vmatprep.subr.mxu0 0.0
    %163 = vmatpush1.msra.mxu0 0.0
    %164 = vmatprep.subr.mxu0 0.0
    %165 = vmatpush1.msra.mxu0 0.0
    %166 = vmatprep.subr.mxu0 0.0
    %167 = vmatpush1.msra.mxu0 0.0
    %168 = vmatprep.mubr.f32.mxu0 0.0
    %169 = vmatmul.mubr.f32.gmra.mrb[0].mxu0 %v99
    %v170 = vpop.f32.mrb[0].mxu0
    %v171 = vadd.f32 0.0, %v170
    %v172 = vpop.f32.mrb[0].mxu0
    %173 = vmatprep.mubr.f32.mxu0 0.0
    %174 = vmatmul.mubr.f32.gmra.mrb[0].mxu0 %v102
    %v175 = vpop.f32.mrb[0].mxu0
    %v176 = vadd.f32 0.0, %v175
    %v177 = vpop.f32.mrb[0].mxu0
    %178 = vdwg.mxu0
    %v187 = vrot.slane %v60, 7
    %v188 = vsel %vm76, %v187, %v59
    %v189 = vrot.slane %v61, 6
    %v190 = vsel %vm79, %v189, %v188
    %v191 = vrot.slane %v62, 5
    %v192 = vsel %vm82, %v191, %v190
    %v193 = vrot.slane %v63, 4
    %v194 = vsel %vm85, %v193, %v192
    %v195 = vrot.slane %v64, 3
    %v196 = vsel %vm88, %v195, %v194
    %v197 = vrot.slane %v65, 2
    %v198 = vsel %vm91, %v197, %v196
    %v199 = vrot.slane %v66, 1
    %v200 = vsel %vm94, %v199, %v198
    %202 = vmatprep.subr.mxu0 0.0
    %203 = vmatpush1.msra.mxu0 %v200
    %204 = vmatprep.subr.mxu0 0.0
    %205 = vmatpush1.msra.mxu0 0.0
    %206 = vmatprep.subr.mxu0 0.0
    %207 = vmatpush1.msra.mxu0 0.0
    %208 = vmatprep.subr.mxu0 0.0
    %209 = vmatpush1.msra.mxu0 0.0
    %210 = vmatprep.subr.mxu0 0.0
    %211 = vmatpush1.msra.mxu0 0.0
    %212 = vmatprep.subr.mxu0 0.0
    %213 = vmatpush1.msra.mxu0 0.0
    %214 = vmatprep.subr.mxu0 0.0
    %215 = vmatpush1.msra.mxu0 0.0
    %216 = vmatprep.subr.mxu0 0.0
    %217 = vmatpush1.msra.mxu0 0.0
    %218 = vmatprep.subr.mxu0 0.0
    %219 = vmatpush1.msra.mxu0 0.0
    %220 = vmatprep.subr.mxu0 0.0
    %221 = vmatpush1.msra.mxu0 0.0
    %222 = vmatprep.subr.mxu0 0.0
    %223 = vmatpush1.msra.mxu0 0.0
    %224 = vmatprep.subr.mxu0 0.0
    %225 = vmatpush1.msra.mxu0 0.0
    %226 = vmatprep.subr.mxu0 0.0
    %227 = vmatpush1.msra.mxu0 0.0
    %228 = vmatprep.subr.mxu0 0.0
    %229 = vmatpush1.msra.mxu0 0.0
    %230 = vmatprep.subr.mxu0 0.0
    %231 = vmatpush1.msra.mxu0 0.0
    %232 = vmatprep.subr.mxu0 0.0
    %233 = vmatpush1.msra.mxu0 0.0
    %234 = vmatprep.subr.mxu0 0.0
    %235 = vmatpush1.msra.mxu0 0.0
    %236 = vmatprep.subr.mxu0 0.0
    %237 = vmatpush1.msra.mxu0 0.0
    %238 = vmatprep.subr.mxu0 0.0
    %239 = vmatpush1.msra.mxu0 0.0
    %240 = vmatprep.subr.mxu0 0.0
    %241 = vmatpush1.msra.mxu0 0.0
    %242 = vmatprep.subr.mxu0 0.0
    %243 = vmatpush1.msra.mxu0 0.0
    %244 = vmatprep.subr.mxu0 0.0
    %245 = vmatpush1.msra.mxu0 0.0
    %246 = vmatprep.subr.mxu0 0.0
    %247 = vmatpush1.msra.mxu0 0.0
    %248 = vmatprep.subr.mxu0 0.0
    %249 = vmatpush1.msra.mxu0 0.0
    %250 = vmatprep.subr.mxu0 0.0
    %251 = vmatpush1.msra.mxu0 0.0
    %252 = vmatprep.subr.mxu0 0.0
    %253 = vmatpush1.msra.mxu0 0.0
    %254 = vmatprep.subr.mxu0 0.0
    %255 = vmatpush1.msra.mxu0 0.0
    %256 = vmatprep.subr.mxu0 0.0
    %257 = vmatpush1.msra.mxu0 0.0
    %258 = vmatprep.subr.mxu0 0.0
    %259 = vmatpush1.msra.mxu0 0.0
    %260 = vmatprep.subr.mxu0 0.0
    %261 = vmatpush1.msra.mxu0 0.0
    %262 = vmatprep.subr.mxu0 0.0
    %263 = vmatpush1.msra.mxu0 0.0
    %264 = vmatprep.subr.mxu0 0.0
    %265 = vmatpush1.msra.mxu0 0.0
    %266 = vmatprep.mubr.f32.mxu0 0.0
    %267 = vmatmul.mubr.f32.gmra.mrb[0].mxu0 %v99
    %v268 = vpop.f32.mrb[0].mxu0
    %v269 = vadd.f32 0.0, %v268
    %v270 = vpop.f32.mrb[0].mxu0
    %271 = vmatprep.mubr.f32.mxu0 0.0
    %272 = vmatmul.mubr.f32.gmra.mrb[0].mxu0 %v102
    %v273 = vpop.f32.mrb[0].mxu0
    %v274 = vadd.f32 0.0, %v273
    %v275 = vpop.f32.mrb[0].mxu0
    %276 = vdwg.mxu0
    %vm277 = vcmask 261120
    %v278 = vsel %vm277, %v171, -inf
    %279 = vmax.xlane.f32.xlu0 %v278
    %v280 = vpop.xlane.xlu0 %279
    %v281 = vsel %vm277, %v176, -inf
    %282 = vmax.xlane.f32.xlu0 %v281
    %v283 = vpop.xlane.xlu0 %282
    %v284 = vsel %vm277, %v269, -inf
    %285 = vmax.xlane.f32.xlu0 %v284
    %v286 = vpop.xlane.xlu0 %285
    %v287 = vsel %vm277, %v274, -inf
    %288 = vmax.xlane.f32.xlu0 %v287
    %v289 = vpop.xlane.xlu0 %288
    %v290 = vsub.f32 %v171, %v280
    %v291 = vsub.f32 %v176, %v283
    %v292 = vsub.f32 %v269, %v286
    %v293 = vsub.f32 %v274, %v289
    %v294 = vmul.f32 %v290, 1.442695
    %v295 = vpow.pop %v294
    %v296 = vmul.f32 %v291, 1.442695
    %v297 = vpow.pop %v296
    %v298 = vmul.f32 %v292, 1.442695
    %v299 = vpow.pop %v298
    %v300 = vmul.f32 %v293, 1.442695
    %v301 = vpow.pop %v300
    %v302 = vsel %vm277, %v295, 0.0
    %303 = vadd.xlane.f32.xlu0 %v302
    %v304 = vpop.xlane.xlu0 %303
    %v305 = vsel %vm277, %v297, 0.0
    %306 = vadd.xlane.f32.xlu0 %v305
    %v307 = vpop.xlane.xlu0 %306
    %v308 = vsel %vm277, %v299, 0.0
    %309 = vadd.xlane.f32.xlu0 %v308
    %v310 = vpop.xlane.xlu0 %309
    %v311 = vsel %vm277, %v301, 0.0
    %312 = vadd.xlane.f32.xlu0 %v311
    %v313 = vpop.xlane.xlu0 %312
    %v314 = vrcp.pop %v304
    %v315 = vrcp.pop %v307
    %v316 = vrcp.pop %v310
    %v317 = vrcp.pop %v313
    %v318 = vmul.f32 %v295, %v314
    %v319 = vmul.f32 %v297, %v315
    %v320 = vmul.f32 %v299, %v316
    %v321 = vmul.f32 %v301, %v317
    %v322 = vsel %vm277, %v318, 0.0
    %v323 = vsel %vm277, %v319, 0.0
    %v324 = vadd.f32 %v322, %v323
    %v325 = vrot.slane %v324, 4
    %v326 = vadd.f32 %v324, %v325
    %v327 = vrot.slane %v326, 2
    %v328 = vadd.f32 %v326, %v327
    %v329 = vrot.slane %v328, 1
    %v330 = vadd.f32 %v328, %v329
    %v331 = vsel %vm277, %v320, 0.0
    %v332 = vsel %vm277, %v321, 0.0
    %v333 = vadd.f32 %v331, %v332
    %v334 = vrot.slane %v333, 4
    %v335 = vadd.f32 %v333, %v334
    %v336 = vrot.slane %v335, 2
    %v337 = vadd.f32 %v335, %v336
    %v338 = vrot.slane %v337, 1
    %v339 = vadd.f32 %v337, %v338
    %v340 = vadd.f32 %v330, 1e-09
    %v341 = vadd.f32 %v339, 1e-09
    %v342 = vrcp.pop %v340
    %v343 = vrcp.pop %v341
    %v344 = vmul.f32 %v318, %v342
    %v345 = vmul.f32 %v319, %v342
    %v346 = vmul.f32 %v320, %v343
    %v347 = vmul.f32 %v321, %v343
    %vm348 = vcmask 130048
    %v350 = vsel %vm348, %v42, 0
    %352 = vmatprep.subr.mxu0 0.0
    %353 = vmatpush1.msra.mxu0 %v344
    %354 = vmatprep.subr.mxu0 0.0
    %355 = vmatpush1.msra.mxu0 %v345
    %356 = vmatprep.subr.mxu0 0.0
    %357 = vmatpush1.msra.mxu0 0.0
    %358 = vmatprep.subr.mxu0 0.0
    %359 = vmatpush1.msra.mxu0 0.0
    %360 = vmatprep.subr.mxu0 0.0
    %361 = vmatpush1.msra.mxu0 0.0
    %362 = vmatprep.subr.mxu0 0.0
    %363 = vmatpush1.msra.mxu0 0.0
    %364 = vmatprep.subr.mxu0 0.0
    %365 = vmatpush1.msra.mxu0 0.0
    %366 = vmatprep.subr.mxu0 0.0
    %367 = vmatpush1.msra.mxu0 0.0
    %368 = vmatprep.subr.mxu0 0.0
    %369 = vmatpush1.msra.mxu0 0.0
    %370 = vmatprep.subr.mxu0 0.0
    %371 = vmatpush1.msra.mxu0 0.0
    %372 = vmatprep.subr.mxu0 0.0
    %373 = vmatpush1.msra.mxu0 0.0
    %374 = vmatprep.subr.mxu0 0.0
    %375 = vmatpush1.msra.mxu0 0.0
    %376 = vmatprep.subr.mxu0 0.0
    %377 = vmatpush1.msra.mxu0 0.0
    %378 = vmatprep.subr.mxu0 0.0
    %379 = vmatpush1.msra.mxu0 0.0
    %380 = vmatprep.subr.mxu0 0.0
    %381 = vmatpush1.msra.mxu0 0.0
    %382 = vmatprep.subr.mxu0 0.0
    %383 = vmatpush1.msra.mxu0 0.0
    %384 = vmatprep.subr.mxu0 0.0
    %385 = vmatpush1.msra.mxu0 0.0
    %386 = vmatprep.subr.mxu0 0.0
    %387 = vmatpush1.msra.mxu0 0.0
    %388 = vmatprep.subr.mxu0 0.0
    %389 = vmatpush1.msra.mxu0 0.0
    %390 = vmatprep.subr.mxu0 0.0
    %391 = vmatpush1.msra.mxu0 0.0
    %392 = vmatprep.subr.mxu0 0.0
    %393 = vmatpush1.msra.mxu0 0.0
    %394 = vmatprep.subr.mxu0 0.0
    %395 = vmatpush1.msra.mxu0 0.0
    %396 = vmatprep.subr.mxu0 0.0
    %397 = vmatpush1.msra.mxu0 0.0
    %398 = vmatprep.subr.mxu0 0.0
    %399 = vmatpush1.msra.mxu0 0.0
    %400 = vmatprep.subr.mxu0 0.0
    %401 = vmatpush1.msra.mxu0 0.0
    %402 = vmatprep.subr.mxu0 0.0
    %403 = vmatpush1.msra.mxu0 0.0
    %404 = vmatprep.subr.mxu0 0.0
    %405 = vmatpush1.msra.mxu0 0.0
    %406 = vmatprep.subr.mxu0 0.0
    %407 = vmatpush1.msra.mxu0 0.0
    %408 = vmatprep.subr.mxu0 0.0
    %409 = vmatpush1.msra.mxu0 0.0
    %410 = vmatprep.subr.mxu0 0.0
    %411 = vmatpush1.msra.mxu0 0.0
    %412 = vmatprep.subr.mxu0 0.0
    %413 = vmatpush1.msra.mxu0 0.0
    %414 = vmatprep.subr.mxu0 0.0
    %415 = vmatpush1.msra.mxu0 0.0
    %416 = vmatprep.mubr.f32.mxu0 0.0
    %417 = vmatmul.mubr.f32.gmra.mrb[0].mxu0 %v350
    %v418 = vpop.f32.mrb[0].mxu0
    %v419 = vadd.f32 0.0, %v418
    %v420 = vpop.f32.mrb[0].mxu0
    %421 = vdwg.mxu0
    %422 = vmatprep.subr.mxu0 0.0
    %423 = vmatpush1.msra.mxu0 %v346
    %424 = vmatprep.subr.mxu0 0.0
    %425 = vmatpush1.msra.mxu0 %v347
    %426 = vmatprep.subr.mxu0 0.0
    %427 = vmatpush1.msra.mxu0 0.0
    %428 = vmatprep.subr.mxu0 0.0
    %429 = vmatpush1.msra.mxu0 0.0
    %430 = vmatprep.subr.mxu0 0.0
    %431 = vmatpush1.msra.mxu0 0.0
    %432 = vmatprep.subr.mxu0 0.0
    %433 = vmatpush1.msra.mxu0 0.0
    %434 = vmatprep.subr.mxu0 0.0
    %435 = vmatpush1.msra.mxu0 0.0
    %436 = vmatprep.subr.mxu0 0.0
    %437 = vmatpush1.msra.mxu0 0.0
    %438 = vmatprep.subr.mxu0 0.0
    %439 = vmatpush1.msra.mxu0 0.0
    %440 = vmatprep.subr.mxu0 0.0
    %441 = vmatpush1.msra.mxu0 0.0
    %442 = vmatprep.subr.mxu0 0.0
    %443 = vmatpush1.msra.mxu0 0.0
    %444 = vmatprep.subr.mxu0 0.0
    %445 = vmatpush1.msra.mxu0 0.0
    %446 = vmatprep.subr.mxu0 0.0
    %447 = vmatpush1.msra.mxu0 0.0
    %448 = vmatprep.subr.mxu0 0.0
    %449 = vmatpush1.msra.mxu0 0.0
    %450 = vmatprep.subr.mxu0 0.0
    %451 = vmatpush1.msra.mxu0 0.0
    %452 = vmatprep.subr.mxu0 0.0
    %453 = vmatpush1.msra.mxu0 0.0
    %454 = vmatprep.subr.mxu0 0.0
    %455 = vmatpush1.msra.mxu0 0.0
    %456 = vmatprep.subr.mxu0 0.0
    %457 = vmatpush1.msra.mxu0 0.0
    %458 = vmatprep.subr.mxu0 0.0
    %459 = vmatpush1.msra.mxu0 0.0
    %460 = vmatprep.subr.mxu0 0.0
    %461 = vmatpush1.msra.mxu0 0.0
    %462 = vmatprep.subr.mxu0 0.0
    %463 = vmatpush1.msra.mxu0 0.0
    %464 = vmatprep.subr.mxu0 0.0
    %465 = vmatpush1.msra.mxu0 0.0
    %466 = vmatprep.subr.mxu0 0.0
    %467 = vmatpush1.msra.mxu0 0.0
    %468 = vmatprep.subr.mxu0 0.0
    %469 = vmatpush1.msra.mxu0 0.0
    %470 = vmatprep.subr.mxu0 0.0
    %471 = vmatpush1.msra.mxu0 0.0
    %472 = vmatprep.subr.mxu0 0.0
    %473 = vmatpush1.msra.mxu0 0.0
    %474 = vmatprep.subr.mxu0 0.0
    %475 = vmatpush1.msra.mxu0 0.0
    %476 = vmatprep.subr.mxu0 0.0
    %477 = vmatpush1.msra.mxu0 0.0
    %478 = vmatprep.subr.mxu0 0.0
    %479 = vmatpush1.msra.mxu0 0.0
    %480 = vmatprep.subr.mxu0 0.0
    %481 = vmatpush1.msra.mxu0 0.0
    %482 = vmatprep.subr.mxu0 0.0
    %483 = vmatpush1.msra.mxu0 0.0
    %484 = vmatprep.subr.mxu0 0.0
    %485 = vmatpush1.msra.mxu0 0.0
    %486 = vmatprep.mubr.f32.mxu0 0.0
    %487 = vmatmul.mubr.f32.gmra.mrb[0].mxu0 %v350
    %v488 = vpop.f32.mrb[0].mxu0
    %v489 = vadd.f32 0.0, %v488
    %v490 = vpop.f32.mrb[0].mxu0
    %491 = vdwg.mxu0
    %v494 = vrot.slane %v419, 1
    %v495 = vrot.slane %v419, 2
    %v496 = vrot.slane %v419, 3
    %v497 = vrot.slane %v419, 4
    %v498 = vrot.slane %v419, 5
    %v499 = vrot.slane %v419, 6
    %v500 = vrot.slane %v419, 7
    %v501 = vrot.slane %v489, 1
    %v502 = vrot.slane %v489, 2
    %v503 = vrot.slane %v489, 3
    %v504 = vrot.slane %v489, 4
    %v505 = vrot.slane %v489, 5
    %v506 = vrot.slane %v489, 6
    %v507 = vrot.slane %v489, 7
    %v524 = vadd.f32 %v51, %v419
    %v525 = vadd.f32 %v52, %v494
    %v526 = vadd.f32 %v53, %v495
    %v527 = vadd.f32 %v54, %v496
    %v528 = vadd.f32 %v55, %v497
    %v529 = vadd.f32 %v56, %v498
    %v530 = vadd.f32 %v57, %v499
    %v531 = vadd.f32 %v58, %v500
    %v532 = vadd.f32 %v59, %v489
    %v533 = vadd.f32 %v60, %v501
    %v534 = vadd.f32 %v61, %v502
    %v535 = vadd.f32 %v62, %v503
    %v536 = vadd.f32 %v63, %v504
    %v537 = vadd.f32 %v64, %v505
    %v538 = vadd.f32 %v65, %v506
    %v539 = vadd.f32 %v66, %v507
    %v556 = vrot.slane %v525, 7
    %v557 = vsel %vm76, %v556, %v524
    %v558 = vrot.slane %v526, 6
    %v559 = vsel %vm79, %v558, %v557
    %v560 = vrot.slane %v527, 5
    %v561 = vsel %vm82, %v560, %v559
    %v562 = vrot.slane %v528, 4
    %v563 = vsel %vm85, %v562, %v561
    %v564 = vrot.slane %v529, 3
    %v565 = vsel %vm88, %v564, %v563
    %v566 = vrot.slane %v530, 2
    %v567 = vsel %vm91, %v566, %v565
    %v568 = vrot.slane %v531, 1
    %v569 = vsel %vm94, %v568, %v567
    %v570 = vrot.slane %v533, 7
    %v571 = vsel %vm76, %v570, %v532
    %v572 = vrot.slane %v534, 6
    %v573 = vsel %vm79, %v572, %v571
    %v574 = vrot.slane %v535, 5
    %v575 = vsel %vm82, %v574, %v573
    %v576 = vrot.slane %v536, 4
    %v577 = vsel %vm85, %v576, %v575
    %v578 = vrot.slane %v537, 3
    %v579 = vsel %vm88, %v578, %v577
    %v580 = vrot.slane %v538, 2
    %v581 = vsel %vm91, %v580, %v579
    %v582 = vrot.slane %v539, 1
    %v583 = vsel %vm94, %v582, %v581
    %v586 = vsel %vm277, %v569, 0.0
    %587 = vadd.xlane.f32.xlu0 %v586
    %v588 = vpop.xlane.xlu0 %587
    %v589 = vsel %vm277, %v583, 0.0
    %590 = vadd.xlane.f32.xlu0 %v589
    %v591 = vpop.xlane.xlu0 %590
    %v592 = vrcp.pop 32.0
    %v593 = vmul.f32 %v588, %v592
    %v594 = vmul.f32 %v591, %v592
    %v597 = vrot.slane %v593, 1
    %v598 = vrot.slane %v593, 2
    %v599 = vrot.slane %v593, 3
    %v600 = vrot.slane %v593, 4
    %v601 = vrot.slane %v593, 5
    %v602 = vrot.slane %v593, 6
    %v603 = vrot.slane %v593, 7
    %v604 = vrot.slane %v594, 1
    %v605 = vrot.slane %v594, 2
    %v606 = vrot.slane %v594, 3
    %v607 = vrot.slane %v594, 4
    %v608 = vrot.slane %v594, 5
    %v609 = vrot.slane %v594, 6
    %v610 = vrot.slane %v594, 7
    %v627 = vsub.f32 %v524, %v593
    %v628 = vsub.f32 %v525, %v597
    %v629 = vsub.f32 %v526, %v598
    %v630 = vsub.f32 %v527, %v599
    %v631 = vsub.f32 %v528, %v600
    %v632 = vsub.f32 %v529, %v601
    %v633 = vsub.f32 %v530, %v602
    %v634 = vsub.f32 %v531, %v603
    %v635 = vsub.f32 %v532, %v594
    %v636 = vsub.f32 %v533, %v604
    %v637 = vsub.f32 %v534, %v605
    %v638 = vsub.f32 %v535, %v606
    %v639 = vsub.f32 %v536, %v607
    %v640 = vsub.f32 %v537, %v608
    %v641 = vsub.f32 %v538, %v609
    %v642 = vsub.f32 %v539, %v610
    %v643 = vmul.f32 %v627, %v627
    %v644 = vmul.f32 %v628, %v628
    %v645 = vmul.f32 %v629, %v629
    %v646 = vmul.f32 %v630, %v630
    %v647 = vmul.f32 %v631, %v631
    %v648 = vmul.f32 %v632, %v632
    %v649 = vmul.f32 %v633, %v633
    %v650 = vmul.f32 %v634, %v634
    %v651 = vmul.f32 %v635, %v635
    %v652 = vmul.f32 %v636, %v636
    %v653 = vmul.f32 %v637, %v637
    %v654 = vmul.f32 %v638, %v638
    %v655 = vmul.f32 %v639, %v639
    %v656 = vmul.f32 %v640, %v640
    %v657 = vmul.f32 %v641, %v641
    %v658 = vmul.f32 %v642, %v642
    %v675 = vrot.slane %v644, 7
    %v676 = vsel %vm76, %v675, %v643
    %v677 = vrot.slane %v645, 6
    %v678 = vsel %vm79, %v677, %v676
    %v679 = vrot.slane %v646, 5
    %v680 = vsel %vm82, %v679, %v678
    %v681 = vrot.slane %v647, 4
    %v682 = vsel %vm85, %v681, %v680
    %v683 = vrot.slane %v648, 3
    %v684 = vsel %vm88, %v683, %v682
    %v685 = vrot.slane %v649, 2
    %v686 = vsel %vm91, %v685, %v684
    %v687 = vrot.slane %v650, 1
    %v688 = vsel %vm94, %v687, %v686
    %v689 = vrot.slane %v652, 7
    %v690 = vsel %vm76, %v689, %v651
    %v691 = vrot.slane %v653, 6
    %v692 = vsel %vm79, %v691, %v690
    %v693 = vrot.slane %v654, 5
    %v694 = vsel %vm82, %v693, %v692
    %v695 = vrot.slane %v655, 4
    %v696 = vsel %vm85, %v695, %v694
    %v697 = vrot.slane %v656, 3
    %v698 = vsel %vm88, %v697, %v696
    %v699 = vrot.slane %v657, 2
    %v700 = vsel %vm91, %v699, %v698
    %v701 = vrot.slane %v658, 1
    %v702 = vsel %vm94, %v701, %v700
    %v705 = vsel %vm277, %v688, 0.0
    %706 = vadd.xlane.f32.xlu0 %v705
    %v707 = vpop.xlane.xlu0 %706
    %v708 = vsel %vm277, %v702, 0.0
    %709 = vadd.xlane.f32.xlu0 %v708
    %v710 = vpop.xlane.xlu0 %709
    %v711 = vmul.f32 %v707, %v592
    %v712 = vmul.f32 %v710, %v592
    %v713 = vadd.f32 %v711, 1e-05
    %v714 = vadd.f32 %v712, 1e-05
    %v715 = vrsqrt.pop %v713
    %v716 = vrsqrt.pop %v714
    %v719 = vrot.slane %v715, 1
    %v720 = vrot.slane %v715, 2
    %v721 = vrot.slane %v715, 3
    %v722 = vrot.slane %v715, 4
    %v723 = vrot.slane %v715, 5
    %v724 = vrot.slane %v715, 6
    %v725 = vrot.slane %v715, 7
    %v726 = vrot.slane %v716, 1
    %v727 = vrot.slane %v716, 2
    %v728 = vrot.slane %v716, 3
    %v729 = vrot.slane %v716, 4
    %v730 = vrot.slane %v716, 5
    %v731 = vrot.slane %v716, 6
    %v732 = vrot.slane %v716, 7
    %v749 = vmul.f32 %v627, %v715
    %v750 = vmul.f32 %v628, %v719
    %v751 = vmul.f32 %v629, %v720
    %v752 = vmul.f32 %v630, %v721
    %v753 = vmul.f32 %v631, %v722
    %v754 = vmul.f32 %v632, %v723
    %v755 = vmul.f32 %v633, %v724
    %v756 = vmul.f32 %v634, %v725
    %v757 = vmul.f32 %v635, %v716
    %v758 = vmul.f32 %v636, %v726
    %v759 = vmul.f32 %v637, %v727
    %v760 = vmul.f32 %v638, %v728
    %v761 = vmul.f32 %v639, %v729
    %v762 = vmul.f32 %v640, %v730
    %v763 = vmul.f32 %v641, %v731
    %v764 = vmul.f32 %v642, %v732
    %v765 = vmul.f32 %v749, %v46
    %v766 = vmul.f32 %v750, %v46
    %v767 = vmul.f32 %v751, %v46
    %v768 = vmul.f32 %v752, %v46
    %v769 = vmul.f32 %v753, %v46
    %v770 = vmul.f32 %v754, %v46
    %v771 = vmul.f32 %v755, %v46
    %v772 = vmul.f32 %v756, %v46
    %v773 = vmul.f32 %v757, %v46
    %v774 = vmul.f32 %v758, %v46
    %v775 = vmul.f32 %v759, %v46
    %v776 = vmul.f32 %v760, %v46
    %v777 = vmul.f32 %v761, %v46
    %v778 = vmul.f32 %v762, %v46
    %v779 = vmul.f32 %v763, %v46
    %v780 = vmul.f32 %v764, %v46
    %v781 = vadd.f32 %v765, %v50
    %v782 = vadd.f32 %v766, %v50
    %v783 = vadd.f32 %v767, %v50
    %v784 = vadd.f32 %v768, %v50
    %v785 = vadd.f32 %v769, %v50
    %v786 = vadd.f32 %v770, %v50
    %v787 = vadd.f32 %v771, %v50
    %v788 = vadd.f32 %v772, %v50
    %v789 = vadd.f32 %v773, %v50
    %v790 = vadd.f32 %v774, %v50
    %v791 = vadd.f32 %v775, %v50
    %v792 = vadd.f32 %v776, %v50
    %v793 = vadd.f32 %v777, %v50
    %v794 = vadd.f32 %v778, %v50
    %v795 = vadd.f32 %v779, %v50
    %v796 = vadd.f32 %v780, %v50
    %vm797 = vcmask 253952
    %798 = vst.msk [vmem:[#allocation2] sm:$0x1] %vm797, %v781
    %799 = vst.msk [vmem:[#allocation2 + $0x4] sm:$0x1] %vm797, %v782
    %800 = vst.msk [vmem:[#allocation2 + $0x8] sm:$0x1] %vm797, %v783
    %801 = vst.msk [vmem:[#allocation2 + $0xc] sm:$0x1] %vm797, %v784
    %802 = vst.msk [vmem:[#allocation2 + $0x10] sm:$0x1] %vm797, %v785
    %803 = vst.msk [vmem:[#allocation2 + $0x14] sm:$0x1] %vm797, %v786
    %804 = vst.msk [vmem:[#allocation2 + $0x18] sm:$0x1] %vm797, %v787
    %805 = vst.msk [vmem:[#allocation2 + $0x1c] sm:$0x1] %vm797, %v788
    %806 = vst.msk [vmem:[#allocation2 + $0x20] sm:$0x1] %vm797, %v789
    %807 = vst.msk [vmem:[#allocation2 + $0x24] sm:$0x1] %vm797, %v790
    %808 = vst.msk [vmem:[#allocation2 + $0x28] sm:$0x1] %vm797, %v791
    %809 = vst.msk [vmem:[#allocation2 + $0x2c] sm:$0x1] %vm797, %v792
    %810 = vst.msk [vmem:[#allocation2 + $0x30] sm:$0x1] %vm797, %v793
    %811 = vst.msk [vmem:[#allocation2 + $0x34] sm:$0x1] %vm797, %v794
    %812 = vst.msk [vmem:[#allocation2 + $0x38] sm:$0x1] %vm797, %v795
    %813 = vst.msk [vmem:[#allocation2 + $0x3c] sm:$0x1] %vm797, %v796
    %v814 = vld [vmem:[%s0 + $0x1] sm:$0x1]
    %v815 = vld [vmem:[%s0 + $0x5] sm:$0x1]
    %v816 = vld [vmem:[%s0 + $0x9] sm:$0x1]
    %v817 = vld [vmem:[%s0 + $0xd] sm:$0x1]
    %v818 = vld [vmem:[%s0 + $0x11] sm:$0x1]
    %v819 = vld [vmem:[%s0 + $0x15] sm:$0x1]
    %v820 = vld [vmem:[%s0 + $0x19] sm:$0x1]
    %v821 = vld [vmem:[%s0 + $0x1d] sm:$0x1]
    %v822 = vld [vmem:[%s0 + $0x21] sm:$0x1]
    %v823 = vld [vmem:[%s0 + $0x25] sm:$0x1]
    %v824 = vld [vmem:[%s0 + $0x29] sm:$0x1]
    %v825 = vld [vmem:[%s0 + $0x2d] sm:$0x1]
    %v826 = vld [vmem:[%s0 + $0x31] sm:$0x1]
    %v827 = vld [vmem:[%s0 + $0x35] sm:$0x1]
    %v828 = vld [vmem:[%s0 + $0x39] sm:$0x1]
    %v829 = vld [vmem:[%s0 + $0x3d] sm:$0x1]
    %v838 = vrot.slane %v815, 7
    %v839 = vsel %vm76, %v838, %v814
    %v840 = vrot.slane %v816, 6
    %v841 = vsel %vm79, %v840, %v839
    %v842 = vrot.slane %v817, 5
    %v843 = vsel %vm82, %v842, %v841
    %v844 = vrot.slane %v818, 4
    %v845 = vsel %vm85, %v844, %v843
    %v846 = vrot.slane %v819, 3
    %v847 = vsel %vm88, %v846, %v845
    %v848 = vrot.slane %v820, 2
    %v849 = vsel %vm91, %v848, %v847
    %v850 = vrot.slane %v821, 1
    %v851 = vsel %vm94, %v850, %v849
    %853 = vmatprep.subr.mxu0 0.0
    %854 = vmatpush1.msra.mxu0 %v851
    %855 = vmatprep.subr.mxu0 0.0
    %856 = vmatpush1.msra.mxu0 0.0
    %857 = vmatprep.subr.mxu0 0.0
    %858 = vmatpush1.msra.mxu0 0.0
    %859 = vmatprep.subr.mxu0 0.0
    %860 = vmatpush1.msra.mxu0 0.0
    %861 = vmatprep.subr.mxu0 0.0
    %862 = vmatpush1.msra.mxu0 0.0
    %863 = vmatprep.subr.mxu0 0.0
    %864 = vmatpush1.msra.mxu0 0.0
    %865 = vmatprep.subr.mxu0 0.0
    %866 = vmatpush1.msra.mxu0 0.0
    %867 = vmatprep.subr.mxu0 0.0
    %868 = vmatpush1.msra.mxu0 0.0
    %869 = vmatprep.subr.mxu0 0.0
    %870 = vmatpush1.msra.mxu0 0.0
    %871 = vmatprep.subr.mxu0 0.0
    %872 = vmatpush1.msra.mxu0 0.0
    %873 = vmatprep.subr.mxu0 0.0
    %874 = vmatpush1.msra.mxu0 0.0
    %875 = vmatprep.subr.mxu0 0.0
    %876 = vmatpush1.msra.mxu0 0.0
    %877 = vmatprep.subr.mxu0 0.0
    %878 = vmatpush1.msra.mxu0 0.0
    %879 = vmatprep.subr.mxu0 0.0
    %880 = vmatpush1.msra.mxu0 0.0
    %881 = vmatprep.subr.mxu0 0.0
    %882 = vmatpush1.msra.mxu0 0.0
    %883 = vmatprep.subr.mxu0 0.0
    %884 = vmatpush1.msra.mxu0 0.0
    %885 = vmatprep.subr.mxu0 0.0
    %886 = vmatpush1.msra.mxu0 0.0
    %887 = vmatprep.subr.mxu0 0.0
    %888 = vmatpush1.msra.mxu0 0.0
    %889 = vmatprep.subr.mxu0 0.0
    %890 = vmatpush1.msra.mxu0 0.0
    %891 = vmatprep.subr.mxu0 0.0
    %892 = vmatpush1.msra.mxu0 0.0
    %893 = vmatprep.subr.mxu0 0.0
    %894 = vmatpush1.msra.mxu0 0.0
    %895 = vmatprep.subr.mxu0 0.0
    %896 = vmatpush1.msra.mxu0 0.0
    %897 = vmatprep.subr.mxu0 0.0
    %898 = vmatpush1.msra.mxu0 0.0
    %899 = vmatprep.subr.mxu0 0.0
    %900 = vmatpush1.msra.mxu0 0.0
    %901 = vmatprep.subr.mxu0 0.0
    %902 = vmatpush1.msra.mxu0 0.0
    %903 = vmatprep.subr.mxu0 0.0
    %904 = vmatpush1.msra.mxu0 0.0
    %905 = vmatprep.subr.mxu0 0.0
    %906 = vmatpush1.msra.mxu0 0.0
    %907 = vmatprep.subr.mxu0 0.0
    %908 = vmatpush1.msra.mxu0 0.0
    %909 = vmatprep.subr.mxu0 0.0
    %910 = vmatpush1.msra.mxu0 0.0
    %911 = vmatprep.subr.mxu0 0.0
    %912 = vmatpush1.msra.mxu0 0.0
    %913 = vmatprep.subr.mxu0 0.0
    %914 = vmatpush1.msra.mxu0 0.0
    %915 = vmatprep.subr.mxu0 0.0
    %916 = vmatpush1.msra.mxu0 0.0
    %917 = vmatprep.mubr.f32.mxu0 0.0
    %918 = vmatmul.mubr.f32.gmra.mrb[0].mxu0 %v99
    %v919 = vpop.f32.mrb[0].mxu0
    %v920 = vadd.f32 0.0, %v919
    %v921 = vpop.f32.mrb[0].mxu0
    %922 = vmatprep.mubr.f32.mxu0 0.0
    %923 = vmatmul.mubr.f32.gmra.mrb[0].mxu0 %v102
    %v924 = vpop.f32.mrb[0].mxu0
    %v925 = vadd.f32 0.0, %v924
    %v926 = vpop.f32.mrb[0].mxu0
    %927 = vdwg.mxu0
    %v936 = vrot.slane %v823, 7
    %v937 = vsel %vm76, %v936, %v822
    %v938 = vrot.slane %v824, 6
    %v939 = vsel %vm79, %v938, %v937
    %v940 = vrot.slane %v825, 5
    %v941 = vsel %vm82, %v940, %v939
    %v942 = vrot.slane %v826, 4
    %v943 = vsel %vm85, %v942, %v941
    %v944 = vrot.slane %v827, 3
    %v945 = vsel %vm88, %v944, %v943
    %v946 = vrot.slane %v828, 2
    %v947 = vsel %vm91, %v946, %v945
    %v948 = vrot.slane %v829, 1
    %v949 = vsel %vm94, %v948, %v947
    %951 = vmatprep.subr.mxu0 0.0
    %952 = vmatpush1.msra.mxu0 %v949
    %953 = vmatprep.subr.mxu0 0.0
    %954 = vmatpush1.msra.mxu0 0.0
    %955 = vmatprep.subr.mxu0 0.0
    %956 = vmatpush1.msra.mxu0 0.0
    %957 = vmatprep.subr.mxu0 0.0
    %958 = vmatpush1.msra.mxu0 0.0
    %959 = vmatprep.subr.mxu0 0.0
    %960 = vmatpush1.msra.mxu0 0.0
    %961 = vmatprep.subr.mxu0 0.0
    %962 = vmatpush1.msra.mxu0 0.0
    %963 = vmatprep.subr.mxu0 0.0
    %964 = vmatpush1.msra.mxu0 0.0
    %965 = vmatprep.subr.mxu0 0.0
    %966 = vmatpush1.msra.mxu0 0.0
    %967 = vmatprep.subr.mxu0 0.0
    %968 = vmatpush1.msra.mxu0 0.0
    %969 = vmatprep.subr.mxu0 0.0
    %970 = vmatpush1.msra.mxu0 0.0
    %971 = vmatprep.subr.mxu0 0.0
    %972 = vmatpush1.msra.mxu0 0.0
    %973 = vmatprep.subr.mxu0 0.0
    %974 = vmatpush1.msra.mxu0 0.0
    %975 = vmatprep.subr.mxu0 0.0
    %976 = vmatpush1.msra.mxu0 0.0
    %977 = vmatprep.subr.mxu0 0.0
    %978 = vmatpush1.msra.mxu0 0.0
    %979 = vmatprep.subr.mxu0 0.0
    %980 = vmatpush1.msra.mxu0 0.0
    %981 = vmatprep.subr.mxu0 0.0
    %982 = vmatpush1.msra.mxu0 0.0
    %983 = vmatprep.subr.mxu0 0.0
    %984 = vmatpush1.msra.mxu0 0.0
    %985 = vmatprep.subr.mxu0 0.0
    %986 = vmatpush1.msra.mxu0 0.0
    %987 = vmatprep.subr.mxu0 0.0
    %988 = vmatpush1.msra.mxu0 0.0
    %989 = vmatprep.subr.mxu0 0.0
    %990 = vmatpush1.msra.mxu0 0.0
    %991 = vmatprep.subr.mxu0 0.0
    %992 = vmatpush1.msra.mxu0 0.0
    %993 = vmatprep.subr.mxu0 0.0
    %994 = vmatpush1.msra.mxu0 0.0
    %995 = vmatprep.subr.mxu0 0.0
    %996 = vmatpush1.msra.mxu0 0.0
    %997 = vmatprep.subr.mxu0 0.0
    %998 = vmatpush1.msra.mxu0 0.0
    %999 = vmatprep.subr.mxu0 0.0
    %1000 = vmatpush1.msra.mxu0 0.0
    %1001 = vmatprep.subr.mxu0 0.0
    %1002 = vmatpush1.msra.mxu0 0.0
    %1003 = vmatprep.subr.mxu0 0.0
    %1004 = vmatpush1.msra.mxu0 0.0
    %1005 = vmatprep.subr.mxu0 0.0
    %1006 = vmatpush1.msra.mxu0 0.0
    %1007 = vmatprep.subr.mxu0 0.0
    %1008 = vmatpush1.msra.mxu0 0.0
    %1009 = vmatprep.subr.mxu0 0.0
    %1010 = vmatpush1.msra.mxu0 0.0
    %1011 = vmatprep.subr.mxu0 0.0
    %1012 = vmatpush1.msra.mxu0 0.0
    %1013 = vmatprep.subr.mxu0 0.0
    %1014 = vmatpush1.msra.mxu0 0.0
    %1015 = vmatprep.mubr.f32.mxu0 0.0
    %1016 = vmatmul.mubr.f32.gmra.mrb[0].mxu0 %v99
    %v1017 = vpop.f32.mrb[0].mxu0
    %v1018 = vadd.f32 0.0, %v1017
    %v1019 = vpop.f32.mrb[0].mxu0
    %1020 = vmatprep.mubr.f32.mxu0 0.0
    %1021 = vmatmul.mubr.f32.gmra.mrb[0].mxu0 %v102
    %v1022 = vpop.f32.mrb[0].mxu0
    %v1023 = vadd.f32 0.0, %v1022
    %v1024 = vpop.f32.mrb[0].mxu0
    %1025 = vdwg.mxu0
    %v1026 = vsel %vm277, %v920, -inf
    %1027 = vmax.xlane.f32.xlu0 %v1026
    %v1028 = vpop.xlane.xlu0 %1027
    %v1029 = vsel %vm277, %v925, -inf
    %1030 = vmax.xlane.f32.xlu0 %v1029
    %v1031 = vpop.xlane.xlu0 %1030
    %v1032 = vsel %vm277, %v1018, -inf
    %1033 = vmax.xlane.f32.xlu0 %v1032
    %v1034 = vpop.xlane.xlu0 %1033
    %v1035 = vsel %vm277, %v1023, -inf
    %1036 = vmax.xlane.f32.xlu0 %v1035
    %v1037 = vpop.xlane.xlu0 %1036
    %v1038 = vsub.f32 %v920, %v1028
    %v1039 = vsub.f32 %v925, %v1031
    %v1040 = vsub.f32 %v1018, %v1034
    %v1041 = vsub.f32 %v1023, %v1037
    %v1042 = vmul.f32 %v1038, 1.442695
    %v1043 = vpow.pop %v1042
    %v1044 = vmul.f32 %v1039, 1.442695
    %v1045 = vpow.pop %v1044
    %v1046 = vmul.f32 %v1040, 1.442695
    %v1047 = vpow.pop %v1046
    %v1048 = vmul.f32 %v1041, 1.442695
    %v1049 = vpow.pop %v1048
    %v1050 = vsel %vm277, %v1043, 0.0
    %1051 = vadd.xlane.f32.xlu0 %v1050
    %v1052 = vpop.xlane.xlu0 %1051
    %v1053 = vsel %vm277, %v1045, 0.0
    %1054 = vadd.xlane.f32.xlu0 %v1053
    %v1055 = vpop.xlane.xlu0 %1054
    %v1056 = vsel %vm277, %v1047, 0.0
    %1057 = vadd.xlane.f32.xlu0 %v1056
    %v1058 = vpop.xlane.xlu0 %1057
    %v1059 = vsel %vm277, %v1049, 0.0
    %1060 = vadd.xlane.f32.xlu0 %v1059
    %v1061 = vpop.xlane.xlu0 %1060
    %v1062 = vrcp.pop %v1052
    %v1063 = vrcp.pop %v1055
    %v1064 = vrcp.pop %v1058
    %v1065 = vrcp.pop %v1061
    %v1066 = vmul.f32 %v1043, %v1062
    %v1067 = vmul.f32 %v1045, %v1063
    %v1068 = vmul.f32 %v1047, %v1064
    %v1069 = vmul.f32 %v1049, %v1065
    %v1070 = vsel %vm277, %v1066, 0.0
    %v1071 = vsel %vm277, %v1067, 0.0
    %v1072 = vadd.f32 %v1070, %v1071
    %v1073 = vrot.slane %v1072, 4
    %v1074 = vadd.f32 %v1072, %v1073
    %v1075 = vrot.slane %v1074, 2
    %v1076 = vadd.f32 %v1074, %v1075
    %v1077 = vrot.slane %v1076, 1
    %v1078 = vadd.f32 %v1076, %v1077
    %v1079 = vsel %vm277, %v1068, 0.0
    %v1080 = vsel %vm277, %v1069, 0.0
    %v1081 = vadd.f32 %v1079, %v1080
    %v1082 = vrot.slane %v1081, 4
    %v1083 = vadd.f32 %v1081, %v1082
    %v1084 = vrot.slane %v1083, 2
    %v1085 = vadd.f32 %v1083, %v1084
    %v1086 = vrot.slane %v1085, 1
    %v1087 = vadd.f32 %v1085, %v1086
    %v1088 = vadd.f32 %v1078, 1e-09
    %v1089 = vadd.f32 %v1087, 1e-09
    %v1090 = vrcp.pop %v1088
    %v1091 = vrcp.pop %v1089
    %v1092 = vmul.f32 %v1066, %v1090
    %v1093 = vmul.f32 %v1067, %v1090
    %v1094 = vmul.f32 %v1068, %v1091
    %v1095 = vmul.f32 %v1069, %v1091
    %1096 = vmatprep.subr.mxu0 0.0
    %1097 = vmatpush1.msra.mxu0 %v1092
    %1098 = vmatprep.subr.mxu0 0.0
    %1099 = vmatpush1.msra.mxu0 %v1093
    %1100 = vmatprep.subr.mxu0 0.0
    %1101 = vmatpush1.msra.mxu0 0.0
    %1102 = vmatprep.subr.mxu0 0.0
    %1103 = vmatpush1.msra.mxu0 0.0
    %1104 = vmatprep.subr.mxu0 0.0
    %1105 = vmatpush1.msra.mxu0 0.0
    %1106 = vmatprep.subr.mxu0 0.0
    %1107 = vmatpush1.msra.mxu0 0.0
    %1108 = vmatprep.subr.mxu0 0.0
    %1109 = vmatpush1.msra.mxu0 0.0
    %1110 = vmatprep.subr.mxu0 0.0
    %1111 = vmatpush1.msra.mxu0 0.0
    %1112 = vmatprep.subr.mxu0 0.0
    %1113 = vmatpush1.msra.mxu0 0.0
    %1114 = vmatprep.subr.mxu0 0.0
    %1115 = vmatpush1.msra.mxu0 0.0
    %1116 = vmatprep.subr.mxu0 0.0
    %1117 = vmatpush1.msra.mxu0 0.0
    %1118 = vmatprep.subr.mxu0 0.0
    %1119 = vmatpush1.msra.mxu0 0.0
    %1120 = vmatprep.subr.mxu0 0.0
    %1121 = vmatpush1.msra.mxu0 0.0
    %1122 = vmatprep.subr.mxu0 0.0
    %1123 = vmatpush1.msra.mxu0 0.0
    %1124 = vmatprep.subr.mxu0 0.0
    %1125 = vmatpush1.msra.mxu0 0.0
    %1126 = vmatprep.subr.mxu0 0.0
    %1127 = vmatpush1.msra.mxu0 0.0
    %1128 = vmatprep.subr.mxu0 0.0
    %1129 = vmatpush1.msra.mxu0 0.0
    %1130 = vmatprep.subr.mxu0 0.0
    %1131 = vmatpush1.msra.mxu0 0.0
    %1132 = vmatprep.subr.mxu0 0.0
    %1133 = vmatpush1.msra.mxu0 0.0
    %1134 = vmatprep.subr.mxu0 0.0
    %1135 = vmatpush1.msra.mxu0 0.0
    %1136 = vmatprep.subr.mxu0 0.0
    %1137 = vmatpush1.msra.mxu0 0.0
    %1138 = vmatprep.subr.mxu0 0.0
    %1139 = vmatpush1.msra.mxu0 0.0
    %1140 = vmatprep.subr.mxu0 0.0
    %1141 = vmatpush1.msra.mxu0 0.0
    %1142 = vmatprep.subr.mxu0 0.0
    %1143 = vmatpush1.msra.mxu0 0.0
    %1144 = vmatprep.subr.mxu0 0.0
    %1145 = vmatpush1.msra.mxu0 0.0
    %1146 = vmatprep.subr.mxu0 0.0
    %1147 = vmatpush1.msra.mxu0 0.0
    %1148 = vmatprep.subr.mxu0 0.0
    %1149 = vmatpush1.msra.mxu0 0.0
    %1150 = vmatprep.subr.mxu0 0.0
    %1151 = vmatpush1.msra.mxu0 0.0
    %1152 = vmatprep.subr.mxu0 0.0
    %1153 = vmatpush1.msra.mxu0 0.0
    %1154 = vmatprep.subr.mxu0 0.0
    %1155 = vmatpush1.msra.mxu0 0.0
    %1156 = vmatprep.subr.mxu0 0.0
    %1157 = vmatpush1.msra.mxu0 0.0
    %1158 = vmatprep.subr.mxu0 0.0
    %1159 = vmatpush1.msra.mxu0 0.0
    %1160 = vmatprep.mubr.f32.mxu0 0.0
    %1161 = vmatmul.mubr.f32.gmra.mrb[0].mxu0 %v350
    %v1162 = vpop.f32.mrb[0].mxu0
    %v1163 = vadd.f32 0.0, %v1162
    %v1164 = vpop.f32.mrb[0].mxu0
    %1165 = vdwg.mxu0
    %1166 = vmatprep.subr.mxu0 0.0
    %1167 = vmatpush1.msra.mxu0 %v1094
    %1168 = vmatprep.subr.mxu0 0.0
    %1169 = vmatpush1.msra.mxu0 %v1095
    %1170 = vmatprep.subr.mxu0 0.0
    %1171 = vmatpush1.msra.mxu0 0.0
    %1172 = vmatprep.subr.mxu0 0.0
    %1173 = vmatpush1.msra.mxu0 0.0
    %1174 = vmatprep.subr.mxu0 0.0
    %1175 = vmatpush1.msra.mxu0 0.0
    %1176 = vmatprep.subr.mxu0 0.0
    %1177 = vmatpush1.msra.mxu0 0.0
    %1178 = vmatprep.subr.mxu0 0.0
    %1179 = vmatpush1.msra.mxu0 0.0
    %1180 = vmatprep.subr.mxu0 0.0
    %1181 = vmatpush1.msra.mxu0 0.0
    %1182 = vmatprep.subr.mxu0 0.0
    %1183 = vmatpush1.msra.mxu0 0.0
    %1184 = vmatprep.subr.mxu0 0.0
    %1185 = vmatpush1.msra.mxu0 0.0
    %1186 = vmatprep.subr.mxu0 0.0
    %1187 = vmatpush1.msra.mxu0 0.0
    %1188 = vmatprep.subr.mxu0 0.0
    %1189 = vmatpush1.msra.mxu0 0.0
    %1190 = vmatprep.subr.mxu0 0.0
    %1191 = vmatpush1.msra.mxu0 0.0
    %1192 = vmatprep.subr.mxu0 0.0
    %1193 = vmatpush1.msra.mxu0 0.0
    %1194 = vmatprep.subr.mxu0 0.0
    %1195 = vmatpush1.msra.mxu0 0.0
    %1196 = vmatprep.subr.mxu0 0.0
    %1197 = vmatpush1.msra.mxu0 0.0
    %1198 = vmatprep.subr.mxu0 0.0
    %1199 = vmatpush1.msra.mxu0 0.0
    %1200 = vmatprep.subr.mxu0 0.0
    %1201 = vmatpush1.msra.mxu0 0.0
    %1202 = vmatprep.subr.mxu0 0.0
    %1203 = vmatpush1.msra.mxu0 0.0
    %1204 = vmatprep.subr.mxu0 0.0
    %1205 = vmatpush1.msra.mxu0 0.0
    %1206 = vmatprep.subr.mxu0 0.0
    %1207 = vmatpush1.msra.mxu0 0.0
    %1208 = vmatprep.subr.mxu0 0.0
    %1209 = vmatpush1.msra.mxu0 0.0
    %1210 = vmatprep.subr.mxu0 0.0
    %1211 = vmatpush1.msra.mxu0 0.0
    %1212 = vmatprep.subr.mxu0 0.0
    %1213 = vmatpush1.msra.mxu0 0.0
    %1214 = vmatprep.subr.mxu0 0.0
    %1215 = vmatpush1.msra.mxu0 0.0
    %1216 = vmatprep.subr.mxu0 0.0
    %1217 = vmatpush1.msra.mxu0 0.0
    %1218 = vmatprep.subr.mxu0 0.0
    %1219 = vmatpush1.msra.mxu0 0.0
    %1220 = vmatprep.subr.mxu0 0.0
    %1221 = vmatpush1.msra.mxu0 0.0
    %1222 = vmatprep.subr.mxu0 0.0
    %1223 = vmatpush1.msra.mxu0 0.0
    %1224 = vmatprep.subr.mxu0 0.0
    %1225 = vmatpush1.msra.mxu0 0.0
    %1226 = vmatprep.subr.mxu0 0.0
    %1227 = vmatpush1.msra.mxu0 0.0
    %1228 = vmatprep.subr.mxu0 0.0
    %1229 = vmatpush1.msra.mxu0 0.0
    %1230 = vmatprep.mubr.f32.mxu0 0.0
    %1231 = vmatmul.mubr.f32.gmra.mrb[0].mxu0 %v350
    %v1232 = vpop.f32.mrb[0].mxu0
    %v1233 = vadd.f32 0.0, %v1232
    %v1234 = vpop.f32.mrb[0].mxu0
    %1235 = vdwg.mxu0
    %v1238 = vrot.slane %v1163, 1
    %v1239 = vrot.slane %v1163, 2
    %v1240 = vrot.slane %v1163, 3
    %v1241 = vrot.slane %v1163, 4
    %v1242 = vrot.slane %v1163, 5
    %v1243 = vrot.slane %v1163, 6
    %v1244 = vrot.slane %v1163, 7
    %v1245 = vrot.slane %v1233, 1
    %v1246 = vrot.slane %v1233, 2
    %v1247 = vrot.slane %v1233, 3
    %v1248 = vrot.slane %v1233, 4
    %v1249 = vrot.slane %v1233, 5
    %v1250 = vrot.slane %v1233, 6
    %v1251 = vrot.slane %v1233, 7
    %v1268 = vadd.f32 %v814, %v1163
    %v1269 = vadd.f32 %v815, %v1238
    %v1270 = vadd.f32 %v816, %v1239
    %v1271 = vadd.f32 %v817, %v1240
    %v1272 = vadd.f32 %v818, %v1241
    %v1273 = vadd.f32 %v819, %v1242
    %v1274 = vadd.f32 %v820, %v1243
    %v1275 = vadd.f32 %v821, %v1244
    %v1276 = vadd.f32 %v822, %v1233
    %v1277 = vadd.f32 %v823, %v1245
    %v1278 = vadd.f32 %v824, %v1246
    %v1279 = vadd.f32 %v825, %v1247
    %v1280 = vadd.f32 %v826, %v1248
    %v1281 = vadd.f32 %v827, %v1249
    %v1282 = vadd.f32 %v828, %v1250
    %v1283 = vadd.f32 %v829, %v1251
    %v1300 = vrot.slane %v1269, 7
    %v1301 = vsel %vm76, %v1300, %v1268
    %v1302 = vrot.slane %v1270, 6
    %v1303 = vsel %vm79, %v1302, %v1301
    %v1304 = vrot.slane %v1271, 5
    %v1305 = vsel %vm82, %v1304, %v1303
    %v1306 = vrot.slane %v1272, 4
    %v1307 = vsel %vm85, %v1306, %v1305
    %v1308 = vrot.slane %v1273, 3
    %v1309 = vsel %vm88, %v1308, %v1307
    %v1310 = vrot.slane %v1274, 2
    %v1311 = vsel %vm91, %v1310, %v1309
    %v1312 = vrot.slane %v1275, 1
    %v1313 = vsel %vm94, %v1312, %v1311
    %v1314 = vrot.slane %v1277, 7
    %v1315 = vsel %vm76, %v1314, %v1276
    %v1316 = vrot.slane %v1278, 6
    %v1317 = vsel %vm79, %v1316, %v1315
    %v1318 = vrot.slane %v1279, 5
    %v1319 = vsel %vm82, %v1318, %v1317
    %v1320 = vrot.slane %v1280, 4
    %v1321 = vsel %vm85, %v1320, %v1319
    %v1322 = vrot.slane %v1281, 3
    %v1323 = vsel %vm88, %v1322, %v1321
    %v1324 = vrot.slane %v1282, 2
    %v1325 = vsel %vm91, %v1324, %v1323
    %v1326 = vrot.slane %v1283, 1
    %v1327 = vsel %vm94, %v1326, %v1325
    %v1330 = vsel %vm277, %v1313, 0.0
    %1331 = vadd.xlane.f32.xlu0 %v1330
    %v1332 = vpop.xlane.xlu0 %1331
    %v1333 = vsel %vm277, %v1327, 0.0
    %1334 = vadd.xlane.f32.xlu0 %v1333
    %v1335 = vpop.xlane.xlu0 %1334
    %v1336 = vmul.f32 %v1332, %v592
    %v1337 = vmul.f32 %v1335, %v592
    %v1340 = vrot.slane %v1336, 1
    %v1341 = vrot.slane %v1336, 2
    %v1342 = vrot.slane %v1336, 3
    %v1343 = vrot.slane %v1336, 4
    %v1344 = vrot.slane %v1336, 5
    %v1345 = vrot.slane %v1336, 6
    %v1346 = vrot.slane %v1336, 7
    %v1347 = vrot.slane %v1337, 1
    %v1348 = vrot.slane %v1337, 2
    %v1349 = vrot.slane %v1337, 3
    %v1350 = vrot.slane %v1337, 4
    %v1351 = vrot.slane %v1337, 5
    %v1352 = vrot.slane %v1337, 6
    %v1353 = vrot.slane %v1337, 7
    %v1370 = vsub.f32 %v1268, %v1336
    %v1371 = vsub.f32 %v1269, %v1340
    %v1372 = vsub.f32 %v1270, %v1341
    %v1373 = vsub.f32 %v1271, %v1342
    %v1374 = vsub.f32 %v1272, %v1343
    %v1375 = vsub.f32 %v1273, %v1344
    %v1376 = vsub.f32 %v1274, %v1345
    %v1377 = vsub.f32 %v1275, %v1346
    %v1378 = vsub.f32 %v1276, %v1337
    %v1379 = vsub.f32 %v1277, %v1347
    %v1380 = vsub.f32 %v1278, %v1348
    %v1381 = vsub.f32 %v1279, %v1349
    %v1382 = vsub.f32 %v1280, %v1350
    %v1383 = vsub.f32 %v1281, %v1351
    %v1384 = vsub.f32 %v1282, %v1352
    %v1385 = vsub.f32 %v1283, %v1353
    %v1386 = vmul.f32 %v1370, %v1370
    %v1387 = vmul.f32 %v1371, %v1371
    %v1388 = vmul.f32 %v1372, %v1372
    %v1389 = vmul.f32 %v1373, %v1373
    %v1390 = vmul.f32 %v1374, %v1374
    %v1391 = vmul.f32 %v1375, %v1375
    %v1392 = vmul.f32 %v1376, %v1376
    %v1393 = vmul.f32 %v1377, %v1377
    %v1394 = vmul.f32 %v1378, %v1378
    %v1395 = vmul.f32 %v1379, %v1379
    %v1396 = vmul.f32 %v1380, %v1380
    %v1397 = vmul.f32 %v1381, %v1381
    %v1398 = vmul.f32 %v1382, %v1382
    %v1399 = vmul.f32 %v1383, %v1383
    %v1400 = vmul.f32 %v1384, %v1384
    %v1401 = vmul.f32 %v1385, %v1385
    %v1418 = vrot.slane %v1387, 7
    %v1419 = vsel %vm76, %v1418, %v1386
    %v1420 = vrot.slane %v1388, 6
    %v1421 = vsel %vm79, %v1420, %v1419
    %v1422 = vrot.slane %v1389, 5
    %v1423 = vsel %vm82, %v1422, %v1421
    %v1424 = vrot.slane %v1390, 4
    %v1425 = vsel %vm85, %v1424, %v1423
    %v1426 = vrot.slane %v1391, 3
    %v1427 = vsel %vm88, %v1426, %v1425
    %v1428 = vrot.slane %v1392, 2
    %v1429 = vsel %vm91, %v1428, %v1427
    %v1430 = vrot.slane %v1393, 1
    %v1431 = vsel %vm94, %v1430, %v1429
    %v1432 = vrot.slane %v1395, 7
    %v1433 = vsel %vm76, %v1432, %v1394
    %v1434 = vrot.slane %v1396, 6
    %v1435 = vsel %vm79, %v1434, %v1433
    %v1436 = vrot.slane %v1397, 5
    %v1437 = vsel %vm82, %v1436, %v1435
    %v1438 = vrot.slane %v1398, 4
    %v1439 = vsel %vm85, %v1438, %v1437
    %v1440 = vrot.slane %v1399, 3
    %v1441 = vsel %vm88, %v1440, %v1439
    %v1442 = vrot.slane %v1400, 2
    %v1443 = vsel %vm91, %v1442, %v1441
    %v1444 = vrot.slane %v1401, 1
    %v1445 = vsel %vm94, %v1444, %v1443
    %v1448 = vsel %vm277, %v1431, 0.0
    %1449 = vadd.xlane.f32.xlu0 %v1448
    %v1450 = vpop.xlane.xlu0 %1449
    %v1451 = vsel %vm277, %v1445, 0.0
    %1452 = vadd.xlane.f32.xlu0 %v1451
    %v1453 = vpop.xlane.xlu0 %1452
    %v1454 = vmul.f32 %v1450, %v592
    %v1455 = vmul.f32 %v1453, %v592
    %v1456 = vadd.f32 %v1454, 1e-05
    %v1457 = vadd.f32 %v1455, 1e-05
    %v1458 = vrsqrt.pop %v1456
    %v1459 = vrsqrt.pop %v1457
    %v1462 = vrot.slane %v1458, 1
    %v1463 = vrot.slane %v1458, 2
    %v1464 = vrot.slane %v1458, 3
    %v1465 = vrot.slane %v1458, 4
    %v1466 = vrot.slane %v1458, 5
    %v1467 = vrot.slane %v1458, 6
    %v1468 = vrot.slane %v1458, 7
    %v1469 = vrot.slane %v1459, 1
    %v1470 = vrot.slane %v1459, 2
    %v1471 = vrot.slane %v1459, 3
    %v1472 = vrot.slane %v1459, 4
    %v1473 = vrot.slane %v1459, 5
    %v1474 = vrot.slane %v1459, 6
    %v1475 = vrot.slane %v1459, 7
    %v1492 = vmul.f32 %v1370, %v1458
    %v1493 = vmul.f32 %v1371, %v1462
    %v1494 = vmul.f32 %v1372, %v1463
    %v1495 = vmul.f32 %v1373, %v1464
    %v1496 = vmul.f32 %v1374, %v1465
    %v1497 = vmul.f32 %v1375, %v1466
    %v1498 = vmul.f32 %v1376, %v1467
    %v1499 = vmul.f32 %v1377, %v1468
    %v1500 = vmul.f32 %v1378, %v1459
    %v1501 = vmul.f32 %v1379, %v1469
    %v1502 = vmul.f32 %v1380, %v1470
    %v1503 = vmul.f32 %v1381, %v1471
    %v1504 = vmul.f32 %v1382, %v1472
    %v1505 = vmul.f32 %v1383, %v1473
    %v1506 = vmul.f32 %v1384, %v1474
    %v1507 = vmul.f32 %v1385, %v1475
    %v1508 = vmul.f32 %v1492, %v46
    %v1509 = vmul.f32 %v1493, %v46
    %v1510 = vmul.f32 %v1494, %v46
    %v1511 = vmul.f32 %v1495, %v46
    %v1512 = vmul.f32 %v1496, %v46
    %v1513 = vmul.f32 %v1497, %v46
    %v1514 = vmul.f32 %v1498, %v46
    %v1515 = vmul.f32 %v1499, %v46
    %v1516 = vmul.f32 %v1500, %v46
    %v1517 = vmul.f32 %v1501, %v46
    %v1518 = vmul.f32 %v1502, %v46
    %v1519 = vmul.f32 %v1503, %v46
    %v1520 = vmul.f32 %v1504, %v46
    %v1521 = vmul.f32 %v1505, %v46
    %v1522 = vmul.f32 %v1506, %v46
    %v1523 = vmul.f32 %v1507, %v46
    %v1524 = vadd.f32 %v1508, %v50
    %v1525 = vadd.f32 %v1509, %v50
    %v1526 = vadd.f32 %v1510, %v50
    %v1527 = vadd.f32 %v1511, %v50
    %v1528 = vadd.f32 %v1512, %v50
    %v1529 = vadd.f32 %v1513, %v50
    %v1530 = vadd.f32 %v1514, %v50
    %v1531 = vadd.f32 %v1515, %v50
    %v1532 = vadd.f32 %v1516, %v50
    %v1533 = vadd.f32 %v1517, %v50
    %v1534 = vadd.f32 %v1518, %v50
    %v1535 = vadd.f32 %v1519, %v50
    %v1536 = vadd.f32 %v1520, %v50
    %v1537 = vadd.f32 %v1521, %v50
    %v1538 = vadd.f32 %v1522, %v50
    %v1539 = vadd.f32 %v1523, %v50
    %1540 = vst.msk [vmem:[#allocation2 + $0x1] sm:$0x1] %vm797, %v1524
    %1541 = vst.msk [vmem:[#allocation2 + $0x5] sm:$0x1] %vm797, %v1525
    %1542 = vst.msk [vmem:[#allocation2 + $0x9] sm:$0x1] %vm797, %v1526
    %1543 = vst.msk [vmem:[#allocation2 + $0xd] sm:$0x1] %vm797, %v1527
    %1544 = vst.msk [vmem:[#allocation2 + $0x11] sm:$0x1] %vm797, %v1528
    %1545 = vst.msk [vmem:[#allocation2 + $0x15] sm:$0x1] %vm797, %v1529
    %1546 = vst.msk [vmem:[#allocation2 + $0x19] sm:$0x1] %vm797, %v1530
    %1547 = vst.msk [vmem:[#allocation2 + $0x1d] sm:$0x1] %vm797, %v1531
    %1548 = vst.msk [vmem:[#allocation2 + $0x21] sm:$0x1] %vm797, %v1532
    %1549 = vst.msk [vmem:[#allocation2 + $0x25] sm:$0x1] %vm797, %v1533
    %1550 = vst.msk [vmem:[#allocation2 + $0x29] sm:$0x1] %vm797, %v1534
    %1551 = vst.msk [vmem:[#allocation2 + $0x2d] sm:$0x1] %vm797, %v1535
    %1552 = vst.msk [vmem:[#allocation2 + $0x31] sm:$0x1] %vm797, %v1536
    %1553 = vst.msk [vmem:[#allocation2 + $0x35] sm:$0x1] %vm797, %v1537
    %1554 = vst.msk [vmem:[#allocation2 + $0x39] sm:$0x1] %vm797, %v1538
    %1555 = vst.msk [vmem:[#allocation2 + $0x3d] sm:$0x1] %vm797, %v1539
    %v1556 = vld [vmem:[%s0 + $0x2] sm:$0x1]
    %v1557 = vld [vmem:[%s0 + $0x6] sm:$0x1]
    %v1558 = vld [vmem:[%s0 + $0xa] sm:$0x1]
    %v1559 = vld [vmem:[%s0 + $0xe] sm:$0x1]
    %v1560 = vld [vmem:[%s0 + $0x12] sm:$0x1]
    %v1561 = vld [vmem:[%s0 + $0x16] sm:$0x1]
    %v1562 = vld [vmem:[%s0 + $0x1a] sm:$0x1]
    %v1563 = vld [vmem:[%s0 + $0x1e] sm:$0x1]
    %v1564 = vld [vmem:[%s0 + $0x22] sm:$0x1]
    %v1565 = vld [vmem:[%s0 + $0x26] sm:$0x1]
    %v1566 = vld [vmem:[%s0 + $0x2a] sm:$0x1]
    %v1567 = vld [vmem:[%s0 + $0x2e] sm:$0x1]
    %v1568 = vld [vmem:[%s0 + $0x32] sm:$0x1]
    %v1569 = vld [vmem:[%s0 + $0x36] sm:$0x1]
    %v1570 = vld [vmem:[%s0 + $0x3a] sm:$0x1]
    %v1571 = vld [vmem:[%s0 + $0x3e] sm:$0x1]
    %v1580 = vrot.slane %v1557, 7
    %v1581 = vsel %vm76, %v1580, %v1556
    %v1582 = vrot.slane %v1558, 6
    %v1583 = vsel %vm79, %v1582, %v1581
    %v1584 = vrot.slane %v1559, 5
    %v1585 = vsel %vm82, %v1584, %v1583
    %v1586 = vrot.slane %v1560, 4
    %v1587 = vsel %vm85, %v1586, %v1585
    %v1588 = vrot.slane %v1561, 3
    %v1589 = vsel %vm88, %v1588, %v1587
    %v1590 = vrot.slane %v1562, 2
    %v1591 = vsel %vm91, %v1590, %v1589
    %v1592 = vrot.slane %v1563, 1
    %v1593 = vsel %vm94, %v1592, %v1591
    %1595 = vmatprep.subr.mxu0 0.0
    %1596 = vmatpush1.msra.mxu0 %v1593
    %1597 = vmatprep.subr.mxu0 0.0
    %1598 = vmatpush1.msra.mxu0 0.0
    %1599 = vmatprep.subr.mxu0 0.0
    %1600 = vmatpush1.msra.mxu0 0.0
    %1601 = vmatprep.subr.mxu0 0.0
    %1602 = vmatpush1.msra.mxu0 0.0
    %1603 = vmatprep.subr.mxu0 0.0
    %1604 = vmatpush1.msra.mxu0 0.0
    %1605 = vmatprep.subr.mxu0 0.0
    %1606 = vmatpush1.msra.mxu0 0.0
    %1607 = vmatprep.subr.mxu0 0.0
    %1608 = vmatpush1.msra.mxu0 0.0
    %1609 = vmatprep.subr.mxu0 0.0
    %1610 = vmatpush1.msra.mxu0 0.0
    %1611 = vmatprep.subr.mxu0 0.0
    %1612 = vmatpush1.msra.mxu0 0.0
    %1613 = vmatprep.subr.mxu0 0.0
    %1614 = vmatpush1.msra.mxu0 0.0
    %1615 = vmatprep.subr.mxu0 0.0
    %1616 = vmatpush1.msra.mxu0 0.0
    %1617 = vmatprep.subr.mxu0 0.0
    %1618 = vmatpush1.msra.mxu0 0.0
    %1619 = vmatprep.subr.mxu0 0.0
    %1620 = vmatpush1.msra.mxu0 0.0
    %1621 = vmatprep.subr.mxu0 0.0
    %1622 = vmatpush1.msra.mxu0 0.0
    %1623 = vmatprep.subr.mxu0 0.0
    %1624 = vmatpush1.msra.mxu0 0.0
    %1625 = vmatprep.subr.mxu0 0.0
    %1626 = vmatpush1.msra.mxu0 0.0
    %1627 = vmatprep.subr.mxu0 0.0
    %1628 = vmatpush1.msra.mxu0 0.0
    %1629 = vmatprep.subr.mxu0 0.0
    %1630 = vmatpush1.msra.mxu0 0.0
    %1631 = vmatprep.subr.mxu0 0.0
    %1632 = vmatpush1.msra.mxu0 0.0
    %1633 = vmatprep.subr.mxu0 0.0
    %1634 = vmatpush1.msra.mxu0 0.0
    %1635 = vmatprep.subr.mxu0 0.0
    %1636 = vmatpush1.msra.mxu0 0.0
    %1637 = vmatprep.subr.mxu0 0.0
    %1638 = vmatpush1.msra.mxu0 0.0
    %1639 = vmatprep.subr.mxu0 0.0
    %1640 = vmatpush1.msra.mxu0 0.0
    %1641 = vmatprep.subr.mxu0 0.0
    %1642 = vmatpush1.msra.mxu0 0.0
    %1643 = vmatprep.subr.mxu0 0.0
    %1644 = vmatpush1.msra.mxu0 0.0
    %1645 = vmatprep.subr.mxu0 0.0
    %1646 = vmatpush1.msra.mxu0 0.0
    %1647 = vmatprep.subr.mxu0 0.0
    %1648 = vmatpush1.msra.mxu0 0.0
    %1649 = vmatprep.subr.mxu0 0.0
    %1650 = vmatpush1.msra.mxu0 0.0
    %1651 = vmatprep.subr.mxu0 0.0
    %1652 = vmatpush1.msra.mxu0 0.0
    %1653 = vmatprep.subr.mxu0 0.0
    %1654 = vmatpush1.msra.mxu0 0.0
    %1655 = vmatprep.subr.mxu0 0.0
    %1656 = vmatpush1.msra.mxu0 0.0
    %1657 = vmatprep.subr.mxu0 0.0
    %1658 = vmatpush1.msra.mxu0 0.0
    %1659 = vmatprep.mubr.f32.mxu0 0.0
    %1660 = vmatmul.mubr.f32.gmra.mrb[0].mxu0 %v99
    %v1661 = vpop.f32.mrb[0].mxu0
    %v1662 = vadd.f32 0.0, %v1661
    %v1663 = vpop.f32.mrb[0].mxu0
    %1664 = vmatprep.mubr.f32.mxu0 0.0
    %1665 = vmatmul.mubr.f32.gmra.mrb[0].mxu0 %v102
    %v1666 = vpop.f32.mrb[0].mxu0
    %v1667 = vadd.f32 0.0, %v1666
    %v1668 = vpop.f32.mrb[0].mxu0
    %1669 = vdwg.mxu0
    %v1678 = vrot.slane %v1565, 7
    %v1679 = vsel %vm76, %v1678, %v1564
    %v1680 = vrot.slane %v1566, 6
    %v1681 = vsel %vm79, %v1680, %v1679
    %v1682 = vrot.slane %v1567, 5
    %v1683 = vsel %vm82, %v1682, %v1681
    %v1684 = vrot.slane %v1568, 4
    %v1685 = vsel %vm85, %v1684, %v1683
    %v1686 = vrot.slane %v1569, 3
    %v1687 = vsel %vm88, %v1686, %v1685
    %v1688 = vrot.slane %v1570, 2
    %v1689 = vsel %vm91, %v1688, %v1687
    %v1690 = vrot.slane %v1571, 1
    %v1691 = vsel %vm94, %v1690, %v1689
    %1693 = vmatprep.subr.mxu0 0.0
    %1694 = vmatpush1.msra.mxu0 %v1691
    %1695 = vmatprep.subr.mxu0 0.0
    %1696 = vmatpush1.msra.mxu0 0.0
    %1697 = vmatprep.subr.mxu0 0.0
    %1698 = vmatpush1.msra.mxu0 0.0
    %1699 = vmatprep.subr.mxu0 0.0
    %1700 = vmatpush1.msra.mxu0 0.0
    %1701 = vmatprep.subr.mxu0 0.0
    %1702 = vmatpush1.msra.mxu0 0.0
    %1703 = vmatprep.subr.mxu0 0.0
    %1704 = vmatpush1.msra.mxu0 0.0
    %1705 = vmatprep.subr.mxu0 0.0
    %1706 = vmatpush1.msra.mxu0 0.0
    %1707 = vmatprep.subr.mxu0 0.0
    %1708 = vmatpush1.msra.mxu0 0.0
    %1709 = vmatprep.subr.mxu0 0.0
    %1710 = vmatpush1.msra.mxu0 0.0
    %1711 = vmatprep.subr.mxu0 0.0
    %1712 = vmatpush1.msra.mxu0 0.0
    %1713 = vmatprep.subr.mxu0 0.0
    %1714 = vmatpush1.msra.mxu0 0.0
    %1715 = vmatprep.subr.mxu0 0.0
    %1716 = vmatpush1.msra.mxu0 0.0
    %1717 = vmatprep.subr.mxu0 0.0
    %1718 = vmatpush1.msra.mxu0 0.0
    %1719 = vmatprep.subr.mxu0 0.0
    %1720 = vmatpush1.msra.mxu0 0.0
    %1721 = vmatprep.subr.mxu0 0.0
    %1722 = vmatpush1.msra.mxu0 0.0
    %1723 = vmatprep.subr.mxu0 0.0
    %1724 = vmatpush1.msra.mxu0 0.0
    %1725 = vmatprep.subr.mxu0 0.0
    %1726 = vmatpush1.msra.mxu0 0.0
    %1727 = vmatprep.subr.mxu0 0.0
    %1728 = vmatpush1.msra.mxu0 0.0
    %1729 = vmatprep.subr.mxu0 0.0
    %1730 = vmatpush1.msra.mxu0 0.0
    %1731 = vmatprep.subr.mxu0 0.0
    %1732 = vmatpush1.msra.mxu0 0.0
    %1733 = vmatprep.subr.mxu0 0.0
    %1734 = vmatpush1.msra.mxu0 0.0
    %1735 = vmatprep.subr.mxu0 0.0
    %1736 = vmatpush1.msra.mxu0 0.0
    %1737 = vmatprep.subr.mxu0 0.0
    %1738 = vmatpush1.msra.mxu0 0.0
    %1739 = vmatprep.subr.mxu0 0.0
    %1740 = vmatpush1.msra.mxu0 0.0
    %1741 = vmatprep.subr.mxu0 0.0
    %1742 = vmatpush1.msra.mxu0 0.0
    %1743 = vmatprep.subr.mxu0 0.0
    %1744 = vmatpush1.msra.mxu0 0.0
    %1745 = vmatprep.subr.mxu0 0.0
    %1746 = vmatpush1.msra.mxu0 0.0
    %1747 = vmatprep.subr.mxu0 0.0
    %1748 = vmatpush1.msra.mxu0 0.0
    %1749 = vmatprep.subr.mxu0 0.0
    %1750 = vmatpush1.msra.mxu0 0.0
    %1751 = vmatprep.subr.mxu0 0.0
    %1752 = vmatpush1.msra.mxu0 0.0
    %1753 = vmatprep.subr.mxu0 0.0
    %1754 = vmatpush1.msra.mxu0 0.0
    %1755 = vmatprep.subr.mxu0 0.0
    %1756 = vmatpush1.msra.mxu0 0.0
    %1757 = vmatprep.mubr.f32.mxu0 0.0
    %1758 = vmatmul.mubr.f32.gmra.mrb[0].mxu0 %v99
    %v1759 = vpop.f32.mrb[0].mxu0
    %v1760 = vadd.f32 0.0, %v1759
    %v1761 = vpop.f32.mrb[0].mxu0
    %1762 = vmatprep.mubr.f32.mxu0 0.0
    %1763 = vmatmul.mubr.f32.gmra.mrb[0].mxu0 %v102
    %v1764 = vpop.f32.mrb[0].mxu0
    %v1765 = vadd.f32 0.0, %v1764
    %v1766 = vpop.f32.mrb[0].mxu0
    %1767 = vdwg.mxu0
    %v1768 = vsel %vm277, %v1662, -inf
    %1769 = vmax.xlane.f32.xlu0 %v1768
    %v1770 = vpop.xlane.xlu0 %1769
    %v1771 = vsel %vm277, %v1667, -inf
    %1772 = vmax.xlane.f32.xlu0 %v1771
    %v1773 = vpop.xlane.xlu0 %1772
    %v1774 = vsel %vm277, %v1760, -inf
    %1775 = vmax.xlane.f32.xlu0 %v1774
    %v1776 = vpop.xlane.xlu0 %1775
    %v1777 = vsel %vm277, %v1765, -inf
    %1778 = vmax.xlane.f32.xlu0 %v1777
    %v1779 = vpop.xlane.xlu0 %1778
    %v1780 = vsub.f32 %v1662, %v1770
    %v1781 = vsub.f32 %v1667, %v1773
    %v1782 = vsub.f32 %v1760, %v1776
    %v1783 = vsub.f32 %v1765, %v1779
    %v1784 = vmul.f32 %v1780, 1.442695
    %v1785 = vpow.pop %v1784
    %v1786 = vmul.f32 %v1781, 1.442695
    %v1787 = vpow.pop %v1786
    %v1788 = vmul.f32 %v1782, 1.442695
    %v1789 = vpow.pop %v1788
    %v1790 = vmul.f32 %v1783, 1.442695
    %v1791 = vpow.pop %v1790
    %v1792 = vsel %vm277, %v1785, 0.0
    %1793 = vadd.xlane.f32.xlu0 %v1792
    %v1794 = vpop.xlane.xlu0 %1793
    %v1795 = vsel %vm277, %v1787, 0.0
    %1796 = vadd.xlane.f32.xlu0 %v1795
    %v1797 = vpop.xlane.xlu0 %1796
    %v1798 = vsel %vm277, %v1789, 0.0
    %1799 = vadd.xlane.f32.xlu0 %v1798
    %v1800 = vpop.xlane.xlu0 %1799
    %v1801 = vsel %vm277, %v1791, 0.0
    %1802 = vadd.xlane.f32.xlu0 %v1801
    %v1803 = vpop.xlane.xlu0 %1802
    %v1804 = vrcp.pop %v1794
    %v1805 = vrcp.pop %v1797
    %v1806 = vrcp.pop %v1800
    %v1807 = vrcp.pop %v1803
    %v1808 = vmul.f32 %v1785, %v1804
    %v1809 = vmul.f32 %v1787, %v1805
    %v1810 = vmul.f32 %v1789, %v1806
    %v1811 = vmul.f32 %v1791, %v1807
    %v1812 = vsel %vm277, %v1808, 0.0
    %v1813 = vsel %vm277, %v1809, 0.0
    %v1814 = vadd.f32 %v1812, %v1813
    %v1815 = vrot.slane %v1814, 4
    %v1816 = vadd.f32 %v1814, %v1815
    %v1817 = vrot.slane %v1816, 2
    %v1818 = vadd.f32 %v1816, %v1817
    %v1819 = vrot.slane %v1818, 1
    %v1820 = vadd.f32 %v1818, %v1819
    %v1821 = vsel %vm277, %v1810, 0.0
    %v1822 = vsel %vm277, %v1811, 0.0
    %v1823 = vadd.f32 %v1821, %v1822
    %v1824 = vrot.slane %v1823, 4
    %v1825 = vadd.f32 %v1823, %v1824
    %v1826 = vrot.slane %v1825, 2
    %v1827 = vadd.f32 %v1825, %v1826
    %v1828 = vrot.slane %v1827, 1
    %v1829 = vadd.f32 %v1827, %v1828
    %v1830 = vadd.f32 %v1820, 1e-09
    %v1831 = vadd.f32 %v1829, 1e-09
    %v1832 = vrcp.pop %v1830
    %v1833 = vrcp.pop %v1831
    %v1834 = vmul.f32 %v1808, %v1832
    %v1835 = vmul.f32 %v1809, %v1832
    %v1836 = vmul.f32 %v1810, %v1833
    %v1837 = vmul.f32 %v1811, %v1833
    %1838 = vmatprep.subr.mxu0 0.0
    %1839 = vmatpush1.msra.mxu0 %v1834
    %1840 = vmatprep.subr.mxu0 0.0
    %1841 = vmatpush1.msra.mxu0 %v1835
    %1842 = vmatprep.subr.mxu0 0.0
    %1843 = vmatpush1.msra.mxu0 0.0
    %1844 = vmatprep.subr.mxu0 0.0
    %1845 = vmatpush1.msra.mxu0 0.0
    %1846 = vmatprep.subr.mxu0 0.0
    %1847 = vmatpush1.msra.mxu0 0.0
    %1848 = vmatprep.subr.mxu0 0.0
    %1849 = vmatpush1.msra.mxu0 0.0
    %1850 = vmatprep.subr.mxu0 0.0
    %1851 = vmatpush1.msra.mxu0 0.0
    %1852 = vmatprep.subr.mxu0 0.0
    %1853 = vmatpush1.msra.mxu0 0.0
    %1854 = vmatprep.subr.mxu0 0.0
    %1855 = vmatpush1.msra.mxu0 0.0
    %1856 = vmatprep.subr.mxu0 0.0
    %1857 = vmatpush1.msra.mxu0 0.0
    %1858 = vmatprep.subr.mxu0 0.0
    %1859 = vmatpush1.msra.mxu0 0.0
    %1860 = vmatprep.subr.mxu0 0.0
    %1861 = vmatpush1.msra.mxu0 0.0
    %1862 = vmatprep.subr.mxu0 0.0
    %1863 = vmatpush1.msra.mxu0 0.0
    %1864 = vmatprep.subr.mxu0 0.0
    %1865 = vmatpush1.msra.mxu0 0.0
    %1866 = vmatprep.subr.mxu0 0.0
    %1867 = vmatpush1.msra.mxu0 0.0
    %1868 = vmatprep.subr.mxu0 0.0
    %1869 = vmatpush1.msra.mxu0 0.0
    %1870 = vmatprep.subr.mxu0 0.0
    %1871 = vmatpush1.msra.mxu0 0.0
    %1872 = vmatprep.subr.mxu0 0.0
    %1873 = vmatpush1.msra.mxu0 0.0
    %1874 = vmatprep.subr.mxu0 0.0
    %1875 = vmatpush1.msra.mxu0 0.0
    %1876 = vmatprep.subr.mxu0 0.0
    %1877 = vmatpush1.msra.mxu0 0.0
    %1878 = vmatprep.subr.mxu0 0.0
    %1879 = vmatpush1.msra.mxu0 0.0
    %1880 = vmatprep.subr.mxu0 0.0
    %1881 = vmatpush1.msra.mxu0 0.0
    %1882 = vmatprep.subr.mxu0 0.0
    %1883 = vmatpush1.msra.mxu0 0.0
    %1884 = vmatprep.subr.mxu0 0.0
    %1885 = vmatpush1.msra.mxu0 0.0
    %1886 = vmatprep.subr.mxu0 0.0
    %1887 = vmatpush1.msra.mxu0 0.0
    %1888 = vmatprep.subr.mxu0 0.0
    %1889 = vmatpush1.msra.mxu0 0.0
    %1890 = vmatprep.subr.mxu0 0.0
    %1891 = vmatpush1.msra.mxu0 0.0
    %1892 = vmatprep.subr.mxu0 0.0
    %1893 = vmatpush1.msra.mxu0 0.0
    %1894 = vmatprep.subr.mxu0 0.0
    %1895 = vmatpush1.msra.mxu0 0.0
    %1896 = vmatprep.subr.mxu0 0.0
    %1897 = vmatpush1.msra.mxu0 0.0
    %1898 = vmatprep.subr.mxu0 0.0
    %1899 = vmatpush1.msra.mxu0 0.0
    %1900 = vmatprep.subr.mxu0 0.0
    %1901 = vmatpush1.msra.mxu0 0.0
    %1902 = vmatprep.mubr.f32.mxu0 0.0
    %1903 = vmatmul.mubr.f32.gmra.mrb[0].mxu0 %v350
    %v1904 = vpop.f32.mrb[0].mxu0
    %v1905 = vadd.f32 0.0, %v1904
    %v1906 = vpop.f32.mrb[0].mxu0
    %1907 = vdwg.mxu0
    %1908 = vmatprep.subr.mxu0 0.0
    %1909 = vmatpush1.msra.mxu0 %v1836
    %1910 = vmatprep.subr.mxu0 0.0
    %1911 = vmatpush1.msra.mxu0 %v1837
    %1912 = vmatprep.subr.mxu0 0.0
    %1913 = vmatpush1.msra.mxu0 0.0
    %1914 = vmatprep.subr.mxu0 0.0
    %1915 = vmatpush1.msra.mxu0 0.0
    %1916 = vmatprep.subr.mxu0 0.0
    %1917 = vmatpush1.msra.mxu0 0.0
    %1918 = vmatprep.subr.mxu0 0.0
    %1919 = vmatpush1.msra.mxu0 0.0
    %1920 = vmatprep.subr.mxu0 0.0
    %1921 = vmatpush1.msra.mxu0 0.0
    %1922 = vmatprep.subr.mxu0 0.0
    %1923 = vmatpush1.msra.mxu0 0.0
    %1924 = vmatprep.subr.mxu0 0.0
    %1925 = vmatpush1.msra.mxu0 0.0
    %1926 = vmatprep.subr.mxu0 0.0
    %1927 = vmatpush1.msra.mxu0 0.0
    %1928 = vmatprep.subr.mxu0 0.0
    %1929 = vmatpush1.msra.mxu0 0.0
    %1930 = vmatprep.subr.mxu0 0.0
    %1931 = vmatpush1.msra.mxu0 0.0
    %1932 = vmatprep.subr.mxu0 0.0
    %1933 = vmatpush1.msra.mxu0 0.0
    %1934 = vmatprep.subr.mxu0 0.0
    %1935 = vmatpush1.msra.mxu0 0.0
    %1936 = vmatprep.subr.mxu0 0.0
    %1937 = vmatpush1.msra.mxu0 0.0
    %1938 = vmatprep.subr.mxu0 0.0
    %1939 = vmatpush1.msra.mxu0 0.0
    %1940 = vmatprep.subr.mxu0 0.0
    %1941 = vmatpush1.msra.mxu0 0.0
    %1942 = vmatprep.subr.mxu0 0.0
    %1943 = vmatpush1.msra.mxu0 0.0
    %1944 = vmatprep.subr.mxu0 0.0
    %1945 = vmatpush1.msra.mxu0 0.0
    %1946 = vmatprep.subr.mxu0 0.0
    %1947 = vmatpush1.msra.mxu0 0.0
    %1948 = vmatprep.subr.mxu0 0.0
    %1949 = vmatpush1.msra.mxu0 0.0
    %1950 = vmatprep.subr.mxu0 0.0
    %1951 = vmatpush1.msra.mxu0 0.0
    %1952 = vmatprep.subr.mxu0 0.0
    %1953 = vmatpush1.msra.mxu0 0.0
    %1954 = vmatprep.subr.mxu0 0.0
    %1955 = vmatpush1.msra.mxu0 0.0
    %1956 = vmatprep.subr.mxu0 0.0
    %1957 = vmatpush1.msra.mxu0 0.0
    %1958 = vmatprep.subr.mxu0 0.0
    %1959 = vmatpush1.msra.mxu0 0.0
    %1960 = vmatprep.subr.mxu0 0.0
    %1961 = vmatpush1.msra.mxu0 0.0
    %1962 = vmatprep.subr.mxu0 0.0
    %1963 = vmatpush1.msra.mxu0 0.0
    %1964 = vmatprep.subr.mxu0 0.0
    %1965 = vmatpush1.msra.mxu0 0.0
    %1966 = vmatprep.subr.mxu0 0.0
    %1967 = vmatpush1.msra.mxu0 0.0
    %1968 = vmatprep.subr.mxu0 0.0
    %1969 = vmatpush1.msra.mxu0 0.0
    %1970 = vmatprep.subr.mxu0 0.0
    %1971 = vmatpush1.msra.mxu0 0.0
    %1972 = vmatprep.mubr.f32.mxu0 0.0
    %1973 = vmatmul.mubr.f32.gmra.mrb[0].mxu0 %v350
    %v1974 = vpop.f32.mrb[0].mxu0
    %v1975 = vadd.f32 0.0, %v1974
    %v1976 = vpop.f32.mrb[0].mxu0
    %1977 = vdwg.mxu0
    %v1980 = vrot.slane %v1905, 1
    %v1981 = vrot.slane %v1905, 2
    %v1982 = vrot.slane %v1905, 3
    %v1983 = vrot.slane %v1905, 4
    %v1984 = vrot.slane %v1905, 5
    %v1985 = vrot.slane %v1905, 6
    %v1986 = vrot.slane %v1905, 7
    %v1987 = vrot.slane %v1975, 1
    %v1988 = vrot.slane %v1975, 2
    %v1989 = vrot.slane %v1975, 3
    %v1990 = vrot.slane %v1975, 4
    %v1991 = vrot.slane %v1975, 5
    %v1992 = vrot.slane %v1975, 6
    %v1993 = vrot.slane %v1975, 7
    %v2010 = vadd.f32 %v1556, %v1905
    %v2011 = vadd.f32 %v1557, %v1980
    %v2012 = vadd.f32 %v1558, %v1981
    %v2013 = vadd.f32 %v1559, %v1982
    %v2014 = vadd.f32 %v1560, %v1983
    %v2015 = vadd.f32 %v1561, %v1984
    %v2016 = vadd.f32 %v1562, %v1985
    %v2017 = vadd.f32 %v1563, %v1986
    %v2018 = vadd.f32 %v1564, %v1975
    %v2019 = vadd.f32 %v1565, %v1987
    %v2020 = vadd.f32 %v1566, %v1988
    %v2021 = vadd.f32 %v1567, %v1989
    %v2022 = vadd.f32 %v1568, %v1990
    %v2023 = vadd.f32 %v1569, %v1991
    %v2024 = vadd.f32 %v1570, %v1992
    %v2025 = vadd.f32 %v1571, %v1993
    %v2042 = vrot.slane %v2011, 7
    %v2043 = vsel %vm76, %v2042, %v2010
    %v2044 = vrot.slane %v2012, 6
    %v2045 = vsel %vm79, %v2044, %v2043
    %v2046 = vrot.slane %v2013, 5
    %v2047 = vsel %vm82, %v2046, %v2045
    %v2048 = vrot.slane %v2014, 4
    %v2049 = vsel %vm85, %v2048, %v2047
    %v2050 = vrot.slane %v2015, 3
    %v2051 = vsel %vm88, %v2050, %v2049
    %v2052 = vrot.slane %v2016, 2
    %v2053 = vsel %vm91, %v2052, %v2051
    %v2054 = vrot.slane %v2017, 1
    %v2055 = vsel %vm94, %v2054, %v2053
    %v2056 = vrot.slane %v2019, 7
    %v2057 = vsel %vm76, %v2056, %v2018
    %v2058 = vrot.slane %v2020, 6
    %v2059 = vsel %vm79, %v2058, %v2057
    %v2060 = vrot.slane %v2021, 5
    %v2061 = vsel %vm82, %v2060, %v2059
    %v2062 = vrot.slane %v2022, 4
    %v2063 = vsel %vm85, %v2062, %v2061
    %v2064 = vrot.slane %v2023, 3
    %v2065 = vsel %vm88, %v2064, %v2063
    %v2066 = vrot.slane %v2024, 2
    %v2067 = vsel %vm91, %v2066, %v2065
    %v2068 = vrot.slane %v2025, 1
    %v2069 = vsel %vm94, %v2068, %v2067
    %v2072 = vsel %vm277, %v2055, 0.0
    %2073 = vadd.xlane.f32.xlu0 %v2072
    %v2074 = vpop.xlane.xlu0 %2073
    %v2075 = vsel %vm277, %v2069, 0.0
    %2076 = vadd.xlane.f32.xlu0 %v2075
    %v2077 = vpop.xlane.xlu0 %2076
    %v2078 = vmul.f32 %v2074, %v592
    %v2079 = vmul.f32 %v2077, %v592
    %v2082 = vrot.slane %v2078, 1
    %v2083 = vrot.slane %v2078, 2
    %v2084 = vrot.slane %v2078, 3
    %v2085 = vrot.slane %v2078, 4
    %v2086 = vrot.slane %v2078, 5
    %v2087 = vrot.slane %v2078, 6
    %v2088 = vrot.slane %v2078, 7
    %v2089 = vrot.slane %v2079, 1
    %v2090 = vrot.slane %v2079, 2
    %v2091 = vrot.slane %v2079, 3
    %v2092 = vrot.slane %v2079, 4
    %v2093 = vrot.slane %v2079, 5
    %v2094 = vrot.slane %v2079, 6
    %v2095 = vrot.slane %v2079, 7
    %v2112 = vsub.f32 %v2010, %v2078
    %v2113 = vsub.f32 %v2011, %v2082
    %v2114 = vsub.f32 %v2012, %v2083
    %v2115 = vsub.f32 %v2013, %v2084
    %v2116 = vsub.f32 %v2014, %v2085
    %v2117 = vsub.f32 %v2015, %v2086
    %v2118 = vsub.f32 %v2016, %v2087
    %v2119 = vsub.f32 %v2017, %v2088
    %v2120 = vsub.f32 %v2018, %v2079
    %v2121 = vsub.f32 %v2019, %v2089
    %v2122 = vsub.f32 %v2020, %v2090
    %v2123 = vsub.f32 %v2021, %v2091
    %v2124 = vsub.f32 %v2022, %v2092
    %v2125 = vsub.f32 %v2023, %v2093
    %v2126 = vsub.f32 %v2024, %v2094
    %v2127 = vsub.f32 %v2025, %v2095
    %v2128 = vmul.f32 %v2112, %v2112
    %v2129 = vmul.f32 %v2113, %v2113
    %v2130 = vmul.f32 %v2114, %v2114
    %v2131 = vmul.f32 %v2115, %v2115
    %v2132 = vmul.f32 %v2116, %v2116
    %v2133 = vmul.f32 %v2117, %v2117
    %v2134 = vmul.f32 %v2118, %v2118
    %v2135 = vmul.f32 %v2119, %v2119
    %v2136 = vmul.f32 %v2120, %v2120
    %v2137 = vmul.f32 %v2121, %v2121
    %v2138 = vmul.f32 %v2122, %v2122
    %v2139 = vmul.f32 %v2123, %v2123
    %v2140 = vmul.f32 %v2124, %v2124
    %v2141 = vmul.f32 %v2125, %v2125
    %v2142 = vmul.f32 %v2126, %v2126
    %v2143 = vmul.f32 %v2127, %v2127
    %v2160 = vrot.slane %v2129, 7
    %v2161 = vsel %vm76, %v2160, %v2128
    %v2162 = vrot.slane %v2130, 6
    %v2163 = vsel %vm79, %v2162, %v2161
    %v2164 = vrot.slane %v2131, 5
    %v2165 = vsel %vm82, %v2164, %v2163
    %v2166 = vrot.slane %v2132, 4
    %v2167 = vsel %vm85, %v2166, %v2165
    %v2168 = vrot.slane %v2133, 3
    %v2169 = vsel %vm88, %v2168, %v2167
    %v2170 = vrot.slane %v2134, 2
    %v2171 = vsel %vm91, %v2170, %v2169
    %v2172 = vrot.slane %v2135, 1
    %v2173 = vsel %vm94, %v2172, %v2171
    %v2174 = vrot.slane %v2137, 7
    %v2175 = vsel %vm76, %v2174, %v2136
    %v2176 = vrot.slane %v2138, 6
    %v2177 = vsel %vm79, %v2176, %v2175
    %v2178 = vrot.slane %v2139, 5
    %v2179 = vsel %vm82, %v2178, %v2177
    %v2180 = vrot.slane %v2140, 4
    %v2181 = vsel %vm85, %v2180, %v2179
    %v2182 = vrot.slane %v2141, 3
    %v2183 = vsel %vm88, %v2182, %v2181
    %v2184 = vrot.slane %v2142, 2
    %v2185 = vsel %vm91, %v2184, %v2183
    %v2186 = vrot.slane %v2143, 1
    %v2187 = vsel %vm94, %v2186, %v2185
    %v2190 = vsel %vm277, %v2173, 0.0
    %2191 = vadd.xlane.f32.xlu0 %v2190
    %v2192 = vpop.xlane.xlu0 %2191
    %v2193 = vsel %vm277, %v2187, 0.0
    %2194 = vadd.xlane.f32.xlu0 %v2193
    %v2195 = vpop.xlane.xlu0 %2194
    %v2196 = vmul.f32 %v2192, %v592
    %v2197 = vmul.f32 %v2195, %v592
    %v2198 = vadd.f32 %v2196, 1e-05
    %v2199 = vadd.f32 %v2197, 1e-05
    %v2200 = vrsqrt.pop %v2198
    %v2201 = vrsqrt.pop %v2199
    %v2204 = vrot.slane %v2200, 1
    %v2205 = vrot.slane %v2200, 2
    %v2206 = vrot.slane %v2200, 3
    %v2207 = vrot.slane %v2200, 4
    %v2208 = vrot.slane %v2200, 5
    %v2209 = vrot.slane %v2200, 6
    %v2210 = vrot.slane %v2200, 7
    %v2211 = vrot.slane %v2201, 1
    %v2212 = vrot.slane %v2201, 2
    %v2213 = vrot.slane %v2201, 3
    %v2214 = vrot.slane %v2201, 4
    %v2215 = vrot.slane %v2201, 5
    %v2216 = vrot.slane %v2201, 6
    %v2217 = vrot.slane %v2201, 7
    %v2234 = vmul.f32 %v2112, %v2200
    %v2235 = vmul.f32 %v2113, %v2204
    %v2236 = vmul.f32 %v2114, %v2205
    %v2237 = vmul.f32 %v2115, %v2206
    %v2238 = vmul.f32 %v2116, %v2207
    %v2239 = vmul.f32 %v2117, %v2208
    %v2240 = vmul.f32 %v2118, %v2209
    %v2241 = vmul.f32 %v2119, %v2210
    %v2242 = vmul.f32 %v2120, %v2201
    %v2243 = vmul.f32 %v2121, %v2211
    %v2244 = vmul.f32 %v2122, %v2212
    %v2245 = vmul.f32 %v2123, %v2213
    %v2246 = vmul.f32 %v2124, %v2214
    %v2247 = vmul.f32 %v2125, %v2215
    %v2248 = vmul.f32 %v2126, %v2216
    %v2249 = vmul.f32 %v2127, %v2217
    %v2250 = vmul.f32 %v2234, %v46
    %v2251 = vmul.f32 %v2235, %v46
    %v2252 = vmul.f32 %v2236, %v46
    %v2253 = vmul.f32 %v2237, %v46
    %v2254 = vmul.f32 %v2238, %v46
    %v2255 = vmul.f32 %v2239, %v46
    %v2256 = vmul.f32 %v2240, %v46
    %v2257 = vmul.f32 %v2241, %v46
    %v2258 = vmul.f32 %v2242, %v46
    %v2259 = vmul.f32 %v2243, %v46
    %v2260 = vmul.f32 %v2244, %v46
    %v2261 = vmul.f32 %v2245, %v46
    %v2262 = vmul.f32 %v2246, %v46
    %v2263 = vmul.f32 %v2247, %v46
    %v2264 = vmul.f32 %v2248, %v46
    %v2265 = vmul.f32 %v2249, %v46
    %v2266 = vadd.f32 %v2250, %v50
    %v2267 = vadd.f32 %v2251, %v50
    %v2268 = vadd.f32 %v2252, %v50
    %v2269 = vadd.f32 %v2253, %v50
    %v2270 = vadd.f32 %v2254, %v50
    %v2271 = vadd.f32 %v2255, %v50
    %v2272 = vadd.f32 %v2256, %v50
    %v2273 = vadd.f32 %v2257, %v50
    %v2274 = vadd.f32 %v2258, %v50
    %v2275 = vadd.f32 %v2259, %v50
    %v2276 = vadd.f32 %v2260, %v50
    %v2277 = vadd.f32 %v2261, %v50
    %v2278 = vadd.f32 %v2262, %v50
    %v2279 = vadd.f32 %v2263, %v50
    %v2280 = vadd.f32 %v2264, %v50
    %v2281 = vadd.f32 %v2265, %v50
    %2282 = vst.msk [vmem:[#allocation2 + $0x2] sm:$0x1] %vm797, %v2266
    %2283 = vst.msk [vmem:[#allocation2 + $0x6] sm:$0x1] %vm797, %v2267
    %2284 = vst.msk [vmem:[#allocation2 + $0xa] sm:$0x1] %vm797, %v2268
    %2285 = vst.msk [vmem:[#allocation2 + $0xe] sm:$0x1] %vm797, %v2269
    %2286 = vst.msk [vmem:[#allocation2 + $0x12] sm:$0x1] %vm797, %v2270
    %2287 = vst.msk [vmem:[#allocation2 + $0x16] sm:$0x1] %vm797, %v2271
    %2288 = vst.msk [vmem:[#allocation2 + $0x1a] sm:$0x1] %vm797, %v2272
    %2289 = vst.msk [vmem:[#allocation2 + $0x1e] sm:$0x1] %vm797, %v2273
    %2290 = vst.msk [vmem:[#allocation2 + $0x22] sm:$0x1] %vm797, %v2274
    %2291 = vst.msk [vmem:[#allocation2 + $0x26] sm:$0x1] %vm797, %v2275
    %2292 = vst.msk [vmem:[#allocation2 + $0x2a] sm:$0x1] %vm797, %v2276
    %2293 = vst.msk [vmem:[#allocation2 + $0x2e] sm:$0x1] %vm797, %v2277
    %2294 = vst.msk [vmem:[#allocation2 + $0x32] sm:$0x1] %vm797, %v2278
    %2295 = vst.msk [vmem:[#allocation2 + $0x36] sm:$0x1] %vm797, %v2279
    %2296 = vst.msk [vmem:[#allocation2 + $0x3a] sm:$0x1] %vm797, %v2280
    %2297 = vst.msk [vmem:[#allocation2 + $0x3e] sm:$0x1] %vm797, %v2281
    %v2298 = vld [vmem:[%s0 + $0x3] sm:$0x1]
    %v2299 = vld [vmem:[%s0 + $0x7] sm:$0x1]
    %v2300 = vld [vmem:[%s0 + $0xb] sm:$0x1]
    %v2301 = vld [vmem:[%s0 + $0xf] sm:$0x1]
    %v2302 = vld [vmem:[%s0 + $0x13] sm:$0x1]
    %v2303 = vld [vmem:[%s0 + $0x17] sm:$0x1]
    %v2304 = vld [vmem:[%s0 + $0x1b] sm:$0x1]
    %v2305 = vld [vmem:[%s0 + $0x1f] sm:$0x1]
    %v2306 = vld [vmem:[%s0 + $0x23] sm:$0x1]
    %v2307 = vld [vmem:[%s0 + $0x27] sm:$0x1]
    %v2308 = vld [vmem:[%s0 + $0x2b] sm:$0x1]
    %v2309 = vld [vmem:[%s0 + $0x2f] sm:$0x1]
    %v2310 = vld [vmem:[%s0 + $0x33] sm:$0x1]
    %v2311 = vld [vmem:[%s0 + $0x37] sm:$0x1]
    %v2312 = vld [vmem:[%s0 + $0x3b] sm:$0x1]
    %v2313 = vld [vmem:[%s0 + $0x3f] sm:$0x1]
    %v2322 = vrot.slane %v2299, 7
    %v2323 = vsel %vm76, %v2322, %v2298
    %v2324 = vrot.slane %v2300, 6
    %v2325 = vsel %vm79, %v2324, %v2323
    %v2326 = vrot.slane %v2301, 5
    %v2327 = vsel %vm82, %v2326, %v2325
    %v2328 = vrot.slane %v2302, 4
    %v2329 = vsel %vm85, %v2328, %v2327
    %v2330 = vrot.slane %v2303, 3
    %v2331 = vsel %vm88, %v2330, %v2329
    %v2332 = vrot.slane %v2304, 2
    %v2333 = vsel %vm91, %v2332, %v2331
    %v2334 = vrot.slane %v2305, 1
    %v2335 = vsel %vm94, %v2334, %v2333
    %2337 = vmatprep.subr.mxu0 0.0
    %2338 = vmatpush1.msra.mxu0 %v2335
    %2339 = vmatprep.subr.mxu0 0.0
    %2340 = vmatpush1.msra.mxu0 0.0
    %2341 = vmatprep.subr.mxu0 0.0
    %2342 = vmatpush1.msra.mxu0 0.0
    %2343 = vmatprep.subr.mxu0 0.0
    %2344 = vmatpush1.msra.mxu0 0.0
    %2345 = vmatprep.subr.mxu0 0.0
    %2346 = vmatpush1.msra.mxu0 0.0
    %2347 = vmatprep.subr.mxu0 0.0
    %2348 = vmatpush1.msra.mxu0 0.0
    %2349 = vmatprep.subr.mxu0 0.0
    %2350 = vmatpush1.msra.mxu0 0.0
    %2351 = vmatprep.subr.mxu0 0.0
    %2352 = vmatpush1.msra.mxu0 0.0
    %2353 = vmatprep.subr.mxu0 0.0
    %2354 = vmatpush1.msra.mxu0 0.0
    %2355 = vmatprep.subr.mxu0 0.0
    %2356 = vmatpush1.msra.mxu0 0.0
    %2357 = vmatprep.subr.mxu0 0.0
    %2358 = vmatpush1.msra.mxu0 0.0
    %2359 = vmatprep.subr.mxu0 0.0
    %2360 = vmatpush1.msra.mxu0 0.0
    %2361 = vmatprep.subr.mxu0 0.0
    %2362 = vmatpush1.msra.mxu0 0.0
    %2363 = vmatprep.subr.mxu0 0.0
    %2364 = vmatpush1.msra.mxu0 0.0
    %2365 = vmatprep.subr.mxu0 0.0
    %2366 = vmatpush1.msra.mxu0 0.0
    %2367 = vmatprep.subr.mxu0 0.0
    %2368 = vmatpush1.msra.mxu0 0.0
    %2369 = vmatprep.subr.mxu0 0.0
    %2370 = vmatpush1.msra.mxu0 0.0
    %2371 = vmatprep.subr.mxu0 0.0
    %2372 = vmatpush1.msra.mxu0 0.0
    %2373 = vmatprep.subr.mxu0 0.0
    %2374 = vmatpush1.msra.mxu0 0.0
    %2375 = vmatprep.subr.mxu0 0.0
    %2376 = vmatpush1.msra.mxu0 0.0
    %2377 = vmatprep.subr.mxu0 0.0
    %2378 = vmatpush1.msra.mxu0 0.0
    %2379 = vmatprep.subr.mxu0 0.0
    %2380 = vmatpush1.msra.mxu0 0.0
    %2381 = vmatprep.subr.mxu0 0.0
    %2382 = vmatpush1.msra.mxu0 0.0
    %2383 = vmatprep.subr.mxu0 0.0
    %2384 = vmatpush1.msra.mxu0 0.0
    %2385 = vmatprep.subr.mxu0 0.0
    %2386 = vmatpush1.msra.mxu0 0.0
    %2387 = vmatprep.subr.mxu0 0.0
    %2388 = vmatpush1.msra.mxu0 0.0
    %2389 = vmatprep.subr.mxu0 0.0
    %2390 = vmatpush1.msra.mxu0 0.0
    %2391 = vmatprep.subr.mxu0 0.0
    %2392 = vmatpush1.msra.mxu0 0.0
    %2393 = vmatprep.subr.mxu0 0.0
    %2394 = vmatpush1.msra.mxu0 0.0
    %2395 = vmatprep.subr.mxu0 0.0
    %2396 = vmatpush1.msra.mxu0 0.0
    %2397 = vmatprep.subr.mxu0 0.0
    %2398 = vmatpush1.msra.mxu0 0.0
    %2399 = vmatprep.subr.mxu0 0.0
    %2400 = vmatpush1.msra.mxu0 0.0
    %2401 = vmatprep.mubr.f32.mxu0 0.0
    %2402 = vmatmul.mubr.f32.gmra.mrb[0].mxu0 %v99
    %v2403 = vpop.f32.mrb[0].mxu0
    %v2404 = vadd.f32 0.0, %v2403
    %v2405 = vpop.f32.mrb[0].mxu0
    %2406 = vmatprep.mubr.f32.mxu0 0.0
    %2407 = vmatmul.mubr.f32.gmra.mrb[0].mxu0 %v102
    %v2408 = vpop.f32.mrb[0].mxu0
    %v2409 = vadd.f32 0.0, %v2408
    %v2410 = vpop.f32.mrb[0].mxu0
    %2411 = vdwg.mxu0
    %v2420 = vrot.slane %v2307, 7
    %v2421 = vsel %vm76, %v2420, %v2306
    %v2422 = vrot.slane %v2308, 6
    %v2423 = vsel %vm79, %v2422, %v2421
    %v2424 = vrot.slane %v2309, 5
    %v2425 = vsel %vm82, %v2424, %v2423
    %v2426 = vrot.slane %v2310, 4
    %v2427 = vsel %vm85, %v2426, %v2425
    %v2428 = vrot.slane %v2311, 3
    %v2429 = vsel %vm88, %v2428, %v2427
    %v2430 = vrot.slane %v2312, 2
    %v2431 = vsel %vm91, %v2430, %v2429
    %v2432 = vrot.slane %v2313, 1
    %v2433 = vsel %vm94, %v2432, %v2431
    %2435 = vmatprep.subr.mxu0 0.0
    %2436 = vmatpush1.msra.mxu0 %v2433
    %2437 = vmatprep.subr.mxu0 0.0
    %2438 = vmatpush1.msra.mxu0 0.0
    %2439 = vmatprep.subr.mxu0 0.0
    %2440 = vmatpush1.msra.mxu0 0.0
    %2441 = vmatprep.subr.mxu0 0.0
    %2442 = vmatpush1.msra.mxu0 0.0
    %2443 = vmatprep.subr.mxu0 0.0
    %2444 = vmatpush1.msra.mxu0 0.0
    %2445 = vmatprep.subr.mxu0 0.0
    %2446 = vmatpush1.msra.mxu0 0.0
    %2447 = vmatprep.subr.mxu0 0.0
    %2448 = vmatpush1.msra.mxu0 0.0
    %2449 = vmatprep.subr.mxu0 0.0
    %2450 = vmatpush1.msra.mxu0 0.0
    %2451 = vmatprep.subr.mxu0 0.0
    %2452 = vmatpush1.msra.mxu0 0.0
    %2453 = vmatprep.subr.mxu0 0.0
    %2454 = vmatpush1.msra.mxu0 0.0
    %2455 = vmatprep.subr.mxu0 0.0
    %2456 = vmatpush1.msra.mxu0 0.0
    %2457 = vmatprep.subr.mxu0 0.0
    %2458 = vmatpush1.msra.mxu0 0.0
    %2459 = vmatprep.subr.mxu0 0.0
    %2460 = vmatpush1.msra.mxu0 0.0
    %2461 = vmatprep.subr.mxu0 0.0
    %2462 = vmatpush1.msra.mxu0 0.0
    %2463 = vmatprep.subr.mxu0 0.0
    %2464 = vmatpush1.msra.mxu0 0.0
    %2465 = vmatprep.subr.mxu0 0.0
    %2466 = vmatpush1.msra.mxu0 0.0
    %2467 = vmatprep.subr.mxu0 0.0
    %2468 = vmatpush1.msra.mxu0 0.0
    %2469 = vmatprep.subr.mxu0 0.0
    %2470 = vmatpush1.msra.mxu0 0.0
    %2471 = vmatprep.subr.mxu0 0.0
    %2472 = vmatpush1.msra.mxu0 0.0
    %2473 = vmatprep.subr.mxu0 0.0
    %2474 = vmatpush1.msra.mxu0 0.0
    %2475 = vmatprep.subr.mxu0 0.0
    %2476 = vmatpush1.msra.mxu0 0.0
    %2477 = vmatprep.subr.mxu0 0.0
    %2478 = vmatpush1.msra.mxu0 0.0
    %2479 = vmatprep.subr.mxu0 0.0
    %2480 = vmatpush1.msra.mxu0 0.0
    %2481 = vmatprep.subr.mxu0 0.0
    %2482 = vmatpush1.msra.mxu0 0.0
    %2483 = vmatprep.subr.mxu0 0.0
    %2484 = vmatpush1.msra.mxu0 0.0
    %2485 = vmatprep.subr.mxu0 0.0
    %2486 = vmatpush1.msra.mxu0 0.0
    %2487 = vmatprep.subr.mxu0 0.0
    %2488 = vmatpush1.msra.mxu0 0.0
    %2489 = vmatprep.subr.mxu0 0.0
    %2490 = vmatpush1.msra.mxu0 0.0
    %2491 = vmatprep.subr.mxu0 0.0
    %2492 = vmatpush1.msra.mxu0 0.0
    %2493 = vmatprep.subr.mxu0 0.0
    %2494 = vmatpush1.msra.mxu0 0.0
    %2495 = vmatprep.subr.mxu0 0.0
    %2496 = vmatpush1.msra.mxu0 0.0
    %2497 = vmatprep.subr.mxu0 0.0
    %2498 = vmatpush1.msra.mxu0 0.0
    %2499 = vmatprep.mubr.f32.mxu0 0.0
    %2500 = vmatmul.mubr.f32.gmra.mrb[0].mxu0 %v99
    %v2501 = vpop.f32.mrb[0].mxu0
    %v2502 = vadd.f32 0.0, %v2501
    %v2503 = vpop.f32.mrb[0].mxu0
    %2504 = vmatprep.mubr.f32.mxu0 0.0
    %2505 = vmatmul.mubr.f32.gmra.mrb[0].mxu0 %v102
    %v2506 = vpop.f32.mrb[0].mxu0
    %v2507 = vadd.f32 0.0, %v2506
    %v2508 = vpop.f32.mrb[0].mxu0
    %2509 = vdwg.mxu0
    %v2510 = vsel %vm277, %v2404, -inf
    %2511 = vmax.xlane.f32.xlu0 %v2510
    %v2512 = vpop.xlane.xlu0 %2511
    %v2513 = vsel %vm277, %v2409, -inf
    %2514 = vmax.xlane.f32.xlu0 %v2513
    %v2515 = vpop.xlane.xlu0 %2514
    %v2516 = vsel %vm277, %v2502, -inf
    %2517 = vmax.xlane.f32.xlu0 %v2516
    %v2518 = vpop.xlane.xlu0 %2517
    %v2519 = vsel %vm277, %v2507, -inf
    %2520 = vmax.xlane.f32.xlu0 %v2519
    %v2521 = vpop.xlane.xlu0 %2520
    %v2522 = vsub.f32 %v2404, %v2512
    %v2523 = vsub.f32 %v2409, %v2515
    %v2524 = vsub.f32 %v2502, %v2518
    %v2525 = vsub.f32 %v2507, %v2521
    %v2526 = vmul.f32 %v2522, 1.442695
    %v2527 = vpow.pop %v2526
    %v2528 = vmul.f32 %v2523, 1.442695
    %v2529 = vpow.pop %v2528
    %v2530 = vmul.f32 %v2524, 1.442695
    %v2531 = vpow.pop %v2530
    %v2532 = vmul.f32 %v2525, 1.442695
    %v2533 = vpow.pop %v2532
    %v2534 = vsel %vm277, %v2527, 0.0
    %2535 = vadd.xlane.f32.xlu0 %v2534
    %v2536 = vpop.xlane.xlu0 %2535
    %v2537 = vsel %vm277, %v2529, 0.0
    %2538 = vadd.xlane.f32.xlu0 %v2537
    %v2539 = vpop.xlane.xlu0 %2538
    %v2540 = vsel %vm277, %v2531, 0.0
    %2541 = vadd.xlane.f32.xlu0 %v2540
    %v2542 = vpop.xlane.xlu0 %2541
    %v2543 = vsel %vm277, %v2533, 0.0
    %2544 = vadd.xlane.f32.xlu0 %v2543
    %v2545 = vpop.xlane.xlu0 %2544
    %v2546 = vrcp.pop %v2536
    %v2547 = vrcp.pop %v2539
    %v2548 = vrcp.pop %v2542
    %v2549 = vrcp.pop %v2545
    %v2550 = vmul.f32 %v2527, %v2546
    %v2551 = vmul.f32 %v2529, %v2547
    %v2552 = vmul.f32 %v2531, %v2548
    %v2553 = vmul.f32 %v2533, %v2549
    %v2554 = vsel %vm277, %v2550, 0.0
    %v2555 = vsel %vm277, %v2551, 0.0
    %v2556 = vadd.f32 %v2554, %v2555
    %v2557 = vrot.slane %v2556, 4
    %v2558 = vadd.f32 %v2556, %v2557
    %v2559 = vrot.slane %v2558, 2
    %v2560 = vadd.f32 %v2558, %v2559
    %v2561 = vrot.slane %v2560, 1
    %v2562 = vadd.f32 %v2560, %v2561
    %v2563 = vsel %vm277, %v2552, 0.0
    %v2564 = vsel %vm277, %v2553, 0.0
    %v2565 = vadd.f32 %v2563, %v2564
    %v2566 = vrot.slane %v2565, 4
    %v2567 = vadd.f32 %v2565, %v2566
    %v2568 = vrot.slane %v2567, 2
    %v2569 = vadd.f32 %v2567, %v2568
    %v2570 = vrot.slane %v2569, 1
    %v2571 = vadd.f32 %v2569, %v2570
    %v2572 = vadd.f32 %v2562, 1e-09
    %v2573 = vadd.f32 %v2571, 1e-09
    %v2574 = vrcp.pop %v2572
    %v2575 = vrcp.pop %v2573
    %v2576 = vmul.f32 %v2550, %v2574
    %v2577 = vmul.f32 %v2551, %v2574
    %v2578 = vmul.f32 %v2552, %v2575
    %v2579 = vmul.f32 %v2553, %v2575
    %2580 = vmatprep.subr.mxu0 0.0
    %2581 = vmatpush1.msra.mxu0 %v2576
    %2582 = vmatprep.subr.mxu0 0.0
    %2583 = vmatpush1.msra.mxu0 %v2577
    %2584 = vmatprep.subr.mxu0 0.0
    %2585 = vmatpush1.msra.mxu0 0.0
    %2586 = vmatprep.subr.mxu0 0.0
    %2587 = vmatpush1.msra.mxu0 0.0
    %2588 = vmatprep.subr.mxu0 0.0
    %2589 = vmatpush1.msra.mxu0 0.0
    %2590 = vmatprep.subr.mxu0 0.0
    %2591 = vmatpush1.msra.mxu0 0.0
    %2592 = vmatprep.subr.mxu0 0.0
    %2593 = vmatpush1.msra.mxu0 0.0
    %2594 = vmatprep.subr.mxu0 0.0
    %2595 = vmatpush1.msra.mxu0 0.0
    %2596 = vmatprep.subr.mxu0 0.0
    %2597 = vmatpush1.msra.mxu0 0.0
    %2598 = vmatprep.subr.mxu0 0.0
    %2599 = vmatpush1.msra.mxu0 0.0
    %2600 = vmatprep.subr.mxu0 0.0
    %2601 = vmatpush1.msra.mxu0 0.0
    %2602 = vmatprep.subr.mxu0 0.0
    %2603 = vmatpush1.msra.mxu0 0.0
    %2604 = vmatprep.subr.mxu0 0.0
    %2605 = vmatpush1.msra.mxu0 0.0
    %2606 = vmatprep.subr.mxu0 0.0
    %2607 = vmatpush1.msra.mxu0 0.0
    %2608 = vmatprep.subr.mxu0 0.0
    %2609 = vmatpush1.msra.mxu0 0.0
    %2610 = vmatprep.subr.mxu0 0.0
    %2611 = vmatpush1.msra.mxu0 0.0
    %2612 = vmatprep.subr.mxu0 0.0
    %2613 = vmatpush1.msra.mxu0 0.0
    %2614 = vmatprep.subr.mxu0 0.0
    %2615 = vmatpush1.msra.mxu0 0.0
    %2616 = vmatprep.subr.mxu0 0.0
    %2617 = vmatpush1.msra.mxu0 0.0
    %2618 = vmatprep.subr.mxu0 0.0
    %2619 = vmatpush1.msra.mxu0 0.0
    %2620 = vmatprep.subr.mxu0 0.0
    %2621 = vmatpush1.msra.mxu0 0.0
    %2622 = vmatprep.subr.mxu0 0.0
    %2623 = vmatpush1.msra.mxu0 0.0
    %2624 = vmatprep.subr.mxu0 0.0
    %2625 = vmatpush1.msra.mxu0 0.0
    %2626 = vmatprep.subr.mxu0 0.0
    %2627 = vmatpush1.msra.mxu0 0.0
    %2628 = vmatprep.subr.mxu0 0.0
    %2629 = vmatpush1.msra.mxu0 0.0
    %2630 = vmatprep.subr.mxu0 0.0
    %2631 = vmatpush1.msra.mxu0 0.0
    %2632 = vmatprep.subr.mxu0 0.0
    %2633 = vmatpush1.msra.mxu0 0.0
    %2634 = vmatprep.subr.mxu0 0.0
    %2635 = vmatpush1.msra.mxu0 0.0
    %2636 = vmatprep.subr.mxu0 0.0
    %2637 = vmatpush1.msra.mxu0 0.0
    %2638 = vmatprep.subr.mxu0 0.0
    %2639 = vmatpush1.msra.mxu0 0.0
    %2640 = vmatprep.subr.mxu0 0.0
    %2641 = vmatpush1.msra.mxu0 0.0
    %2642 = vmatprep.subr.mxu0 0.0
    %2643 = vmatpush1.msra.mxu0 0.0
    %2644 = vmatprep.mubr.f32.mxu0 0.0
    %2645 = vmatmul.mubr.f32.gmra.mrb[0].mxu0 %v350
    %v2646 = vpop.f32.mrb[0].mxu0
    %v2647 = vadd.f32 0.0, %v2646
    %v2648 = vpop.f32.mrb[0].mxu0
    %2649 = vdwg.mxu0
    %2650 = vmatprep.subr.mxu0 0.0
    %2651 = vmatpush1.msra.mxu0 %v2578
    %2652 = vmatprep.subr.mxu0 0.0
    %2653 = vmatpush1.msra.mxu0 %v2579
    %2654 = vmatprep.subr.mxu0 0.0
    %2655 = vmatpush1.msra.mxu0 0.0
    %2656 = vmatprep.subr.mxu0 0.0
    %2657 = vmatpush1.msra.mxu0 0.0
    %2658 = vmatprep.subr.mxu0 0.0
    %2659 = vmatpush1.msra.mxu0 0.0
    %2660 = vmatprep.subr.mxu0 0.0
    %2661 = vmatpush1.msra.mxu0 0.0
    %2662 = vmatprep.subr.mxu0 0.0
    %2663 = vmatpush1.msra.mxu0 0.0
    %2664 = vmatprep.subr.mxu0 0.0
    %2665 = vmatpush1.msra.mxu0 0.0
    %2666 = vmatprep.subr.mxu0 0.0
    %2667 = vmatpush1.msra.mxu0 0.0
    %2668 = vmatprep.subr.mxu0 0.0
    %2669 = vmatpush1.msra.mxu0 0.0
    %2670 = vmatprep.subr.mxu0 0.0
    %2671 = vmatpush1.msra.mxu0 0.0
    %2672 = vmatprep.subr.mxu0 0.0
    %2673 = vmatpush1.msra.mxu0 0.0
    %2674 = vmatprep.subr.mxu0 0.0
    %2675 = vmatpush1.msra.mxu0 0.0
    %2676 = vmatprep.subr.mxu0 0.0
    %2677 = vmatpush1.msra.mxu0 0.0
    %2678 = vmatprep.subr.mxu0 0.0
    %2679 = vmatpush1.msra.mxu0 0.0
    %2680 = vmatprep.subr.mxu0 0.0
    %2681 = vmatpush1.msra.mxu0 0.0
    %2682 = vmatprep.subr.mxu0 0.0
    %2683 = vmatpush1.msra.mxu0 0.0
    %2684 = vmatprep.subr.mxu0 0.0
    %2685 = vmatpush1.msra.mxu0 0.0
    %2686 = vmatprep.subr.mxu0 0.0
    %2687 = vmatpush1.msra.mxu0 0.0
    %2688 = vmatprep.subr.mxu0 0.0
    %2689 = vmatpush1.msra.mxu0 0.0
    %2690 = vmatprep.subr.mxu0 0.0
    %2691 = vmatpush1.msra.mxu0 0.0
    %2692 = vmatprep.subr.mxu0 0.0
    %2693 = vmatpush1.msra.mxu0 0.0
    %2694 = vmatprep.subr.mxu0 0.0
    %2695 = vmatpush1.msra.mxu0 0.0
    %2696 = vmatprep.subr.mxu0 0.0
    %2697 = vmatpush1.msra.mxu0 0.0
    %2698 = vmatprep.subr.mxu0 0.0
    %2699 = vmatpush1.msra.mxu0 0.0
    %2700 = vmatprep.subr.mxu0 0.0
    %2701 = vmatpush1.msra.mxu0 0.0
    %2702 = vmatprep.subr.mxu0 0.0
    %2703 = vmatpush1.msra.mxu0 0.0
    %2704 = vmatprep.subr.mxu0 0.0
    %2705 = vmatpush1.msra.mxu0 0.0
    %2706 = vmatprep.subr.mxu0 0.0
    %2707 = vmatpush1.msra.mxu0 0.0
    %2708 = vmatprep.subr.mxu0 0.0
    %2709 = vmatpush1.msra.mxu0 0.0
    %2710 = vmatprep.subr.mxu0 0.0
    %2711 = vmatpush1.msra.mxu0 0.0
    %2712 = vmatprep.subr.mxu0 0.0
    %2713 = vmatpush1.msra.mxu0 0.0
    %2714 = vmatprep.mubr.f32.mxu0 0.0
    %2715 = vmatmul.mubr.f32.gmra.mrb[0].mxu0 %v350
    %v2716 = vpop.f32.mrb[0].mxu0
    %v2717 = vadd.f32 0.0, %v2716
    %v2718 = vpop.f32.mrb[0].mxu0
    %2719 = vdwg.mxu0
    %v2722 = vrot.slane %v2647, 1
    %v2723 = vrot.slane %v2647, 2
    %v2724 = vrot.slane %v2647, 3
    %v2725 = vrot.slane %v2647, 4
    %v2726 = vrot.slane %v2647, 5
    %v2727 = vrot.slane %v2647, 6
    %v2728 = vrot.slane %v2647, 7
    %v2729 = vrot.slane %v2717, 1
    %v2730 = vrot.slane %v2717, 2
    %v2731 = vrot.slane %v2717, 3
    %v2732 = vrot.slane %v2717, 4
    %v2733 = vrot.slane %v2717, 5
    %v2734 = vrot.slane %v2717, 6
    %v2735 = vrot.slane %v2717, 7
    %v2752 = vadd.f32 %v2298, %v2647
    %v2753 = vadd.f32 %v2299, %v2722
    %v2754 = vadd.f32 %v2300, %v2723
    %v2755 = vadd.f32 %v2301, %v2724
    %v2756 = vadd.f32 %v2302, %v2725
    %v2757 = vadd.f32 %v2303, %v2726
    %v2758 = vadd.f32 %v2304, %v2727
    %v2759 = vadd.f32 %v2305, %v2728
    %v2760 = vadd.f32 %v2306, %v2717
    %v2761 = vadd.f32 %v2307, %v2729
    %v2762 = vadd.f32 %v2308, %v2730
    %v2763 = vadd.f32 %v2309, %v2731
    %v2764 = vadd.f32 %v2310, %v2732
    %v2765 = vadd.f32 %v2311, %v2733
    %v2766 = vadd.f32 %v2312, %v2734
    %v2767 = vadd.f32 %v2313, %v2735
    %v2784 = vrot.slane %v2753, 7
    %v2785 = vsel %vm76, %v2784, %v2752
    %v2786 = vrot.slane %v2754, 6
    %v2787 = vsel %vm79, %v2786, %v2785
    %v2788 = vrot.slane %v2755, 5
    %v2789 = vsel %vm82, %v2788, %v2787
    %v2790 = vrot.slane %v2756, 4
    %v2791 = vsel %vm85, %v2790, %v2789
    %v2792 = vrot.slane %v2757, 3
    %v2793 = vsel %vm88, %v2792, %v2791
    %v2794 = vrot.slane %v2758, 2
    %v2795 = vsel %vm91, %v2794, %v2793
    %v2796 = vrot.slane %v2759, 1
    %v2797 = vsel %vm94, %v2796, %v2795
    %v2798 = vrot.slane %v2761, 7
    %v2799 = vsel %vm76, %v2798, %v2760
    %v2800 = vrot.slane %v2762, 6
    %v2801 = vsel %vm79, %v2800, %v2799
    %v2802 = vrot.slane %v2763, 5
    %v2803 = vsel %vm82, %v2802, %v2801
    %v2804 = vrot.slane %v2764, 4
    %v2805 = vsel %vm85, %v2804, %v2803
    %v2806 = vrot.slane %v2765, 3
    %v2807 = vsel %vm88, %v2806, %v2805
    %v2808 = vrot.slane %v2766, 2
    %v2809 = vsel %vm91, %v2808, %v2807
    %v2810 = vrot.slane %v2767, 1
    %v2811 = vsel %vm94, %v2810, %v2809
    %v2814 = vsel %vm277, %v2797, 0.0
    %2815 = vadd.xlane.f32.xlu0 %v2814
    %v2816 = vpop.xlane.xlu0 %2815
    %v2817 = vsel %vm277, %v2811, 0.0
    %2818 = vadd.xlane.f32.xlu0 %v2817
    %v2819 = vpop.xlane.xlu0 %2818
    %v2820 = vmul.f32 %v2816, %v592
    %v2821 = vmul.f32 %v2819, %v592
    %v2824 = vrot.slane %v2820, 1
    %v2825 = vrot.slane %v2820, 2
    %v2826 = vrot.slane %v2820, 3
    %v2827 = vrot.slane %v2820, 4
    %v2828 = vrot.slane %v2820, 5
    %v2829 = vrot.slane %v2820, 6
    %v2830 = vrot.slane %v2820, 7
    %v2831 = vrot.slane %v2821, 1
    %v2832 = vrot.slane %v2821, 2
    %v2833 = vrot.slane %v2821, 3
    %v2834 = vrot.slane %v2821, 4
    %v2835 = vrot.slane %v2821, 5
    %v2836 = vrot.slane %v2821, 6
    %v2837 = vrot.slane %v2821, 7
    %v2854 = vsub.f32 %v2752, %v2820
    %v2855 = vsub.f32 %v2753, %v2824
    %v2856 = vsub.f32 %v2754, %v2825
    %v2857 = vsub.f32 %v2755, %v2826
    %v2858 = vsub.f32 %v2756, %v2827
    %v2859 = vsub.f32 %v2757, %v2828
    %v2860 = vsub.f32 %v2758, %v2829
    %v2861 = vsub.f32 %v2759, %v2830
    %v2862 = vsub.f32 %v2760, %v2821
    %v2863 = vsub.f32 %v2761, %v2831
    %v2864 = vsub.f32 %v2762, %v2832
    %v2865 = vsub.f32 %v2763, %v2833
    %v2866 = vsub.f32 %v2764, %v2834
    %v2867 = vsub.f32 %v2765, %v2835
    %v2868 = vsub.f32 %v2766, %v2836
    %v2869 = vsub.f32 %v2767, %v2837
    %v2870 = vmul.f32 %v2854, %v2854
    %v2871 = vmul.f32 %v2855, %v2855
    %v2872 = vmul.f32 %v2856, %v2856
    %v2873 = vmul.f32 %v2857, %v2857
    %v2874 = vmul.f32 %v2858, %v2858
    %v2875 = vmul.f32 %v2859, %v2859
    %v2876 = vmul.f32 %v2860, %v2860
    %v2877 = vmul.f32 %v2861, %v2861
    %v2878 = vmul.f32 %v2862, %v2862
    %v2879 = vmul.f32 %v2863, %v2863
    %v2880 = vmul.f32 %v2864, %v2864
    %v2881 = vmul.f32 %v2865, %v2865
    %v2882 = vmul.f32 %v2866, %v2866
    %v2883 = vmul.f32 %v2867, %v2867
    %v2884 = vmul.f32 %v2868, %v2868
    %v2885 = vmul.f32 %v2869, %v2869
    %v2902 = vrot.slane %v2871, 7
    %v2903 = vsel %vm76, %v2902, %v2870
    %v2904 = vrot.slane %v2872, 6
    %v2905 = vsel %vm79, %v2904, %v2903
    %v2906 = vrot.slane %v2873, 5
    %v2907 = vsel %vm82, %v2906, %v2905
    %v2908 = vrot.slane %v2874, 4
    %v2909 = vsel %vm85, %v2908, %v2907
    %v2910 = vrot.slane %v2875, 3
    %v2911 = vsel %vm88, %v2910, %v2909
    %v2912 = vrot.slane %v2876, 2
    %v2913 = vsel %vm91, %v2912, %v2911
    %v2914 = vrot.slane %v2877, 1
    %v2915 = vsel %vm94, %v2914, %v2913
    %v2916 = vrot.slane %v2879, 7
    %v2917 = vsel %vm76, %v2916, %v2878
    %v2918 = vrot.slane %v2880, 6
    %v2919 = vsel %vm79, %v2918, %v2917
    %v2920 = vrot.slane %v2881, 5
    %v2921 = vsel %vm82, %v2920, %v2919
    %v2922 = vrot.slane %v2882, 4
    %v2923 = vsel %vm85, %v2922, %v2921
    %v2924 = vrot.slane %v2883, 3
    %v2925 = vsel %vm88, %v2924, %v2923
    %v2926 = vrot.slane %v2884, 2
    %v2927 = vsel %vm91, %v2926, %v2925
    %v2928 = vrot.slane %v2885, 1
    %v2929 = vsel %vm94, %v2928, %v2927
    %v2932 = vsel %vm277, %v2915, 0.0
    %2933 = vadd.xlane.f32.xlu0 %v2932
    %v2934 = vpop.xlane.xlu0 %2933
    %v2935 = vsel %vm277, %v2929, 0.0
    %2936 = vadd.xlane.f32.xlu0 %v2935
    %v2937 = vpop.xlane.xlu0 %2936
    %v2938 = vmul.f32 %v2934, %v592
    %v2939 = vmul.f32 %v2937, %v592
    %v2940 = vadd.f32 %v2938, 1e-05
    %v2941 = vadd.f32 %v2939, 1e-05
    %v2942 = vrsqrt.pop %v2940
    %v2943 = vrsqrt.pop %v2941
    %v2946 = vrot.slane %v2942, 1
    %v2947 = vrot.slane %v2942, 2
    %v2948 = vrot.slane %v2942, 3
    %v2949 = vrot.slane %v2942, 4
    %v2950 = vrot.slane %v2942, 5
    %v2951 = vrot.slane %v2942, 6
    %v2952 = vrot.slane %v2942, 7
    %v2953 = vrot.slane %v2943, 1
    %v2954 = vrot.slane %v2943, 2
    %v2955 = vrot.slane %v2943, 3
    %v2956 = vrot.slane %v2943, 4
    %v2957 = vrot.slane %v2943, 5
    %v2958 = vrot.slane %v2943, 6
    %v2959 = vrot.slane %v2943, 7
    %v2976 = vmul.f32 %v2854, %v2942
    %v2977 = vmul.f32 %v2855, %v2946
    %v2978 = vmul.f32 %v2856, %v2947
    %v2979 = vmul.f32 %v2857, %v2948
    %v2980 = vmul.f32 %v2858, %v2949
    %v2981 = vmul.f32 %v2859, %v2950
    %v2982 = vmul.f32 %v2860, %v2951
    %v2983 = vmul.f32 %v2861, %v2952
    %v2984 = vmul.f32 %v2862, %v2943
    %v2985 = vmul.f32 %v2863, %v2953
    %v2986 = vmul.f32 %v2864, %v2954
    %v2987 = vmul.f32 %v2865, %v2955
    %v2988 = vmul.f32 %v2866, %v2956
    %v2989 = vmul.f32 %v2867, %v2957
    %v2990 = vmul.f32 %v2868, %v2958
    %v2991 = vmul.f32 %v2869, %v2959
    %v2992 = vmul.f32 %v2976, %v46
    %v2993 = vmul.f32 %v2977, %v46
    %v2994 = vmul.f32 %v2978, %v46
    %v2995 = vmul.f32 %v2979, %v46
    %v2996 = vmul.f32 %v2980, %v46
    %v2997 = vmul.f32 %v2981, %v46
    %v2998 = vmul.f32 %v2982, %v46
    %v2999 = vmul.f32 %v2983, %v46
    %v3000 = vmul.f32 %v2984, %v46
    %v3001 = vmul.f32 %v2985, %v46
    %v3002 = vmul.f32 %v2986, %v46
    %v3003 = vmul.f32 %v2987, %v46
    %v3004 = vmul.f32 %v2988, %v46
    %v3005 = vmul.f32 %v2989, %v46
    %v3006 = vmul.f32 %v2990, %v46
    %v3007 = vmul.f32 %v2991, %v46
    %v3008 = vadd.f32 %v2992, %v50
    %v3009 = vadd.f32 %v2993, %v50
    %v3010 = vadd.f32 %v2994, %v50
    %v3011 = vadd.f32 %v2995, %v50
    %v3012 = vadd.f32 %v2996, %v50
    %v3013 = vadd.f32 %v2997, %v50
    %v3014 = vadd.f32 %v2998, %v50
    %v3015 = vadd.f32 %v2999, %v50
    %v3016 = vadd.f32 %v3000, %v50
    %v3017 = vadd.f32 %v3001, %v50
    %v3018 = vadd.f32 %v3002, %v50
    %v3019 = vadd.f32 %v3003, %v50
    %v3020 = vadd.f32 %v3004, %v50
    %v3021 = vadd.f32 %v3005, %v50
    %v3022 = vadd.f32 %v3006, %v50
    %v3023 = vadd.f32 %v3007, %v50
    %3024 = vst.msk [vmem:[#allocation2 + $0x3] sm:$0x1] %vm797, %v3008
    %3025 = vst.msk [vmem:[#allocation2 + $0x7] sm:$0x1] %vm797, %v3009
    %3026 = vst.msk [vmem:[#allocation2 + $0xb] sm:$0x1] %vm797, %v3010
    %3027 = vst.msk [vmem:[#allocation2 + $0xf] sm:$0x1] %vm797, %v3011
    %3028 = vst.msk [vmem:[#allocation2 + $0x13] sm:$0x1] %vm797, %v3012
    %3029 = vst.msk [vmem:[#allocation2 + $0x17] sm:$0x1] %vm797, %v3013
    %3030 = vst.msk [vmem:[#allocation2 + $0x1b] sm:$0x1] %vm797, %v3014
    %3031 = vst.msk [vmem:[#allocation2 + $0x1f] sm:$0x1] %vm797, %v3015
    %3032 = vst.msk [vmem:[#allocation2 + $0x23] sm:$0x1] %vm797, %v3016
    %3033 = vst.msk [vmem:[#allocation2 + $0x27] sm:$0x1] %vm797, %v3017
    %3034 = vst.msk [vmem:[#allocation2 + $0x2b] sm:$0x1] %vm797, %v3018
    %3035 = vst.msk [vmem:[#allocation2 + $0x2f] sm:$0x1] %vm797, %v3019
    %3036 = vst.msk [vmem:[#allocation2 + $0x33] sm:$0x1] %vm797, %v3020
    %3037 = vst.msk [vmem:[#allocation2 + $0x37] sm:$0x1] %vm797, %v3021
    %3038 = vst.msk [vmem:[#allocation2 + $0x3b] sm:$0x1] %vm797, %v3022
    %3039 = vst.msk [vmem:[#allocation2 + $0x3f] sm:$0x1] %vm797, %v3023
    %v3040 = vld [vmem:[#allocation2] sm:$0xf]
    %v3041 = vld [vmem:[#allocation2 + $0x4] sm:$0xf]
    %v3042 = vld [vmem:[#allocation2 + $0x8] sm:$0xf]
    %v3043 = vld [vmem:[#allocation2 + $0xc] sm:$0xf]
    %v3044 = vld [vmem:[#allocation2 + $0x10] sm:$0xf]
    %v3045 = vld [vmem:[#allocation2 + $0x14] sm:$0xf]
    %v3046 = vld [vmem:[#allocation2 + $0x18] sm:$0xf]
    %v3047 = vld [vmem:[#allocation2 + $0x1c] sm:$0xf]
    %v3048 = vld [vmem:[#allocation2 + $0x20] sm:$0xf]
    %v3049 = vld [vmem:[#allocation2 + $0x24] sm:$0xf]
    %v3050 = vld [vmem:[#allocation2 + $0x28] sm:$0xf]
    %v3051 = vld [vmem:[#allocation2 + $0x2c] sm:$0xf]
    %v3052 = vld [vmem:[#allocation2 + $0x30] sm:$0xf]
    %v3053 = vld [vmem:[#allocation2 + $0x34] sm:$0xf]
    %v3054 = vld [vmem:[#allocation2 + $0x38] sm:$0xf]
    %v3055 = vld [vmem:[#allocation2 + $0x3c] sm:$0xf]
    %v3056 = vld [vmem:[%s3] sm:$0xff]
    %v3057 = vld [vmem:[%s3 + $0x8] sm:$0xff]
    %v3058 = vld [vmem:[%s3 + $0x10] sm:$0xff]
    %v3059 = vld [vmem:[%s3 + $0x18] sm:$0xff]
    %v3060 = vld [vmem:[%s4] sm:$0x1]
    %v3062 = vlaneseq
    %v3063 = vshrl.u32 %v3062, 7
    %v3064 = vsub.s32 0, %v3063
    %v3065 = vrot.slane %v3060, %v3064
    %v3083 = vcombine.low %v3040, %v3041
    %v3084 = vcombine.low %v3042, %v3043
    %v3085 = vcombine.low %v3044, %v3045
    %v3086 = vcombine.low %v3046, %v3047
    %v3087 = vcombine.low %v3048, %v3049
    %v3088 = vcombine.low %v3050, %v3051
    %v3089 = vcombine.low %v3052, %v3053
    %v3090 = vcombine.low %v3054, %v3055
    %v3091 = vsel %vm277, %v3083, 0
    %v3093 = vsel %vm277, %v3084, 0
    %v3095 = vsel %vm277, %v3085, 0
    %v3097 = vsel %vm277, %v3086, 0
    %v3099 = vsel %vm277, %v3087, 0
    %v3101 = vsel %vm277, %v3088, 0
    %v3103 = vsel %vm277, %v3089, 0
    %v3105 = vsel %vm277, %v3090, 0
    %3107 = vmatprep.subr.mxu0 0.0
    %3108 = vmatpush1.msra.mxu0 %v3056
    %3109 = vmatprep.subr.mxu0 0.0
    %3110 = vmatpush1.msra.mxu0 %v3057
    %3111 = vmatprep.subr.mxu0 0.0
    %3112 = vmatpush1.msra.mxu0 %v3058
    %3113 = vmatprep.subr.mxu0 0.0
    %3114 = vmatpush1.msra.mxu0 %v3059
    %3115 = vmatprep.subr.mxu0 0.0
    %3116 = vmatpush1.msra.mxu0 0.0
    %3117 = vmatprep.subr.mxu0 0.0
    %3118 = vmatpush1.msra.mxu0 0.0
    %3119 = vmatprep.subr.mxu0 0.0
    %3120 = vmatpush1.msra.mxu0 0.0
    %3121 = vmatprep.subr.mxu0 0.0
    %3122 = vmatpush1.msra.mxu0 0.0
    %3123 = vmatprep.subr.mxu0 0.0
    %3124 = vmatpush1.msra.mxu0 0.0
    %3125 = vmatprep.subr.mxu0 0.0
    %3126 = vmatpush1.msra.mxu0 0.0
    %3127 = vmatprep.subr.mxu0 0.0
    %3128 = vmatpush1.msra.mxu0 0.0
    %3129 = vmatprep.subr.mxu0 0.0
    %3130 = vmatpush1.msra.mxu0 0.0
    %3131 = vmatprep.subr.mxu0 0.0
    %3132 = vmatpush1.msra.mxu0 0.0
    %3133 = vmatprep.subr.mxu0 0.0
    %3134 = vmatpush1.msra.mxu0 0.0
    %3135 = vmatprep.subr.mxu0 0.0
    %3136 = vmatpush1.msra.mxu0 0.0
    %3137 = vmatprep.subr.mxu0 0.0
    %3138 = vmatpush1.msra.mxu0 0.0
    %3139 = vmatprep.subr.mxu0 0.0
    %3140 = vmatpush1.msra.mxu0 0.0
    %3141 = vmatprep.subr.mxu0 0.0
    %3142 = vmatpush1.msra.mxu0 0.0
    %3143 = vmatprep.subr.mxu0 0.0
    %3144 = vmatpush1.msra.mxu0 0.0
    %3145 = vmatprep.subr.mxu0 0.0
    %3146 = vmatpush1.msra.mxu0 0.0
    %3147 = vmatprep.subr.mxu0 0.0
    %3148 = vmatpush1.msra.mxu0 0.0
    %3149 = vmatprep.subr.mxu0 0.0
    %3150 = vmatpush1.msra.mxu0 0.0
    %3151 = vmatprep.subr.mxu0 0.0
    %3152 = vmatpush1.msra.mxu0 0.0
    %3153 = vmatprep.subr.mxu0 0.0
    %3154 = vmatpush1.msra.mxu0 0.0
    %3155 = vmatprep.subr.mxu0 0.0
    %3156 = vmatpush1.msra.mxu0 0.0
    %3157 = vmatprep.subr.mxu0 0.0
    %3158 = vmatpush1.msra.mxu0 0.0
    %3159 = vmatprep.subr.mxu0 0.0
    %3160 = vmatpush1.msra.mxu0 0.0
    %3161 = vmatprep.subr.mxu0 0.0
    %3162 = vmatpush1.msra.mxu0 0.0
    %3163 = vmatprep.subr.mxu0 0.0
    %3164 = vmatpush1.msra.mxu0 0.0
    %3165 = vmatprep.subr.mxu0 0.0
    %3166 = vmatpush1.msra.mxu0 0.0
    %3167 = vmatprep.subr.mxu0 0.0
    %3168 = vmatpush1.msra.mxu0 0.0
    %3169 = vmatprep.subr.mxu0 0.0
    %3170 = vmatpush1.msra.mxu0 0.0
    %3171 = vmatprep.mubr.f32.mxu0 0.0
    %3172 = vmatmul.mubr.f32.gmra.mrb[0].mxu0 %v3091
    %v3173 = vpop.f32.mrb[0].mxu0
    %v3174 = vadd.f32 %v3065, %v3173
    %v3175 = vpop.f32.mrb[0].mxu0
    %3176 = vmatprep.mubr.f32.mxu0 0.0
    %3177 = vmatmul.mubr.f32.gmra.mrb[0].mxu0 %v3093
    %v3178 = vpop.f32.mrb[0].mxu0
    %v3179 = vadd.f32 %v3065, %v3178
    %v3180 = vpop.f32.mrb[0].mxu0
    %3181 = vmatprep.mubr.f32.mxu0 0.0
    %3182 = vmatmul.mubr.f32.gmra.mrb[0].mxu0 %v3095
    %v3183 = vpop.f32.mrb[0].mxu0
    %v3184 = vadd.f32 %v3065, %v3183
    %v3185 = vpop.f32.mrb[0].mxu0
    %3186 = vmatprep.mubr.f32.mxu0 0.0
    %3187 = vmatmul.mubr.f32.gmra.mrb[0].mxu0 %v3097
    %v3188 = vpop.f32.mrb[0].mxu0
    %v3189 = vadd.f32 %v3065, %v3188
    %v3190 = vpop.f32.mrb[0].mxu0
    %3191 = vmatprep.mubr.f32.mxu0 0.0
    %3192 = vmatmul.mubr.f32.gmra.mrb[0].mxu0 %v3099
    %v3193 = vpop.f32.mrb[0].mxu0
    %v3194 = vadd.f32 %v3065, %v3193
    %v3195 = vpop.f32.mrb[0].mxu0
    %3196 = vmatprep.mubr.f32.mxu0 0.0
    %3197 = vmatmul.mubr.f32.gmra.mrb[0].mxu0 %v3101
    %v3198 = vpop.f32.mrb[0].mxu0
    %v3199 = vadd.f32 %v3065, %v3198
    %v3200 = vpop.f32.mrb[0].mxu0
    %3201 = vmatprep.mubr.f32.mxu0 0.0
    %3202 = vmatmul.mubr.f32.gmra.mrb[0].mxu0 %v3103
    %v3203 = vpop.f32.mrb[0].mxu0
    %v3204 = vadd.f32 %v3065, %v3203
    %v3205 = vpop.f32.mrb[0].mxu0
    %3206 = vmatprep.mubr.f32.mxu0 0.0
    %3207 = vmatmul.mubr.f32.gmra.mrb[0].mxu0 %v3105
    %v3208 = vpop.f32.mrb[0].mxu0
    %v3209 = vadd.f32 %v3065, %v3208
    %v3210 = vpop.f32.mrb[0].mxu0
    %3211 = vdwg.mxu0
    %v3212 = vmax.f32 %v3174, 0.0
    %v3213 = vmax.f32 %v3179, 0.0
    %v3214 = vmax.f32 %v3184, 0.0
    %v3215 = vmax.f32 %v3189, 0.0
    %v3216 = vmax.f32 %v3194, 0.0
    %v3217 = vmax.f32 %v3199, 0.0
    %v3218 = vmax.f32 %v3204, 0.0
    %v3219 = vmax.f32 %v3209, 0.0
    %v3220 = vld [vmem:[%s5] sm:$0xff]
    %v3221 = vld [vmem:[%s5 + $0x8] sm:$0xff]
    %v3222 = vld [vmem:[%s5 + $0x10] sm:$0xff]
    %v3223 = vld [vmem:[%s5 + $0x18] sm:$0xff]
    %v3224 = vld [vmem:[%s5 + $0x20] sm:$0xff]
    %v3225 = vld [vmem:[%s5 + $0x28] sm:$0xff]
    %v3226 = vld [vmem:[%s5 + $0x30] sm:$0xff]
    %v3227 = vld [vmem:[%s5 + $0x38] sm:$0xff]
    %v3228 = vlaneseq
    %v3229 = vshrl.u32 %v3228, 7
    %v3230 = vsub.s32 0, %v3229
    %v3231 = vrot.slane %v39, %v3230
    %vm3232 = vcmask 523264
    %v3234 = vsel %vm3232, %v3212, 0
    %v3237 = vsel %vm3232, %v3213, 0
    %v3240 = vsel %vm3232, %v3214, 0
    %v3243 = vsel %vm3232, %v3215, 0
    %v3246 = vsel %vm3232, %v3216, 0
    %v3249 = vsel %vm3232, %v3217, 0
    %v3252 = vsel %vm3232, %v3218, 0
    %v3255 = vsel %vm3232, %v3219, 0
    %3257 = vmatprep.subr.mxu0 0.0
    %3258 = vmatpush1.msra.mxu0 %v3220
    %3259 = vmatprep.subr.mxu0 0.0
    %3260 = vmatpush1.msra.mxu0 %v3221
    %3261 = vmatprep.subr.mxu0 0.0
    %3262 = vmatpush1.msra.mxu0 %v3222
    %3263 = vmatprep.subr.mxu0 0.0
    %3264 = vmatpush1.msra.mxu0 %v3223
    %3265 = vmatprep.subr.mxu0 0.0
    %3266 = vmatpush1.msra.mxu0 %v3224
    %3267 = vmatprep.subr.mxu0 0.0
    %3268 = vmatpush1.msra.mxu0 %v3225
    %3269 = vmatprep.subr.mxu0 0.0
    %3270 = vmatpush1.msra.mxu0 %v3226
    %3271 = vmatprep.subr.mxu0 0.0
    %3272 = vmatpush1.msra.mxu0 %v3227
    %3273 = vmatprep.subr.mxu0 0.0
    %3274 = vmatpush1.msra.mxu0 0.0
    %3275 = vmatprep.subr.mxu0 0.0
    %3276 = vmatpush1.msra.mxu0 0.0
    %3277 = vmatprep.subr.mxu0 0.0
    %3278 = vmatpush1.msra.mxu0 0.0
    %3279 = vmatprep.subr.mxu0 0.0
    %3280 = vmatpush1.msra.mxu0 0.0
    %3281 = vmatprep.subr.mxu0 0.0
    %3282 = vmatpush1.msra.mxu0 0.0
    %3283 = vmatprep.subr.mxu0 0.0
    %3284 = vmatpush1.msra.mxu0 0.0
    %3285 = vmatprep.subr.mxu0 0.0
    %3286 = vmatpush1.msra.mxu0 0.0
    %3287 = vmatprep.subr.mxu0 0.0
    %3288 = vmatpush1.msra.mxu0 0.0
    %3289 = vmatprep.subr.mxu0 0.0
    %3290 = vmatpush1.msra.mxu0 0.0
    %3291 = vmatprep.subr.mxu0 0.0
    %3292 = vmatpush1.msra.mxu0 0.0
    %3293 = vmatprep.subr.mxu0 0.0
    %3294 = vmatpush1.msra.mxu0 0.0
    %3295 = vmatprep.subr.mxu0 0.0
    %3296 = vmatpush1.msra.mxu0 0.0
    %3297 = vmatprep.subr.mxu0 0.0
    %3298 = vmatpush1.msra.mxu0 0.0
    %3299 = vmatprep.subr.mxu0 0.0
    %3300 = vmatpush1.msra.mxu0 0.0
    %3301 = vmatprep.subr.mxu0 0.0
    %3302 = vmatpush1.msra.mxu0 0.0
    %3303 = vmatprep.subr.mxu0 0.0
    %3304 = vmatpush1.msra.mxu0 0.0
    %3305 = vmatprep.subr.mxu0 0.0
    %3306 = vmatpush1.msra.mxu0 0.0
    %3307 = vmatprep.subr.mxu0 0.0
    %3308 = vmatpush1.msra.mxu0 0.0
    %3309 = vmatprep.subr.mxu0 0.0
    %3310 = vmatpush1.msra.mxu0 0.0
    %3311 = vmatprep.subr.mxu0 0.0
    %3312 = vmatpush1.msra.mxu0 0.0
    %3313 = vmatprep.subr.mxu0 0.0
    %3314 = vmatpush1.msra.mxu0 0.0
    %3315 = vmatprep.subr.mxu0 0.0
    %3316 = vmatpush1.msra.mxu0 0.0
    %3317 = vmatprep.subr.mxu0 0.0
    %3318 = vmatpush1.msra.mxu0 0.0
    %3319 = vmatprep.subr.mxu0 0.0
    %3320 = vmatpush1.msra.mxu0 0.0
    %3321 = vmatprep.mubr.f32.mxu0 0.0
    %3322 = vmatmul.mubr.f32.gmra.mrb[0].mxu0 %v3234
    %v3323 = vpop.f32.mrb[0].mxu0
    %v3324 = vadd.f32 %v3231, %v3323
    %v3325 = vpop.f32.mrb[0].mxu0
    %3326 = vmatprep.mubr.f32.mxu0 0.0
    %3327 = vmatmul.mubr.f32.gmra.mrb[0].mxu0 %v3237
    %v3328 = vpop.f32.mrb[0].mxu0
    %v3329 = vadd.f32 %v3231, %v3328
    %v3330 = vpop.f32.mrb[0].mxu0
    %3331 = vmatprep.mubr.f32.mxu0 0.0
    %3332 = vmatmul.mubr.f32.gmra.mrb[0].mxu0 %v3240
    %v3333 = vpop.f32.mrb[0].mxu0
    %v3334 = vadd.f32 %v3231, %v3333
    %v3335 = vpop.f32.mrb[0].mxu0
    %3336 = vmatprep.mubr.f32.mxu0 0.0
    %3337 = vmatmul.mubr.f32.gmra.mrb[0].mxu0 %v3243
    %v3338 = vpop.f32.mrb[0].mxu0
    %v3339 = vadd.f32 %v3231, %v3338
    %v3340 = vpop.f32.mrb[0].mxu0
    %3341 = vmatprep.mubr.f32.mxu0 0.0
    %3342 = vmatmul.mubr.f32.gmra.mrb[0].mxu0 %v3246
    %v3343 = vpop.f32.mrb[0].mxu0
    %v3344 = vadd.f32 %v3231, %v3343
    %v3345 = vpop.f32.mrb[0].mxu0
    %3346 = vmatprep.mubr.f32.mxu0 0.0
    %3347 = vmatmul.mubr.f32.gmra.mrb[0].mxu0 %v3249
    %v3348 = vpop.f32.mrb[0].mxu0
    %v3349 = vadd.f32 %v3231, %v3348
    %v3350 = vpop.f32.mrb[0].mxu0
    %3351 = vmatprep.mubr.f32.mxu0 0.0
    %3352 = vmatmul.mubr.f32.gmra.mrb[0].mxu0 %v3252
    %v3353 = vpop.f32.mrb[0].mxu0
    %v3354 = vadd.f32 %v3231, %v3353
    %v3355 = vpop.f32.mrb[0].mxu0
    %3356 = vmatprep.mubr.f32.mxu0 0.0
    %3357 = vmatmul.mubr.f32.gmra.mrb[0].mxu0 %v3255
    %v3358 = vpop.f32.mrb[0].mxu0
    %v3359 = vadd.f32 %v3231, %v3358
    %v3360 = vpop.f32.mrb[0].mxu0
    %3361 = vdwg.mxu0
    %v3370 = vcombine.high %v3324, %v3324
    %v3371 = vcombine.high %v3329, %v3329
    %v3372 = vcombine.high %v3334, %v3334
    %v3373 = vcombine.high %v3339, %v3339
    %v3374 = vcombine.high %v3344, %v3344
    %v3375 = vcombine.high %v3349, %v3349
    %v3376 = vcombine.high %v3354, %v3354
    %v3377 = vcombine.high %v3359, %v3359
    %v3386 = vadd.f32 %v3040, %v3324
    %v3387 = vadd.f32 %v3041, %v3370
    %v3388 = vadd.f32 %v3042, %v3329
    %v3389 = vadd.f32 %v3043, %v3371
    %v3390 = vadd.f32 %v3044, %v3334
    %v3391 = vadd.f32 %v3045, %v3372
    %v3392 = vadd.f32 %v3046, %v3339
    %v3393 = vadd.f32 %v3047, %v3373
    %v3394 = vadd.f32 %v3048, %v3344
    %v3395 = vadd.f32 %v3049, %v3374
    %v3396 = vadd.f32 %v3050, %v3349
    %v3397 = vadd.f32 %v3051, %v3375
    %v3398 = vadd.f32 %v3052, %v3354
    %v3399 = vadd.f32 %v3053, %v3376
    %v3400 = vadd.f32 %v3054, %v3359
    %v3401 = vadd.f32 %v3055, %v3377
    %v3418 = vcombine.low %v3386, %v3387
    %v3419 = vcombine.low %v3388, %v3389
    %v3420 = vcombine.low %v3390, %v3391
    %v3421 = vcombine.low %v3392, %v3393
    %v3422 = vcombine.low %v3394, %v3395
    %v3423 = vcombine.low %v3396, %v3397
    %v3424 = vcombine.low %v3398, %v3399
    %v3425 = vcombine.low %v3400, %v3401
    %v3434 = vsel %vm277, %v3418, 0.0
    %3435 = vadd.xlane.f32.xlu0 %v3434
    %v3436 = vpop.xlane.xlu0 %3435
    %v3437 = vsel %vm277, %v3419, 0.0
    %3438 = vadd.xlane.f32.xlu0 %v3437
    %v3439 = vpop.xlane.xlu0 %3438
    %v3440 = vsel %vm277, %v3420, 0.0
    %3441 = vadd.xlane.f32.xlu0 %v3440
    %v3442 = vpop.xlane.xlu0 %3441
    %v3443 = vsel %vm277, %v3421, 0.0
    %3444 = vadd.xlane.f32.xlu0 %v3443
    %v3445 = vpop.xlane.xlu0 %3444
    %v3446 = vsel %vm277, %v3422, 0.0
    %3447 = vadd.xlane.f32.xlu0 %v3446
    %v3448 = vpop.xlane.xlu0 %3447
    %v3449 = vsel %vm277, %v3423, 0.0
    %3450 = vadd.xlane.f32.xlu0 %v3449
    %v3451 = vpop.xlane.xlu0 %3450
    %v3452 = vsel %vm277, %v3424, 0.0
    %3453 = vadd.xlane.f32.xlu0 %v3452
    %v3454 = vpop.xlane.xlu0 %3453
    %v3455 = vsel %vm277, %v3425, 0.0
    %3456 = vadd.xlane.f32.xlu0 %v3455
    %v3457 = vpop.xlane.xlu0 %3456
    %v3458 = vmul.f32 %v3436, %v592
    %v3459 = vmul.f32 %v3439, %v592
    %v3460 = vmul.f32 %v3442, %v592
    %v3461 = vmul.f32 %v3445, %v592
    %v3462 = vmul.f32 %v3448, %v592
    %v3463 = vmul.f32 %v3451, %v592
    %v3464 = vmul.f32 %v3454, %v592
    %v3465 = vmul.f32 %v3457, %v592
    %v3475 = vunpack.c.l.s4 839922192
    %v3476 = vunpack.c.0.s8 %v3475
    %v3477 = vlaneseq
    %v3478 = vshrl.u32 %v3477, 7
    %v3479 = vsub.s32 %v3476, %v3478
    %v3480 = vrot.slane %v3458, %v3479
    %v3482 = vunpack.c.l.s4 1985246804
    %v3483 = vunpack.c.0.s8 %v3482
    %v3484 = vlaneseq
    %v3485 = vshrl.u32 %v3484, 7
    %v3486 = vsub.s32 %v3483, %v3485
    %v3487 = vrot.slane %v3458, %v3486
    %v3489 = vunpack.c.l.s4 839922192
    %v3490 = vunpack.c.0.s8 %v3489
    %v3491 = vlaneseq
    %v3492 = vshrl.u32 %v3491, 7
    %v3493 = vsub.s32 %v3490, %v3492
    %v3494 = vrot.slane %v3459, %v3493
    %v3496 = vunpack.c.l.s4 1985246804
    %v3497 = vunpack.c.0.s8 %v3496
    %v3498 = vlaneseq
    %v3499 = vshrl.u32 %v3498, 7
    %v3500 = vsub.s32 %v3497, %v3499
    %v3501 = vrot.slane %v3459, %v3500
    %v3503 = vunpack.c.l.s4 839922192
    %v3504 = vunpack.c.0.s8 %v3503
    %v3505 = vlaneseq
    %v3506 = vshrl.u32 %v3505, 7
    %v3507 = vsub.s32 %v3504, %v3506
    %v3508 = vrot.slane %v3460, %v3507
    %v3510 = vunpack.c.l.s4 1985246804
    %v3511 = vunpack.c.0.s8 %v3510
    %v3512 = vlaneseq
    %v3513 = vshrl.u32 %v3512, 7
    %v3514 = vsub.s32 %v3511, %v3513
    %v3515 = vrot.slane %v3460, %v3514
    %v3517 = vunpack.c.l.s4 839922192
    %v3518 = vunpack.c.0.s8 %v3517
    %v3519 = vlaneseq
    %v3520 = vshrl.u32 %v3519, 7
    %v3521 = vsub.s32 %v3518, %v3520
    %v3522 = vrot.slane %v3461, %v3521
    %v3524 = vunpack.c.l.s4 1985246804
    %v3525 = vunpack.c.0.s8 %v3524
    %v3526 = vlaneseq
    %v3527 = vshrl.u32 %v3526, 7
    %v3528 = vsub.s32 %v3525, %v3527
    %v3529 = vrot.slane %v3461, %v3528
    %v3531 = vunpack.c.l.s4 839922192
    %v3532 = vunpack.c.0.s8 %v3531
    %v3533 = vlaneseq
    %v3534 = vshrl.u32 %v3533, 7
    %v3535 = vsub.s32 %v3532, %v3534
    %v3536 = vrot.slane %v3462, %v3535
    %v3538 = vunpack.c.l.s4 1985246804
    %v3539 = vunpack.c.0.s8 %v3538
    %v3540 = vlaneseq
    %v3541 = vshrl.u32 %v3540, 7
    %v3542 = vsub.s32 %v3539, %v3541
    %v3543 = vrot.slane %v3462, %v3542
    %v3545 = vunpack.c.l.s4 839922192
    %v3546 = vunpack.c.0.s8 %v3545
    %v3547 = vlaneseq
    %v3548 = vshrl.u32 %v3547, 7
    %v3549 = vsub.s32 %v3546, %v3548
    %v3550 = vrot.slane %v3463, %v3549
    %v3552 = vunpack.c.l.s4 1985246804
    %v3553 = vunpack.c.0.s8 %v3552
    %v3554 = vlaneseq
    %v3555 = vshrl.u32 %v3554, 7
    %v3556 = vsub.s32 %v3553, %v3555
    %v3557 = vrot.slane %v3463, %v3556
    %v3559 = vunpack.c.l.s4 839922192
    %v3560 = vunpack.c.0.s8 %v3559
    %v3561 = vlaneseq
    %v3562 = vshrl.u32 %v3561, 7
    %v3563 = vsub.s32 %v3560, %v3562
    %v3564 = vrot.slane %v3464, %v3563
    %v3566 = vunpack.c.l.s4 1985246804
    %v3567 = vunpack.c.0.s8 %v3566
    %v3568 = vlaneseq
    %v3569 = vshrl.u32 %v3568, 7
    %v3570 = vsub.s32 %v3567, %v3569
    %v3571 = vrot.slane %v3464, %v3570
    %v3573 = vunpack.c.l.s4 839922192
    %v3574 = vunpack.c.0.s8 %v3573
    %v3575 = vlaneseq
    %v3576 = vshrl.u32 %v3575, 7
    %v3577 = vsub.s32 %v3574, %v3576
    %v3578 = vrot.slane %v3465, %v3577
    %v3580 = vunpack.c.l.s4 1985246804
    %v3581 = vunpack.c.0.s8 %v3580
    %v3582 = vlaneseq
    %v3583 = vshrl.u32 %v3582, 7
    %v3584 = vsub.s32 %v3581, %v3583
    %v3585 = vrot.slane %v3465, %v3584
    %v3602 = vsub.f32 %v3386, %v3480
    %v3603 = vsub.f32 %v3387, %v3487
    %v3604 = vsub.f32 %v3388, %v3494
    %v3605 = vsub.f32 %v3389, %v3501
    %v3606 = vsub.f32 %v3390, %v3508
    %v3607 = vsub.f32 %v3391, %v3515
    %v3608 = vsub.f32 %v3392, %v3522
    %v3609 = vsub.f32 %v3393, %v3529
    %v3610 = vsub.f32 %v3394, %v3536
    %v3611 = vsub.f32 %v3395, %v3543
    %v3612 = vsub.f32 %v3396, %v3550
    %v3613 = vsub.f32 %v3397, %v3557
    %v3614 = vsub.f32 %v3398, %v3564
    %v3615 = vsub.f32 %v3399, %v3571
    %v3616 = vsub.f32 %v3400, %v3578
    %v3617 = vsub.f32 %v3401, %v3585
    %v3618 = vmul.f32 %v3602, %v3602
    %v3619 = vmul.f32 %v3603, %v3603
    %v3620 = vmul.f32 %v3604, %v3604
    %v3621 = vmul.f32 %v3605, %v3605
    %v3622 = vmul.f32 %v3606, %v3606
    %v3623 = vmul.f32 %v3607, %v3607
    %v3624 = vmul.f32 %v3608, %v3608
    %v3625 = vmul.f32 %v3609, %v3609
    %v3626 = vmul.f32 %v3610, %v3610
    %v3627 = vmul.f32 %v3611, %v3611
    %v3628 = vmul.f32 %v3612, %v3612
    %v3629 = vmul.f32 %v3613, %v3613
    %v3630 = vmul.f32 %v3614, %v3614
    %v3631 = vmul.f32 %v3615, %v3615
    %v3632 = vmul.f32 %v3616, %v3616
    %v3633 = vmul.f32 %v3617, %v3617
    %v3650 = vcombine.low %v3618, %v3619
    %v3651 = vcombine.low %v3620, %v3621
    %v3652 = vcombine.low %v3622, %v3623
    %v3653 = vcombine.low %v3624, %v3625
    %v3654 = vcombine.low %v3626, %v3627
    %v3655 = vcombine.low %v3628, %v3629
    %v3656 = vcombine.low %v3630, %v3631
    %v3657 = vcombine.low %v3632, %v3633
    %v3666 = vsel %vm277, %v3650, 0.0
    %3667 = vadd.xlane.f32.xlu0 %v3666
    %v3668 = vpop.xlane.xlu0 %3667
    %v3669 = vsel %vm277, %v3651, 0.0
    %3670 = vadd.xlane.f32.xlu0 %v3669
    %v3671 = vpop.xlane.xlu0 %3670
    %v3672 = vsel %vm277, %v3652, 0.0
    %3673 = vadd.xlane.f32.xlu0 %v3672
    %v3674 = vpop.xlane.xlu0 %3673
    %v3675 = vsel %vm277, %v3653, 0.0
    %3676 = vadd.xlane.f32.xlu0 %v3675
    %v3677 = vpop.xlane.xlu0 %3676
    %v3678 = vsel %vm277, %v3654, 0.0
    %3679 = vadd.xlane.f32.xlu0 %v3678
    %v3680 = vpop.xlane.xlu0 %3679
    %v3681 = vsel %vm277, %v3655, 0.0
    %3682 = vadd.xlane.f32.xlu0 %v3681
    %v3683 = vpop.xlane.xlu0 %3682
    %v3684 = vsel %vm277, %v3656, 0.0
    %3685 = vadd.xlane.f32.xlu0 %v3684
    %v3686 = vpop.xlane.xlu0 %3685
    %v3687 = vsel %vm277, %v3657, 0.0
    %3688 = vadd.xlane.f32.xlu0 %v3687
    %v3689 = vpop.xlane.xlu0 %3688
    %v3690 = vmul.f32 %v3668, %v592
    %v3691 = vmul.f32 %v3671, %v592
    %v3692 = vmul.f32 %v3674, %v592
    %v3693 = vmul.f32 %v3677, %v592
    %v3694 = vmul.f32 %v3680, %v592
    %v3695 = vmul.f32 %v3683, %v592
    %v3696 = vmul.f32 %v3686, %v592
    %v3697 = vmul.f32 %v3689, %v592
    %v3698 = vadd.f32 %v3690, 1e-05
    %v3699 = vadd.f32 %v3691, 1e-05
    %v3700 = vadd.f32 %v3692, 1e-05
    %v3701 = vadd.f32 %v3693, 1e-05
    %v3702 = vadd.f32 %v3694, 1e-05
    %v3703 = vadd.f32 %v3695, 1e-05
    %v3704 = vadd.f32 %v3696, 1e-05
    %v3705 = vadd.f32 %v3697, 1e-05
    %v3706 = vrsqrt.pop %v3698
    %v3707 = vrsqrt.pop %v3699
    %v3708 = vrsqrt.pop %v3700
    %v3709 = vrsqrt.pop %v3701
    %v3710 = vrsqrt.pop %v3702
    %v3711 = vrsqrt.pop %v3703
    %v3712 = vrsqrt.pop %v3704
    %v3713 = vrsqrt.pop %v3705
    %v3723 = vunpack.c.l.s4 839922192
    %v3724 = vunpack.c.0.s8 %v3723
    %v3725 = vlaneseq
    %v3726 = vshrl.u32 %v3725, 7
    %v3727 = vsub.s32 %v3724, %v3726
    %v3728 = vrot.slane %v3706, %v3727
    %v3730 = vunpack.c.l.s4 1985246804
    %v3731 = vunpack.c.0.s8 %v3730
    %v3732 = vlaneseq
    %v3733 = vshrl.u32 %v3732, 7
    %v3734 = vsub.s32 %v3731, %v3733
    %v3735 = vrot.slane %v3706, %v3734
    %v3737 = vunpack.c.l.s4 839922192
    %v3738 = vunpack.c.0.s8 %v3737
    %v3739 = vlaneseq
    %v3740 = vshrl.u32 %v3739, 7
    %v3741 = vsub.s32 %v3738, %v3740
    %v3742 = vrot.slane %v3707, %v3741
    %v3744 = vunpack.c.l.s4 1985246804
    %v3745 = vunpack.c.0.s8 %v3744
    %v3746 = vlaneseq
    %v3747 = vshrl.u32 %v3746, 7
    %v3748 = vsub.s32 %v3745, %v3747
    %v3749 = vrot.slane %v3707, %v3748
    %v3751 = vunpack.c.l.s4 839922192
    %v3752 = vunpack.c.0.s8 %v3751
    %v3753 = vlaneseq
    %v3754 = vshrl.u32 %v3753, 7
    %v3755 = vsub.s32 %v3752, %v3754
    %v3756 = vrot.slane %v3708, %v3755
    %v3758 = vunpack.c.l.s4 1985246804
    %v3759 = vunpack.c.0.s8 %v3758
    %v3760 = vlaneseq
    %v3761 = vshrl.u32 %v3760, 7
    %v3762 = vsub.s32 %v3759, %v3761
    %v3763 = vrot.slane %v3708, %v3762
    %v3765 = vunpack.c.l.s4 839922192
    %v3766 = vunpack.c.0.s8 %v3765
    %v3767 = vlaneseq
    %v3768 = vshrl.u32 %v3767, 7
    %v3769 = vsub.s32 %v3766, %v3768
    %v3770 = vrot.slane %v3709, %v3769
    %v3772 = vunpack.c.l.s4 1985246804
    %v3773 = vunpack.c.0.s8 %v3772
    %v3774 = vlaneseq
    %v3775 = vshrl.u32 %v3774, 7
    %v3776 = vsub.s32 %v3773, %v3775
    %v3777 = vrot.slane %v3709, %v3776
    %v3779 = vunpack.c.l.s4 839922192
    %v3780 = vunpack.c.0.s8 %v3779
    %v3781 = vlaneseq
    %v3782 = vshrl.u32 %v3781, 7
    %v3783 = vsub.s32 %v3780, %v3782
    %v3784 = vrot.slane %v3710, %v3783
    %v3786 = vunpack.c.l.s4 1985246804
    %v3787 = vunpack.c.0.s8 %v3786
    %v3788 = vlaneseq
    %v3789 = vshrl.u32 %v3788, 7
    %v3790 = vsub.s32 %v3787, %v3789
    %v3791 = vrot.slane %v3710, %v3790
    %v3793 = vunpack.c.l.s4 839922192
    %v3794 = vunpack.c.0.s8 %v3793
    %v3795 = vlaneseq
    %v3796 = vshrl.u32 %v3795, 7
    %v3797 = vsub.s32 %v3794, %v3796
    %v3798 = vrot.slane %v3711, %v3797
    %v3800 = vunpack.c.l.s4 1985246804
    %v3801 = vunpack.c.0.s8 %v3800
    %v3802 = vlaneseq
    %v3803 = vshrl.u32 %v3802, 7
    %v3804 = vsub.s32 %v3801, %v3803
    %v3805 = vrot.slane %v3711, %v3804
    %v3807 = vunpack.c.l.s4 839922192
    %v3808 = vunpack.c.0.s8 %v3807
    %v3809 = vlaneseq
    %v3810 = vshrl.u32 %v3809, 7
    %v3811 = vsub.s32 %v3808, %v3810
    %v3812 = vrot.slane %v3712, %v3811
    %v3814 = vunpack.c.l.s4 1985246804
    %v3815 = vunpack.c.0.s8 %v3814
    %v3816 = vlaneseq
    %v3817 = vshrl.u32 %v3816, 7
    %v3818 = vsub.s32 %v3815, %v3817
    %v3819 = vrot.slane %v3712, %v3818
    %v3821 = vunpack.c.l.s4 839922192
    %v3822 = vunpack.c.0.s8 %v3821
    %v3823 = vlaneseq
    %v3824 = vshrl.u32 %v3823, 7
    %v3825 = vsub.s32 %v3822, %v3824
    %v3826 = vrot.slane %v3713, %v3825
    %v3828 = vunpack.c.l.s4 1985246804
    %v3829 = vunpack.c.0.s8 %v3828
    %v3830 = vlaneseq
    %v3831 = vshrl.u32 %v3830, 7
    %v3832 = vsub.s32 %v3829, %v3831
    %v3833 = vrot.slane %v3713, %v3832
    %v3850 = vmul.f32 %v3602, %v3728
    %v3851 = vmul.f32 %v3603, %v3735
    %v3852 = vmul.f32 %v3604, %v3742
    %v3853 = vmul.f32 %v3605, %v3749
    %v3854 = vmul.f32 %v3606, %v3756
    %v3855 = vmul.f32 %v3607, %v3763
    %v3856 = vmul.f32 %v3608, %v3770
    %v3857 = vmul.f32 %v3609, %v3777
    %v3858 = vmul.f32 %v3610, %v3784
    %v3859 = vmul.f32 %v3611, %v3791
    %v3860 = vmul.f32 %v3612, %v3798
    %v3861 = vmul.f32 %v3613, %v3805
    %v3862 = vmul.f32 %v3614, %v3812
    %v3863 = vmul.f32 %v3615, %v3819
    %v3864 = vmul.f32 %v3616, %v3826
    %v3865 = vmul.f32 %v3617, %v3833
    %v3866 = vlaneseq
    %v3867 = vshrl.u32 %v3866, 7
    %v3868 = vsub.s32 3, %v3867
    %v3869 = vrot.slane %v39, %v3868
    %v3871 = vcombine.high %v3869, %v3869
    %v3873 = vmul.f32 %v3850, %v3869
    %v3874 = vmul.f32 %v3851, %v3871
    %v3875 = vmul.f32 %v3852, %v3869
    %v3876 = vmul.f32 %v3853, %v3871
    %v3877 = vmul.f32 %v3854, %v3869
    %v3878 = vmul.f32 %v3855, %v3871
    %v3879 = vmul.f32 %v3856, %v3869
    %v3880 = vmul.f32 %v3857, %v3871
    %v3881 = vmul.f32 %v3858, %v3869
    %v3882 = vmul.f32 %v3859, %v3871
    %v3883 = vmul.f32 %v3860, %v3869
    %v3884 = vmul.f32 %v3861, %v3871
    %v3885 = vmul.f32 %v3862, %v3869
    %v3886 = vmul.f32 %v3863, %v3871
    %v3887 = vmul.f32 %v3864, %v3869
    %v3888 = vmul.f32 %v3865, %v3871
    %v3889 = vlaneseq
    %v3890 = vshrl.u32 %v3889, 7
    %v3891 = vsub.s32 4, %v3890
    %v3892 = vrot.slane %v39, %v3891
    %v3894 = vcombine.high %v3892, %v3892
    %v3896 = vadd.f32 %v3873, %v3892
    %v3897 = vadd.f32 %v3874, %v3894
    %v3898 = vadd.f32 %v3875, %v3892
    %v3899 = vadd.f32 %v3876, %v3894
    %v3900 = vadd.f32 %v3877, %v3892
    %v3901 = vadd.f32 %v3878, %v3894
    %v3902 = vadd.f32 %v3879, %v3892
    %v3903 = vadd.f32 %v3880, %v3894
    %v3904 = vadd.f32 %v3881, %v3892
    %v3905 = vadd.f32 %v3882, %v3894
    %v3906 = vadd.f32 %v3883, %v3892
    %v3907 = vadd.f32 %v3884, %v3894
    %v3908 = vadd.f32 %v3885, %v3892
    %v3909 = vadd.f32 %v3886, %v3894
    %v3910 = vadd.f32 %v3887, %v3892
    %v3911 = vadd.f32 %v3888, %v3894
    %vm3912 = vcmask 257024
    %3913 = vst.msk [vmem:[#allocation6] sm:$0xf] %vm3912, %v3896
    %3914 = vst.msk [vmem:[#allocation6 + $0x4] sm:$0xf] %vm3912, %v3897
    %3915 = vst.msk [vmem:[#allocation6 + $0x8] sm:$0xf] %vm3912, %v3898
    %3916 = vst.msk [vmem:[#allocation6 + $0xc] sm:$0xf] %vm3912, %v3899
    %3917 = vst.msk [vmem:[#allocation6 + $0x10] sm:$0xf] %vm3912, %v3900
    %3918 = vst.msk [vmem:[#allocation6 + $0x14] sm:$0xf] %vm3912, %v3901
    %3919 = vst.msk [vmem:[#allocation6 + $0x18] sm:$0xf] %vm3912, %v3902
    %3920 = vst.msk [vmem:[#allocation6 + $0x1c] sm:$0xf] %vm3912, %v3903
    %3921 = vst.msk [vmem:[#allocation6 + $0x20] sm:$0xf] %vm3912, %v3904
    %3922 = vst.msk [vmem:[#allocation6 + $0x24] sm:$0xf] %vm3912, %v3905
    %3923 = vst.msk [vmem:[#allocation6 + $0x28] sm:$0xf] %vm3912, %v3906
    %3924 = vst.msk [vmem:[#allocation6 + $0x2c] sm:$0xf] %vm3912, %v3907
    %3925 = vst.msk [vmem:[#allocation6 + $0x30] sm:$0xf] %vm3912, %v3908
    %3926 = vst.msk [vmem:[#allocation6 + $0x34] sm:$0xf] %vm3912, %v3909
    %3927 = vst.msk [vmem:[#allocation6 + $0x38] sm:$0xf] %vm3912, %v3910
    %3928 = vst.msk [vmem:[#allocation6 + $0x3c] sm:$0xf] %vm3912, %v3911
    // Predicated region
    $region34: #{tpu_custom_call.1} parent=1 // pred_check
      _
    $region35: #{tpu_custom_call.1} parent=1 // pred_check_branch
      %3930 = sbr.rel (0) target = $region37
    $region36: #{tpu_custom_call.1} parent=1 // pred_region
      %s3932 = ssub.s32 1024, 1024
      %3933 = vsyncadd [#allocation5], %s3932
      %s3934 = sshll.u32 [#allocation6], 4
      %s3935 = int_to_ptr.vmem [resolvable:$true] %s3934
      %3940 = dma.vmem_to_hbm [thread:$0]  %s3935, 1024, %s7, [#allocation5], 64, 64, 4
    $region37: #{tpu_custom_call.1} parent=1 // pred_fallthru
      _
    // Predicated region
    $region38: #{tpu_custom_call.1} parent=1 // pred_check
      _
    $region39: #{tpu_custom_call.1} parent=1 // pred_check_branch
      %3942 = sbr.rel (0) target = $region41
    $region40: #{tpu_custom_call.1} parent=1 // pred_region
      %3943 = dma.done [#allocation5], 1024
    $region41: #{tpu_custom_call.1} parent=1 // pred_fallthru
      _
    %3944 = vsyncpa [#allocation4], 1
    %3945 = vsyncpa [#allocation5], 1

</llo_original>
